<compile_context>
chip_gen: v5e
topology: v5e:2x2
jax: 0.10.0
libtpu: 0.0.40
codegen_flags: <defaults>
</compile_context>

<pallas_src>
import functools

import jax
import jax.numpy as jnp
from jax.experimental import pallas as pl
from jax.experimental.pallas import tpu as pltpu


# --------------------------------------------------------------------------- encoder kernel

def _encoder_kernel(x_ref, t_ref, ew_ref, eb_ref, o_ref, *, tm, H, W, F, inv_hw):
    """Fused 3x3 conv (single row-Toeplitz MXU matmul, bias folded in) + ReLU + GAP + linear."""
    WF = W * F
    rows = x_ref[...].reshape(tm * H, -1)                          # (tm*H, 3*(W+2)*C+1) bf16
    feat = jnp.maximum(
        jnp.dot(rows, t_ref[...], preferred_element_type=jnp.float32), 0.0)  # conv+bias, ReLU
    # global average pool: sum over H (leading-dim regroup) then over W (lane-aligned slices)
    pooled_w = feat.reshape(tm, H, WF).sum(axis=1)                 # (tm, W*F)
    pooled = jnp.zeros((tm, F), jnp.float32)
    for w in range(W):                                             # F=128 -> lane-tile aligned
        pooled = pooled + pooled_w[:, w * F:(w + 1) * F]
    pooled = pooled * inv_hw                                       # (tm, F)
    o_ref[...] = jnp.dot(pooled.astype(jnp.bfloat16), ew_ref[...],
                         preferred_element_type=jnp.float32) + eb_ref[...]


def _row_conv_weights(conv_w, W):
    """Repack (3,3,C,F) conv weights into row-Toeplitz matrices (3, (W+2)*C, W*F).

    T[dh, (w+dw)*C + c, w*F + f] = conv_w[dh, dw, c, f], so a zero-padded image row of length
    (W+2)*C matmul'd with T[dh] produces the dh-partial conv output for a whole output row.
    """
    kh, kw, C, F = conv_w.shape
    Wp = W + kw - 1
    dw = jnp.arange(kw)[:, None, None]
    wp = jnp.arange(Wp)[None, :, None]
    w = jnp.arange(W)[None, None, :]
    sel = (wp == w + dw).astype(conv_w.dtype)                      # (kw, Wp, W)
    t = jnp.einsum('dpw,hdcf->hpcwf', sel, conv_w)                 # (kh, Wp, C, W, F)
    return t.reshape(kh, Wp * C, W * F)


def _pick_tm(M, H):
    """Images per grid step: ~<=1024 conv rows, divides M, multiple of 8, >=2 grid steps."""
    cap = min(max(1, 1024 // max(H, 1)), max(1, M // 2))
    tm = None
    c = 8
    while c <= min(cap, M):
        if M % c == 0:
            tm = c
        c *= 2
    return tm if tm is not None else M


def encode_images(params, images_nchw):
    """Embed a flat batch of images.  (M, C, H, W) f32 -> (M, D) f32."""
    M, C, H, W = images_nchw.shape
    F = params['conv_w'].shape[-1]
    D = params['emb_w'].shape[-1]
    Hp, Wp = H + 2, W + 2
    K = 3 * Wp * C + 1                                              # + ones column for the bias

    # Plain-JAX glue (one-time, tiny): NCHW -> NHWC, zero-pad the 3x3 halo, and lay out, per
    # output row h, the three padded input rows h, h+1, h+2 side by side plus a constant 1.
    x = jnp.transpose(images_nchw, (0, 2, 3, 1))
    xp = jnp.pad(x, ((0, 0), (1, 1), (1, 1), (0, 0)))
    xrows = xp.reshape(M, Hp, Wp * C)
    x3 = jnp.concatenate([xrows[:, dh:dh + H, :] for dh in range(3)]
                         + [jnp.ones((M, H, 1), xrows.dtype)], axis=-1)   # (M, H, K)
    x3 = x3.astype(jnp.bfloat16)

    # Weights: stacked row-Toeplitz matrices + bias row (multiplied by the ones column).
    conv_t = _row_conv_weights(params['conv_w'], W).reshape(3 * Wp * C, W * F)
    bias_row = jnp.tile(params['conv_b'], W).reshape(1, W * F)
    t_full = jnp.concatenate([conv_t, bias_row], axis=0).astype(jnp.bfloat16)  # (K, W*F)
    emb_w = params['emb_w'].astype(jnp.bfloat16)
    emb_b = params['emb_b'].reshape(1, D).astype(jnp.float32)

    tm = _pick_tm(M, H)
    kernel = functools.partial(_encoder_kernel, tm=tm, H=H, W=W, F=F,
                               inv_hw=1.0 / float(H * W))
    return pl.pallas_call(
        kernel,
        out_shape=jax.ShapeDtypeStruct((M, D), jnp.float32),
        grid=(M // tm,),
        in_specs=[
            pl.BlockSpec((tm, H, K), lambda i: (i, 0, 0)),          # image-row tile
            pl.BlockSpec((K, W * F), lambda i: (0, 0)),             # resident conv weights+bias
            pl.BlockSpec((F, D), lambda i: (0, 0)),                 # resident emb weights
            pl.BlockSpec((1, D), lambda i: (0, 0)),
        ],
        out_specs=pl.BlockSpec((tm, D), lambda i: (i, 0)),          # lane-dense (D=128)
        compiler_params=pltpu.CompilerParams(
            dimension_semantics=("parallel",),
            vmem_limit_bytes=32 * 1024 * 1024),
    )(x3, t_full, emb_w, emb_b)


# --------------------------------------------------------------------------- applier head

def _dist_nlsm_kernel(q_ref, p_ref, o_ref):
    """neg_log_p_y = -log_softmax(-||q - p||^2) for one episode block (f32)."""
    q = q_ref[...]                                                  # (1, Nq, D)
    p = p_ref[...]                                                  # (1, L,  D)
    qp = jnp.einsum('bnd,bld->bnl', q, p,
                    preferred_element_type=jnp.float32)             # contract D, no transpose
    q2 = jnp.sum(q * q, axis=-1, keepdims=True)                     # (1, Nq, 1)
    p2 = jnp.expand_dims(jnp.sum(p * p, axis=-1), 1)                # (1, 1, L)
    logits = -(q2 - 2.0 * qp + p2)                                  # -squared euclidean
    m = jnp.max(logits, axis=-1, keepdims=True)
    lse = m + jnp.log(jnp.sum(jnp.exp(logits - m), axis=-1, keepdims=True))
    o_ref[...] = lse - logits                                       # -log_softmax(-dist)


def dist_neg_log_softmax(zq, z_proto):
    B, Nq, D = zq.shape
    L = z_proto.shape[1]
    return pl.pallas_call(
        _dist_nlsm_kernel,
        out_shape=jax.ShapeDtypeStruct((B, Nq, L), jnp.float32),
        grid=(B,),
        in_specs=[pl.BlockSpec((1, Nq, D), lambda b: (b, 0, 0)),
                  pl.BlockSpec((1, L, D), lambda b: (b, 0, 0))],
        out_specs=pl.BlockSpec((1, Nq, L), lambda b: (b, 0, 0)),
        compiler_params=pltpu.CompilerParams(
            dimension_semantics=("parallel",),
            vmem_limit_bytes=32 * 1024 * 1024),
    )(zq, z_proto)


# --------------------------------------------------------------------------- forward

def protonet_applier_forward(params, z_proto, query):
    """Mirrors ProtoNetApplier.forward: returns {'neg_log_p_y': [B, N, L]}."""
    feature_dim = params['emb_w'].shape[-1]
    B = z_proto.shape[0]
    if query.ndim == 5:
        # [B, N, C, H, W] meta-learning minibatch of images -> encode with the Pallas encoder.
        _, N, C, H, W = query.shape
        zq = encode_images(params, query.reshape(B * N, C, H, W)).reshape(B, N, feature_dim)
    elif query.ndim == 3 and query.shape[-1] == feature_dim:
        zq = query.astype(jnp.float32)                              # precomputed features
    elif query.ndim == 2 and query.shape[-1] == feature_dim:
        # regular dataset with precomputed features: share queries across all episodes
        zq = jnp.broadcast_to(query[None].astype(jnp.float32), (B,) + query.shape)
    else:
        # TODO(synk): 4-D image minibatches of the generic path are not instantiated here.
        raise ValueError('Unsupported query shape %s' % (query.shape,))
    return {'neg_log_p_y': dist_neg_log_softmax(zq, z_proto.astype(jnp.float32))}


# --------------------------------------------------------------------------- params / reference

def init_params(key, C, F, D):
    k_conv, k_emb = jax.random.split(key)
    return {
        'conv_w': 0.1 * jax.random.normal(k_conv, (3, 3, C, F), jnp.float32),
        'conv_b': 0.01 * jnp.ones((F,), jnp.float32),
        'emb_w': 0.1 * jax.random.normal(k_emb, (F, D), jnp.float32),
        'emb_b': 0.01 * jnp.ones((D,), jnp.float32),
    }


def _reference_encoder(params, images_nchw):
    M, C, H, W = images_nchw.shape
    x = jnp.transpose(images_nchw, (0, 2, 3, 1))
    xp = jnp.pad(x, ((0, 0), (1, 1), (1, 1), (0, 0)))
    patches = jnp.concatenate(
        [xp[:, dh:dh + H, dw:dw + W, :] for dh in range(3) for dw in range(3)],
        axis=-1).reshape(M * H * W, 9 * C)
    w2d = params['conv_w'].reshape(9 * C, -1)
    feat = jnp.maximum(
        jnp.dot(patches.astype(jnp.bfloat16), w2d.astype(jnp.bfloat16),
                preferred_element_type=jnp.float32) + params['conv_b'], 0.0)
    pooled = feat.reshape(M, H * W, -1).mean(axis=1)
    return jnp.dot(pooled.astype(jnp.bfloat16), params['emb_w'].astype(jnp.bfloat16),
                   preferred_element_type=jnp.float32) + params['emb_b']


def _reference_neg_log_p_y(zq, z_proto):
    d = jnp.sum((zq[:, :, None, :] - z_proto[:, None, :, :]) ** 2, axis=-1)
    return -jax.nn.log_softmax(-d, axis=-1)


def _reference_forward(params, z_proto, query_images):
    B, N = query_images.shape[:2]
    zq = _reference_encoder(
        params, query_images.reshape((B * N,) + query_images.shape[2:]))
    return _reference_neg_log_p_y(zq.reshape(B, N, -1), z_proto)


# --------------------------------------------------------------------------- main

if __name__ == "__main__":
    B, L, N = 2, 4, 8            # episodes, prototypes per episode, query images per episode
    C, H, W = 3, 16, 16          # images are [3, H, W] per the module docstring
    F, D = 128, 128              # conv filters / encoder feature dim (lane-dense)

    key = jax.random.PRNGKey(0)
    k_proto, k_img, k_feat, k_par = jax.random.split(key, 4)

    params = init_params(k_par, C, F, D)
    z_proto = 0.1 * jax.random.normal(k_proto, (B, L, D), jnp.float32)
    query_images = jax.random.normal(k_img, (B, N, C, H, W), jnp.float32)
    query_feats = 0.1 * jax.random.normal(k_feat, (B, N, D), jnp.float32)

    fwd = jax.jit(protonet_applier_forward)

    # ---- image-query path (encoder kernel + distance/log-softmax kernel) -------------
    out_img = jax.block_until_ready(fwd(params, z_proto, query_images))
    nlp_img = out_img['neg_log_p_y']
    assert nlp_img.shape == (B, N, L)
    assert bool(jnp.all(jnp.isfinite(nlp_img)))
    ref_img = _reference_forward(params, z_proto, query_images)
    assert jnp.allclose(nlp_img, ref_img, atol=0.15, rtol=0.1), (
        "image path max abs err %f" % float(jnp.max(jnp.abs(nlp_img - ref_img))))

    # ---- precomputed-feature path (distance/log-softmax kernel only) ------------------
    out_feat = jax.block_until_ready(fwd(params, z_proto, query_feats))
    nlp_feat = out_feat['neg_log_p_y']
    assert nlp_feat.shape == (B, N, L)
    ref_feat = _reference_neg_log_p_y(query_feats, z_proto)
    assert jnp.allclose(nlp_feat, ref_feat, atol=1e-3, rtol=1e-3), (
        "feature path max abs err %f" % float(jnp.max(jnp.abs(nlp_feat - ref_feat))))

    print("KERNEL_OK")
</pallas_src>

<mosaic_0001>
module attributes {stable_mosaic.version = 11 : i64} {
  func.func @_encoder_kernel(%arg0: i32, %arg1: memref<8x16x163xbf16, #tpu.memory_space<vmem>>, %arg2: memref<163x2048xbf16, #tpu.memory_space<vmem>>, %arg3: memref<128x128xbf16, #tpu.memory_space<vmem>>, %arg4: memref<1x128xf32, #tpu.memory_space<vmem>>, %arg5: memref<8x128xf32, #tpu.memory_space<vmem>>) attributes {dimension_semantics = [#tpu.dimension_semantics<parallel>], iteration_bounds = array<i64: 2>, scalar_prefetch = 0 : i64, scratch_operands = 0 : i64, tpu.core_type = #tpu.core_type<tc>, window_params = [{transform_indices = @transform_0, window_bounds = array<i64: 8, 16, 163>}, {pipeline_mode = #tpu.pipeline_mode<synchronous>, transform_indices = @transform_1, window_bounds = array<i64: 163, 2048>}, {pipeline_mode = #tpu.pipeline_mode<synchronous>, transform_indices = @transform_2, window_bounds = array<i64: 128, 128>}, {pipeline_mode = #tpu.pipeline_mode<synchronous>, transform_indices = @transform_3, window_bounds = array<i64: 1, 128>}, {transform_indices = @transform_4, window_bounds = array<i64: 8, 128>}]} {
    %c0 = arith.constant 0 : index
    %c0_0 = arith.constant 0 : index
    %c0_1 = arith.constant 0 : index
    %0 = vector.load %arg1[%c0, %c0_0, %c0_1] : memref<8x16x163xbf16, #tpu.memory_space<vmem>>, vector<8x16x163xbf16>
    %1 = vector.shape_cast %0 : vector<8x16x163xbf16> to vector<128x163xbf16>
    %c0_2 = arith.constant 0 : index
    %c0_3 = arith.constant 0 : index
    %2 = vector.load %arg2[%c0_2, %c0_3] : memref<163x2048xbf16, #tpu.memory_space<vmem>>, vector<163x2048xbf16>
    %cst = arith.constant dense<0.000000e+00> : vector<128x2048xf32>
    %3 = tpu.matmul %1, %2, %cst {dimension_numbers = #tpu.dot_dimension_numbers<[1], [0], [0], [1], [0, 0, 1, 1], [], []>} : vector<128x163xbf16>, vector<163x2048xbf16>, vector<128x2048xf32> -> vector<128x2048xf32>
    %cst_4 = arith.constant 0.000000e+00 : f32
    %4 = vector.broadcast %cst_4 : f32 to vector<128x2048xf32>
    %5 = arith.maximumf %3, %4 : vector<128x2048xf32>
    %6 = vector.shape_cast %5 : vector<128x2048xf32> to vector<8x16x2048xf32>
    %cst_5 = arith.constant dense<0.000000e+00> : vector<8x2048xf32>
    %7 = vector.multi_reduction <add>, %6, %cst_5 [1] : vector<8x16x2048xf32> to vector<8x2048xf32>
    %cst_6 = arith.constant 0.000000e+00 : f32
    %8 = vector.broadcast %cst_6 : f32 to vector<8x128xf32>
    %9 = vector.extract_strided_slice %7 {offsets = [0, 0], sizes = [8, 128], strides = [1, 1]} : vector<8x2048xf32> to vector<8x128xf32>
    %10 = arith.addf %8, %9 : vector<8x128xf32>
    %11 = vector.extract_strided_slice %7 {offsets = [0, 128], sizes = [8, 128], strides = [1, 1]} : vector<8x2048xf32> to vector<8x128xf32>
    %12 = arith.addf %10, %11 : vector<8x128xf32>
    %13 = vector.extract_strided_slice %7 {offsets = [0, 256], sizes = [8, 128], strides = [1, 1]} : vector<8x2048xf32> to vector<8x128xf32>
    %14 = arith.addf %12, %13 : vector<8x128xf32>
    %15 = vector.extract_strided_slice %7 {offsets = [0, 384], sizes = [8, 128], strides = [1, 1]} : vector<8x2048xf32> to vector<8x128xf32>
    %16 = arith.addf %14, %15 : vector<8x128xf32>
    %17 = vector.extract_strided_slice %7 {offsets = [0, 512], sizes = [8, 128], strides = [1, 1]} : vector<8x2048xf32> to vector<8x128xf32>
    %18 = arith.addf %16, %17 : vector<8x128xf32>
    %19 = vector.extract_strided_slice %7 {offsets = [0, 640], sizes = [8, 128], strides = [1, 1]} : vector<8x2048xf32> to vector<8x128xf32>
    %20 = arith.addf %18, %19 : vector<8x128xf32>
    %21 = vector.extract_strided_slice %7 {offsets = [0, 768], sizes = [8, 128], strides = [1, 1]} : vector<8x2048xf32> to vector<8x128xf32>
    %22 = arith.addf %20, %21 : vector<8x128xf32>
    %23 = vector.extract_strided_slice %7 {offsets = [0, 896], sizes = [8, 128], strides = [1, 1]} : vector<8x2048xf32> to vector<8x128xf32>
    %24 = arith.addf %22, %23 : vector<8x128xf32>
    %25 = vector.extract_strided_slice %7 {offsets = [0, 1024], sizes = [8, 128], strides = [1, 1]} : vector<8x2048xf32> to vector<8x128xf32>
    %26 = arith.addf %24, %25 : vector<8x128xf32>
    %27 = vector.extract_strided_slice %7 {offsets = [0, 1152], sizes = [8, 128], strides = [1, 1]} : vector<8x2048xf32> to vector<8x128xf32>
    %28 = arith.addf %26, %27 : vector<8x128xf32>
    %29 = vector.extract_strided_slice %7 {offsets = [0, 1280], sizes = [8, 128], strides = [1, 1]} : vector<8x2048xf32> to vector<8x128xf32>
    %30 = arith.addf %28, %29 : vector<8x128xf32>
    %31 = vector.extract_strided_slice %7 {offsets = [0, 1408], sizes = [8, 128], strides = [1, 1]} : vector<8x2048xf32> to vector<8x128xf32>
    %32 = arith.addf %30, %31 : vector<8x128xf32>
    %33 = vector.extract_strided_slice %7 {offsets = [0, 1536], sizes = [8, 128], strides = [1, 1]} : vector<8x2048xf32> to vector<8x128xf32>
    %34 = arith.addf %32, %33 : vector<8x128xf32>
    %35 = vector.extract_strided_slice %7 {offsets = [0, 1664], sizes = [8, 128], strides = [1, 1]} : vector<8x2048xf32> to vector<8x128xf32>
    %36 = arith.addf %34, %35 : vector<8x128xf32>
    %37 = vector.extract_strided_slice %7 {offsets = [0, 1792], sizes = [8, 128], strides = [1, 1]} : vector<8x2048xf32> to vector<8x128xf32>
    %38 = arith.addf %36, %37 : vector<8x128xf32>
    %39 = vector.extract_strided_slice %7 {offsets = [0, 1920], sizes = [8, 128], strides = [1, 1]} : vector<8x2048xf32> to vector<8x128xf32>
    %40 = arith.addf %38, %39 : vector<8x128xf32>
    %cst_7 = arith.constant 3.906250e-03 : f32
    %41 = vector.broadcast %cst_7 : f32 to vector<8x128xf32>
    %42 = arith.mulf %40, %41 : vector<8x128xf32>
    %43 = arith.truncf %42 : vector<8x128xf32> to vector<8x128xbf16>
    %c0_8 = arith.constant 0 : index
    %c0_9 = arith.constant 0 : index
    %44 = vector.load %arg3[%c0_8, %c0_9] : memref<128x128xbf16, #tpu.memory_space<vmem>>, vector<128x128xbf16>
    %cst_10 = arith.constant dense<0.000000e+00> : vector<8x128xf32>
    %45 = tpu.matmul %43, %44, %cst_10 {dimension_numbers = #tpu.dot_dimension_numbers<[1], [0], [0], [1], [0, 0, 1, 1], [], []>} : vector<8x128xbf16>, vector<128x128xbf16>, vector<8x128xf32> -> vector<8x128xf32>
    %c0_11 = arith.constant 0 : index
    %c0_12 = arith.constant 0 : index
    %46 = vector.load %arg4[%c0_11, %c0_12] : memref<1x128xf32, #tpu.memory_space<vmem>>, vector<1x128xf32>
    %47 = vector.broadcast %46 : vector<1x128xf32> to vector<8x128xf32>
    %48 = arith.addf %45, %47 : vector<8x128xf32>
    %c0_13 = arith.constant 0 : index
    %c0_14 = arith.constant 0 : index
    %49 = vector.load %arg5[%c0_13, %c0_14] : memref<8x128xf32, #tpu.memory_space<vmem>>, vector<8x128xf32>
    tpu.vector_store %arg5[%c0_13, %c0_14], %48 {strides = array<i32>} : memref<8x128xf32, #tpu.memory_space<vmem>>, vector<8x128xf32>,
    return
  }
  func.func @transform_0(%arg0: i32) -> (i32, i32, i32) {
    %c0_i32 = arith.constant 0 : i32
    %c0_i32_0 = arith.constant 0 : i32
    %c0_i32_1 = arith.constant 0 : i32
    return %arg0, %c0_i32, %c0_i32_0 : i32, i32, i32
  }
  func.func @transform_1(%arg0: i32) -> (i32, i32) {
    %c0_i32 = arith.constant 0 : i32
    %c0_i32_0 = arith.constant 0 : i32
    %c0_i32_1 = arith.constant 0 : i32
    return %c0_i32, %c0_i32_0 : i32, i32
  }
  func.func @transform_2(%arg0: i32) -> (i32, i32) {
    %c0_i32 = arith.constant 0 : i32
    %c0_i32_0 = arith.constant 0 : i32
    %c0_i32_1 = arith.constant 0 : i32
    return %c0_i32, %c0_i32_0 : i32, i32
  }
  func.func @transform_3(%arg0: i32) -> (i32, i32) {
    %c0_i32 = arith.constant 0 : i32
    %c0_i32_0 = arith.constant 0 : i32
    %c0_i32_1 = arith.constant 0 : i32
    return %c0_i32, %c0_i32_0 : i32, i32
  }
  func.func @transform_4(%arg0: i32) -> (i32, i32) {
    %c0_i32 = arith.constant 0 : i32
    %c0_i32_0 = arith.constant 0 : i32
    return %arg0, %c0_i32 : i32, i32
  }
}

module attributes {stable_mosaic.version = 11 : i64} {
  func.func @_dist_nlsm_kernel(%arg0: i32, %arg1: memref<1x8x128xf32, #tpu.memory_space<vmem>>, %arg2: memref<1x4x128xf32, #tpu.memory_space<vmem>>, %arg3: memref<1x8x4xf32, #tpu.memory_space<vmem>>) attributes {dimension_semantics = [#tpu.dimension_semantics<parallel>], iteration_bounds = array<i64: 2>, scalar_prefetch = 0 : i64, scratch_operands = 0 : i64, tpu.core_type = #tpu.core_type<tc>, window_params = [{transform_indices = @transform_0, window_bounds = array<i64: 1, 8, 128>}, {transform_indices = @transform_1, window_bounds = array<i64: 1, 4, 128>}, {transform_indices = @transform_2, window_bounds = array<i64: 1, 8, 4>}]} {
    %c0 = arith.constant 0 : index
    %c0_0 = arith.constant 0 : index
    %c0_1 = arith.constant 0 : index
    %0 = vector.load %arg1[%c0, %c0_0, %c0_1] : memref<1x8x128xf32, #tpu.memory_space<vmem>>, vector<1x8x128xf32>
    %c0_2 = arith.constant 0 : index
    %c0_3 = arith.constant 0 : index
    %c0_4 = arith.constant 0 : index
    %1 = vector.load %arg2[%c0_2, %c0_3, %c0_4] : memref<1x4x128xf32, #tpu.memory_space<vmem>>, vector<1x4x128xf32>
    "tpu.trace_start"() <{level = 10 : i32, message = "bnd,bld->bnl"}> : () -> ()
    %cst = arith.constant dense<0.000000e+00> : vector<1x8x4xf32>
    %2 = tpu.matmul %0, %1, %cst {dimension_numbers = #tpu.dot_dimension_numbers<[2], [2], [1], [1], [0, 0, 0, 1, 1, 1], [0], [0]>} : vector<1x8x128xf32>, vector<1x4x128xf32>, vector<1x8x4xf32> -> vector<1x8x4xf32>
    "tpu.trace_stop"() : () -> ()
    %3 = arith.mulf %0, %0 : vector<1x8x128xf32>
    %cst_5 = arith.constant dense<0.000000e+00> : vector<1x8xf32>
    %4 = vector.multi_reduction <add>, %3, %cst_5 [2] : vector<1x8x128xf32> to vector<1x8xf32>
    %5 = vector.shape_cast %4 : vector<1x8xf32> to vector<1x8x1xf32>
    %6 = arith.mulf %1, %1 : vector<1x4x128xf32>
    %cst_6 = arith.constant dense<0.000000e+00> : vector<1x4xf32>
    %7 = vector.multi_reduction <add>, %6, %cst_6 [2] : vector<1x4x128xf32> to vector<1x4xf32>
    %8 = vector.shape_cast %7 : vector<1x4xf32> to vector<1x1x4xf32>
    %cst_7 = arith.constant 2.000000e+00 : f32
    %9 = vector.broadcast %cst_7 : f32 to vector<1x8x4xf32>
    %10 = arith.mulf %9, %2 : vector<1x8x4xf32>
    %11 = vector.broadcast %5 : vector<1x8x1xf32> to vector<1x8x4xf32>
    %12 = arith.subf %11, %10 : vector<1x8x4xf32>
    %13 = vector.broadcast %8 : vector<1x1x4xf32> to vector<1x8x4xf32>
    %14 = arith.addf %12, %13 : vector<1x8x4xf32>
    %cst_8 = arith.constant 0.000000e+00 : f32
    %15 = vector.broadcast %cst_8 : f32 to vector<1x8x4xf32>
    %16 = arith.subf %15, %14 : vector<1x8x4xf32>
    %cst_9 = arith.constant dense<0xFF800000> : vector<1x8xf32>
    %17 = vector.multi_reduction <maximumf>, %16, %cst_9 [2] : vector<1x8x4xf32> to vector<1x8xf32>
    %18 = vector.shape_cast %17 : vector<1x8xf32> to vector<1x8x1xf32>
    %19 = vector.broadcast %18 : vector<1x8x1xf32> to vector<1x8x4xf32>
    %20 = arith.subf %16, %19 : vector<1x8x4xf32>
    %21 = math.exp %20 : vector<1x8x4xf32>
    %cst_10 = arith.constant dense<0.000000e+00> : vector<1x8xf32>
    %22 = vector.multi_reduction <add>, %21, %cst_10 [2] : vector<1x8x4xf32> to vector<1x8xf32>
    %23 = vector.shape_cast %22 : vector<1x8xf32> to vector<1x8x1xf32>
    %24 = math.log %23 : vector<1x8x1xf32>
    %25 = arith.addf %18, %24 : vector<1x8x1xf32>
    %26 = vector.broadcast %25 : vector<1x8x1xf32> to vector<1x8x4xf32>
    %27 = arith.subf %26, %16 : vector<1x8x4xf32>
    %c0_11 = arith.constant 0 : index
    %c0_12 = arith.constant 0 : index
    %c0_13 = arith.constant 0 : index
    %28 = vector.load %arg3[%c0_11, %c0_12, %c0_13] : memref<1x8x4xf32, #tpu.memory_space<vmem>>, vector<1x8x4xf32>
    tpu.vector_store %arg3[%c0_11, %c0_12, %c0_13], %27 {strides = array<i32>} : memref<1x8x4xf32, #tpu.memory_space<vmem>>, vector<1x8x4xf32>,
    return
  }
  func.func @transform_0(%arg0: i32) -> (i32, i32, i32) {
    %c0_i32 = arith.constant 0 : i32
    %c0_i32_0 = arith.constant 0 : i32
    %c0_i32_1 = arith.constant 0 : i32
    return %arg0, %c0_i32, %c0_i32_0 : i32, i32, i32
  }
  func.func @transform_1(%arg0: i32) -> (i32, i32, i32) {
    %c0_i32 = arith.constant 0 : i32
    %c0_i32_0 = arith.constant 0 : i32
    %c0_i32_1 = arith.constant 0 : i32
    return %arg0, %c0_i32, %c0_i32_0 : i32, i32, i32
  }
  func.func @transform_2(%arg0: i32) -> (i32, i32, i32) {
    %c0_i32 = arith.constant 0 : i32
    %c0_i32_0 = arith.constant 0 : i32
    %c0_i32_1 = arith.constant 0 : i32
    return %arg0, %c0_i32, %c0_i32_0 : i32, i32, i32
  }
}

</mosaic_0001>

<llo_original>
// kernel: protonet_applier_forward.3
$region0: #{protonet_applier_forward.3}
  #allocation0 [shape = 'u32[]', space=smem, size = 0x4, offset = 0x4, fixed_abs, tag = 'smem constant byte address 0x4 - core index']
  #allocation1 [shape = 'u32[72,128]{1,0:T(1,128)}', space=vmem, size = 0x9000, scoped, tag = 'internal scratch']
  %s0 = inlined_call_operand.vmem [shape: f32[2,8,128], index: 0, kind: input, shape index: {}]
  %s1 = inlined_call_operand.vmem [shape: f32[2,4,128], index: 1, kind: input, shape index: {}]
  %s2 = inlined_call_operand.vmem [shape: f32[2,8,4], index: 2, kind: output, shape index: {}]
  %s3 = sld [smem:[#allocation0]]
  $region41: #{protonet_applier_forward.3} parent=0
    _
  %s5 = ssub.s32 1, %s3
  %s6 = scalar_select 0, %s5, %s3
  loop: start=0, step=1, limit=4
  $region2: #{protonet_applier_forward.3} parent=0 // loop_pre_header
    _
  $region3: #{protonet_applier_forward.3} parent=0 // loop_header
    %s8 = sphi 0, %s12
    %p9 = scmp.ge.s32.totalorder %s8, 4
    %s18 = sphi 0, %s20
    %s21 = sphi 0, %s18
    %s22 = sphi 0, %s21
    %s38 = sphi 0, %s22
    %s44 = sphi 0, %s46
    %s47 = sphi 0, %s44
    %s48 = sphi 0, %s47
    %s64 = sphi 0, %s48
    %s70 = sphi 0, %s72
    %s73 = sphi 0, %s70
    %s74 = sphi 0, %s73
    %s90 = sphi 0, %s74
  $region4: #{protonet_applier_forward.3} parent=0 // loop_header_branch
    %11 = sbr.rel (%p9) target = $region8
  $region5: #{protonet_applier_forward.3} parent=0 // loop_body
    %s13 = ssub.s32 %s8, 1
    %s14 = ssub.s32 %s8, 2
    %s15 = sadd.s32 %s8, 1
    %s16 = ssub.s32 %s8, %s15
    %p17 = scmp.eq.s32.totalorder %s16, 0
    %s19 = sadd.s32 %s18, 1
    %s20 = scalar_select %p17, %s18, %s19
    %p23 = pneg %p17
    %p24 = scmp.eq.s32.totalorder %s8, 1
    %p25 = por %p23, %p24
    %p26 = scmp.ne.s32.totalorder %s18, %s21
    %p27 = scmp.eq.s32.totalorder %s8, 0
    %p28 = por %p26, %p27
    %p29 = scmp.ne.s32.totalorder %s18, %s21
    %p30 = scmp.eq.s32.totalorder %s13, 1
    %p31 = por %p29, %p30
    %p32 = scmp.ne.s32.totalorder %s21, %s22
    %p33 = scmp.eq.s32.totalorder %s13, 0
    %p34 = por %p32, %p33
    %p35 = scmp.ne.s32.totalorder %s21, %s22
    %p36 = scmp.eq.s32.totalorder %s14, 1
    %p37 = por %p35, %p36
    %p39 = scmp.ne.s32.totalorder %s22, %s38
    %p40 = scmp.eq.s32.totalorder %s14, 0
    %p41 = por %p39, %p40
    %s42 = ssub.s32 %s8, %s15
    %p43 = scmp.eq.s32.totalorder %s42, 0
    %s45 = sadd.s32 %s44, 1
    %s46 = scalar_select %p43, %s44, %s45
    %p49 = pneg %p43
    %p50 = scmp.eq.s32.totalorder %s8, 1
    %p51 = por %p49, %p50
    %p52 = scmp.ne.s32.totalorder %s44, %s47
    %p53 = scmp.eq.s32.totalorder %s8, 0
    %p54 = por %p52, %p53
    %p55 = scmp.ne.s32.totalorder %s44, %s47
    %p56 = scmp.eq.s32.totalorder %s13, 1
    %p57 = por %p55, %p56
    %p58 = scmp.ne.s32.totalorder %s47, %s48
    %p59 = scmp.eq.s32.totalorder %s13, 0
    %p60 = por %p58, %p59
    %p61 = scmp.ne.s32.totalorder %s47, %s48
    %p62 = scmp.eq.s32.totalorder %s14, 1
    %p63 = por %p61, %p62
    %p65 = scmp.ne.s32.totalorder %s48, %s64
    %p66 = scmp.eq.s32.totalorder %s14, 0
    %p67 = por %p65, %p66
    %s68 = ssub.s32 %s8, %s15
    %p69 = scmp.eq.s32.totalorder %s68, 0
    %s71 = sadd.s32 %s70, 1
    %s72 = scalar_select %p69, %s70, %s71
    %p75 = pneg %p69
    %p76 = scmp.eq.s32.totalorder %s8, 1
    %p77 = por %p75, %p76
    %p78 = scmp.ne.s32.totalorder %s70, %s73
    %p79 = scmp.eq.s32.totalorder %s8, 0
    %p80 = por %p78, %p79
    %p81 = scmp.ne.s32.totalorder %s70, %s73
    %p82 = scmp.eq.s32.totalorder %s13, 1
    %p83 = por %p81, %p82
    %p84 = scmp.ne.s32.totalorder %s73, %s74
    %p85 = scmp.eq.s32.totalorder %s13, 0
    %p86 = por %p84, %p85
    %p87 = scmp.ne.s32.totalorder %s73, %s74
    %p88 = scmp.eq.s32.totalorder %s14, 1
    %p89 = por %p87, %p88
    %p91 = scmp.ne.s32.totalorder %s74, %s90
    %p92 = scmp.eq.s32.totalorder %s14, 0
    %p93 = por %p91, %p92
    %p94 = scmp.le.s32.totalorder 1, %s8
    %p95 = scmp.lt.s32.totalorder %s8, 3
    %p96 = pnand %p94, %p95
    %p97 = pneg %p96
    // Predicated region
    $region9: #{protonet_applier_forward.3} parent=5 // pred_check
      _
    $region10: #{protonet_applier_forward.3} parent=5 // pred_check_branch
      %99 = sbr.rel (%p96) target = $region12
    $region11: #{protonet_applier_forward.3} parent=5 // pred_region
      %s100 = ssub.s32 %s8, 1
    $region12: #{protonet_applier_forward.3} parent=5 // pred_fallthru
      _
    %p101 = scmp.lt.s32.totalorder %s8, 2
    // Predicated region
    $region13: #{protonet_applier_forward.3} parent=5 // pred_check
      %p102 = pneg %p101
    $region14: #{protonet_applier_forward.3} parent=5 // pred_check_branch
      %104 = sbr.rel (%p102) target = $region16
    $region15: #{protonet_applier_forward.3} parent=5 // pred_region
      // Predicated region
      $region17: #{protonet_applier_forward.3} parent=15 // pred_check
        %p105 = pneg %p28
      $region18: #{protonet_applier_forward.3} parent=15 // pred_check_branch
        %107 = sbr.rel (%p105) target = $region20
      $region19: #{protonet_applier_forward.3} parent=15 // pred_region
        %p108 = scmp.lt.s32.totalorder %s8, 1
        %s109 = scalar_select %p108, %s8, 1
        %s110 = smul.addr %s109, 8
        %s111 = scalar_lea.vmem %s0, %s110
      $region20: #{protonet_applier_forward.3} parent=15 // pred_fallthru
        _
      // Predicated region
      $region21: #{protonet_applier_forward.3} parent=15 // pred_check
        %p112 = pneg %p54
      $region22: #{protonet_applier_forward.3} parent=15 // pred_check_branch
        %114 = sbr.rel (%p112) target = $region24
      $region23: #{protonet_applier_forward.3} parent=15 // pred_region
        %p115 = scmp.lt.s32.totalorder %s8, 1
        %s116 = scalar_select %p115, %s8, 1
        %s117 = smul.addr %s116, 4
        %s118 = scalar_lea.vmem %s1, %s117
      $region24: #{protonet_applier_forward.3} parent=15 // pred_fallthru
        _
    $region16: #{protonet_applier_forward.3} parent=5 // pred_fallthru
      _
    %p119 = scmp.le.s32.totalorder 1, %s8
    %p120 = scmp.lt.s32.totalorder %s8, 3
    %p121 = pnand %p119, %p120
    %p122 = pneg %p121
    // Predicated region
    $region25: #{protonet_applier_forward.3} parent=5 // pred_check
      _
    $region26: #{protonet_applier_forward.3} parent=5 // pred_check_branch
      %124 = sbr.rel (%p121) target = $region28
    $region27: #{protonet_applier_forward.3} parent=5 // pred_region
      %s125 = ssub.s32 %s8, 1
      %p126 = scmp.lt.s32.totalorder %s13, 1
      %s127 = scalar_select %p126, %s13, 1
      %s128 = smul.addr %s127, 8
      %s129 = scalar_lea.vmem %s0, %s128
      %p130 = pneg %p34
      %p131 = pneg %p31
      %p132 = scmp.lt.s32.totalorder %s13, 1
      %s133 = scalar_select %p132, %s13, 1
      %s134 = smul.addr %s133, 4
      %s135 = scalar_lea.vmem %s1, %s134
      %p136 = pneg %p60
      %p137 = pneg %p57
      %p138 = pneg %p86
      %p139 = pneg %p83
      %p140 = scmp.lt.s32.totalorder %s13, 1
      %s141 = scalar_select %p140, %s13, 1
      %s142 = smul.addr %s141, 8
      %s143 = scalar_lea.vmem %s2, %s142
      %p144 = scmp.lt.s32.totalorder %s13, 1
      %s145 = scalar_select %p144, %s13, 1
      %s146 = smul.addr %s145, 8
      %s147 = scalar_lea.vmem %s0, %s146
      %p148 = scmp.lt.s32.totalorder %s13, 1
      %s149 = scalar_select %p148, %s13, 1
      %s150 = smul.addr %s149, 4
      %s151 = scalar_lea.vmem %s1, %s150
      %p152 = scmp.lt.s32.totalorder %s13, 1
      %s153 = scalar_select %p152, %s13, 1
      %s154 = smul.addr %s153, 8
      %s155 = scalar_lea.vmem %s2, %s154
      %v156 = vld [vmem:[%s147] sm:$0xff]
      %v157 = vld [vmem:[%s151] sm:$0xf]
      %158 = vmatpush.xpose.msra.mxu0 0.0
      %159 = vmatpush.xpose.msra.mxu0 0.0
      %160 = vmatpush.xpose.msra.mxu0 0.0
      %161 = vmatpush.xpose.msra.mxu0 0.0
      %162 = vmatpush.xpose.msra.mxu0 0.0
      %163 = vmatpush.xpose.msra.mxu0 0.0
      %164 = vmatpush.xpose.msra.mxu0 0.0
      %165 = vmatpush.xpose.msra.mxu0 0.0
      %166 = vmatpush.xpose.msra.mxu0 0.0
      %167 = vmatpush.xpose.msra.mxu0 0.0
      %168 = vmatpush.xpose.msra.mxu0 0.0
      %169 = vmatpush.xpose.msra.mxu0 0.0
      %170 = vmatpush.xpose.msra.mxu0 0.0
      %171 = vmatpush.xpose.msra.mxu0 0.0
      %172 = vmatpush.xpose.msra.mxu0 0.0
      %173 = vmatpush.xpose.msra.mxu0 %v157
      %174 = vmatmul.f32.gmra.mxu0 %v156
      %v175 = vpop.f32.mrf.mxu0
      %v176 = vadd.f32 0.0, %v175
      %177 = vdwg.mxu0
      %v178 = vmul.f32 %v156, %v156
      %179 = vadd.xlane.f32.xlu0 %v178
      %v180 = vpop.xlane.xlu0 %179
      %v181 = vmul.f32 %v157, %v157
      %vm182 = vcmask 1043456
      %v183 = vsel %vm182, %v181, 0.0
      %184 = vadd.xlane.f32.xlu0 %v183
      %v185 = vpop.xlane.xlu0 %184
      %v186 = vmul.f32 %v176, 2.0
      %v187 = vsub.f32 %v180, %v186
      %v189 = vlaneseq
      %v190 = vand.u32 %v189, 127
      %v191 = vperm.slane %v185, %v190
      %vm192 = vcmask 1042434
      %v193 = vsel %vm192, %v191, %v191
      %vm194 = vcmask 1043459
      %v195 = vsel %vm194, %v191, %v193
      %vm196 = vcmask 1044484
      %v197 = vsel %vm196, %v191, %v195
      %vm198 = vcmask 1045509
      %v199 = vsel %vm198, %v191, %v197
      %vm200 = vcmask 1046534
      %v201 = vsel %vm200, %v191, %v199
      %vm202 = vcmask 1047559
      %v203 = vsel %vm202, %v191, %v201
      %v205 = vadd.f32 %v187, %v203
      %v206 = vsub.f32 0.0, %v205
      %vm207 = vcmask 31744
      %v208 = vsel %vm207, %v206, -inf
      %209 = vmax.xlane.f32.xlu0 %v208
      %v210 = vpop.xlane.xlu0 %209
      %v211 = vsub.f32 %v206, %v210
      %v212 = vmul.f32 %v211, 1.442695
      %v213 = vpow.pop %v212
      %v214 = vsel %vm207, %v213, 0.0
      %215 = vadd.xlane.f32.xlu0 %v214
      %v216 = vpop.xlane.xlu0 %215
      %v217 = vlog2.pop %v216
      %v218 = vmul.f32 %v217, 0.6931472
      %v219 = vadd.f32 %v210, %v218
      %v220 = vsub.f32 %v219, %v206
      %221 = vst.msk [vmem:[%s155] sm:$0xff] %vm207, %v220
      %p222 = scmp.lt.s32.totalorder %s13, 1
      %s223 = scalar_select %p222, %s13, 1
      %s224 = smul.addr %s223, 8
      %s225 = scalar_lea.vmem %s2, %s224
      // Predicated region
      $region29: #{protonet_applier_forward.3} parent=27 // pred_check
        %p226 = pneg %p83
      $region30: #{protonet_applier_forward.3} parent=27 // pred_check_branch
        %228 = sbr.rel (%p226) target = $region32
      $region31: #{protonet_applier_forward.3} parent=27 // pred_region
        _
      $region32: #{protonet_applier_forward.3} parent=27 // pred_fallthru
        _
    $region28: #{protonet_applier_forward.3} parent=5 // pred_fallthru
      _
    %p229 = scmp.le.s32.totalorder 2, %s8
    // Predicated region
    $region33: #{protonet_applier_forward.3} parent=5 // pred_check
      %p230 = pneg %p229
    $region34: #{protonet_applier_forward.3} parent=5 // pred_check_branch
      %232 = sbr.rel (%p230) target = $region36
    $region35: #{protonet_applier_forward.3} parent=5 // pred_region
      %s233 = ssub.s32 %s8, 2
      // Predicated region
      $region37: #{protonet_applier_forward.3} parent=35 // pred_check
        %p234 = pneg %p89
      $region38: #{protonet_applier_forward.3} parent=35 // pred_check_branch
        %236 = sbr.rel (%p234) target = $region40
      $region39: #{protonet_applier_forward.3} parent=35 // pred_region
        %p237 = scmp.lt.s32.totalorder %s14, 1
        %s238 = scalar_select %p237, %s14, 1
        %s239 = smul.addr %s238, 8
        %s240 = scalar_lea.vmem %s2, %s239
      $region40: #{protonet_applier_forward.3} parent=35 // pred_fallthru
        _
    $region36: #{protonet_applier_forward.3} parent=5 // pred_fallthru
      _
  $region6: #{protonet_applier_forward.3} parent=0 // loop_footer
    %s12 = sadd.s32 1, %s8
  $region7: #{protonet_applier_forward.3} parent=0 // loop_footer_branch
    %7 = sbr.rel target = $region3
  $region8: #{protonet_applier_forward.3} parent=0 // loop_exit
    _

// kernel: protonet_applier_forward.2
$region0: #{protonet_applier_forward.2}
  #allocation0 [shape = 'u32[]', space=smem, size = 0x4, offset = 0x4, fixed_abs, tag = 'smem constant byte address 0x4 - core index']
  #allocation1 [shape = 'u32[72,128]{1,0:T(1,128)}', space=vmem, size = 0x9000, scoped, tag = 'internal scratch']
  %s0 = inlined_call_operand.vmem [shape: bf16[16,16,163], index: 0, kind: input, shape index: {}]
  %s1 = inlined_call_operand.vmem [shape: bf16[163,2048], index: 1, kind: input, shape index: {}]
  %s2 = inlined_call_operand.vmem [shape: bf16[128,128], index: 2, kind: input, shape index: {}]
  %s3 = inlined_call_operand.vmem [shape: f32[1,128], index: 3, kind: input, shape index: {}]
  %s4 = inlined_call_operand.vmem [shape: f32[16,128], index: 4, kind: output, shape index: {}]
  %s5 = sld [smem:[#allocation0]]
  $region49: #{protonet_applier_forward.2} parent=0
    _
  %s7 = ssub.s32 1, %s5
  %s8 = scalar_select 0, %s7, %s5
  loop: start=0, step=1, limit=4
  $region2: #{protonet_applier_forward.2} parent=0 // loop_pre_header
    _
  $region3: #{protonet_applier_forward.2} parent=0 // loop_header
    %s10 = sphi 0, %s14
    %p11 = scmp.ge.s32.totalorder %s10, 4
    %s20 = sphi 0, %s22
    %s23 = sphi 0, %s20
    %s24 = sphi 0, %s23
    %s40 = sphi 0, %s24
    %s44 = sphi 0, %s44
    %s46 = sphi 0, %s44
    %s47 = sphi 0, %s46
    %s61 = sphi 0, %s47
    %s65 = sphi 0, %s65
    %s67 = sphi 0, %s65
    %s68 = sphi 0, %s67
    %s82 = sphi 0, %s68
    %s86 = sphi 0, %s86
    %s88 = sphi 0, %s86
    %s89 = sphi 0, %s88
    %s103 = sphi 0, %s89
    %s109 = sphi 0, %s111
    %s112 = sphi 0, %s109
    %s113 = sphi 0, %s112
    %s129 = sphi 0, %s113
  $region4: #{protonet_applier_forward.2} parent=0 // loop_header_branch
    %13 = sbr.rel (%p11) target = $region8
  $region5: #{protonet_applier_forward.2} parent=0 // loop_body
    %s15 = ssub.s32 %s10, 1
    %s16 = ssub.s32 %s10, 2
    %s17 = sadd.s32 %s10, 1
    %s18 = ssub.s32 %s10, %s17
    %p19 = scmp.eq.s32.totalorder %s18, 0
    %s21 = sadd.s32 %s20, 1
    %s22 = scalar_select %p19, %s20, %s21
    %p25 = pneg %p19
    %p26 = scmp.eq.s32.totalorder %s10, 1
    %p27 = por %p25, %p26
    %p28 = scmp.ne.s32.totalorder %s20, %s23
    %p29 = scmp.eq.s32.totalorder %s10, 0
    %p30 = por %p28, %p29
    %p31 = scmp.ne.s32.totalorder %s20, %s23
    %p32 = scmp.eq.s32.totalorder %s15, 1
    %p33 = por %p31, %p32
    %p34 = scmp.ne.s32.totalorder %s23, %s24
    %p35 = scmp.eq.s32.totalorder %s15, 0
    %p36 = por %p34, %p35
    %p37 = scmp.ne.s32.totalorder %s23, %s24
    %p38 = scmp.eq.s32.totalorder %s16, 1
    %p39 = por %p37, %p38
    %p41 = scmp.ne.s32.totalorder %s24, %s40
    %p42 = scmp.eq.s32.totalorder %s16, 0
    %p43 = por %p41, %p42
    %s45 = sadd.s32 %s44, 1
    %p48 = scmp.eq.s32.totalorder %s10, 1
    %p49 = scmp.ne.s32.totalorder %s44, %s46
    %p50 = scmp.eq.s32.totalorder %s10, 0
    %p51 = por %p49, %p50
    %p52 = scmp.ne.s32.totalorder %s44, %s46
    %p53 = scmp.eq.s32.totalorder %s15, 1
    %p54 = por %p52, %p53
    %p55 = scmp.ne.s32.totalorder %s46, %s47
    %p56 = scmp.eq.s32.totalorder %s15, 0
    %p57 = por %p55, %p56
    %p58 = scmp.ne.s32.totalorder %s46, %s47
    %p59 = scmp.eq.s32.totalorder %s16, 1
    %p60 = por %p58, %p59
    %p62 = scmp.ne.s32.totalorder %s47, %s61
    %p63 = scmp.eq.s32.totalorder %s16, 0
    %p64 = por %p62, %p63
    %s66 = sadd.s32 %s65, 1
    %p69 = scmp.eq.s32.totalorder %s10, 1
    %p70 = scmp.ne.s32.totalorder %s65, %s67
    %p71 = scmp.eq.s32.totalorder %s10, 0
    %p72 = por %p70, %p71
    %p73 = scmp.ne.s32.totalorder %s65, %s67
    %p74 = scmp.eq.s32.totalorder %s15, 1
    %p75 = por %p73, %p74
    %p76 = scmp.ne.s32.totalorder %s67, %s68
    %p77 = scmp.eq.s32.totalorder %s15, 0
    %p78 = por %p76, %p77
    %p79 = scmp.ne.s32.totalorder %s67, %s68
    %p80 = scmp.eq.s32.totalorder %s16, 1
    %p81 = por %p79, %p80
    %p83 = scmp.ne.s32.totalorder %s68, %s82
    %p84 = scmp.eq.s32.totalorder %s16, 0
    %p85 = por %p83, %p84
    %s87 = sadd.s32 %s86, 1
    %p90 = scmp.eq.s32.totalorder %s10, 1
    %p91 = scmp.ne.s32.totalorder %s86, %s88
    %p92 = scmp.eq.s32.totalorder %s10, 0
    %p93 = por %p91, %p92
    %p94 = scmp.ne.s32.totalorder %s86, %s88
    %p95 = scmp.eq.s32.totalorder %s15, 1
    %p96 = por %p94, %p95
    %p97 = scmp.ne.s32.totalorder %s88, %s89
    %p98 = scmp.eq.s32.totalorder %s15, 0
    %p99 = por %p97, %p98
    %p100 = scmp.ne.s32.totalorder %s88, %s89
    %p101 = scmp.eq.s32.totalorder %s16, 1
    %p102 = por %p100, %p101
    %p104 = scmp.ne.s32.totalorder %s89, %s103
    %p105 = scmp.eq.s32.totalorder %s16, 0
    %p106 = por %p104, %p105
    %s107 = ssub.s32 %s10, %s17
    %p108 = scmp.eq.s32.totalorder %s107, 0
    %s110 = sadd.s32 %s109, 1
    %s111 = scalar_select %p108, %s109, %s110
    %p114 = pneg %p108
    %p115 = scmp.eq.s32.totalorder %s10, 1
    %p116 = por %p114, %p115
    %p117 = scmp.ne.s32.totalorder %s109, %s112
    %p118 = scmp.eq.s32.totalorder %s10, 0
    %p119 = por %p117, %p118
    %p120 = scmp.ne.s32.totalorder %s109, %s112
    %p121 = scmp.eq.s32.totalorder %s15, 1
    %p122 = por %p120, %p121
    %p123 = scmp.ne.s32.totalorder %s112, %s113
    %p124 = scmp.eq.s32.totalorder %s15, 0
    %p125 = por %p123, %p124
    %p126 = scmp.ne.s32.totalorder %s112, %s113
    %p127 = scmp.eq.s32.totalorder %s16, 1
    %p128 = por %p126, %p127
    %p130 = scmp.ne.s32.totalorder %s113, %s129
    %p131 = scmp.eq.s32.totalorder %s16, 0
    %p132 = por %p130, %p131
    %p133 = scmp.le.s32.totalorder 1, %s10
    %p134 = scmp.lt.s32.totalorder %s10, 3
    %p135 = pnand %p133, %p134
    %p136 = pneg %p135
    // Predicated region
    $region9: #{protonet_applier_forward.2} parent=5 // pred_check
      _
    $region10: #{protonet_applier_forward.2} parent=5 // pred_check_branch
      %138 = sbr.rel (%p135) target = $region12
    $region11: #{protonet_applier_forward.2} parent=5 // pred_region
      %s139 = ssub.s32 %s10, 1
      // Predicated region
      $region13: #{protonet_applier_forward.2} parent=11 // pred_check
        %p140 = pneg %p57
      $region14: #{protonet_applier_forward.2} parent=11 // pred_check_branch
        %142 = sbr.rel (%p140) target = $region16
      $region15: #{protonet_applier_forward.2} parent=11 // pred_region
        _
      $region16: #{protonet_applier_forward.2} parent=11 // pred_fallthru
        _
      // Predicated region
      $region17: #{protonet_applier_forward.2} parent=11 // pred_check
        %p143 = pneg %p78
      $region18: #{protonet_applier_forward.2} parent=11 // pred_check_branch
        %145 = sbr.rel (%p143) target = $region20
      $region19: #{protonet_applier_forward.2} parent=11 // pred_region
        _
      $region20: #{protonet_applier_forward.2} parent=11 // pred_fallthru
        _
      // Predicated region
      $region21: #{protonet_applier_forward.2} parent=11 // pred_check
        %p146 = pneg %p99
      $region22: #{protonet_applier_forward.2} parent=11 // pred_check_branch
        %148 = sbr.rel (%p146) target = $region24
      $region23: #{protonet_applier_forward.2} parent=11 // pred_region
        _
      $region24: #{protonet_applier_forward.2} parent=11 // pred_fallthru
        _
    $region12: #{protonet_applier_forward.2} parent=5 // pred_fallthru
      _
    %p149 = scmp.lt.s32.totalorder %s10, 2
    // Predicated region
    $region25: #{protonet_applier_forward.2} parent=5 // pred_check
      %p150 = pneg %p149
    $region26: #{protonet_applier_forward.2} parent=5 // pred_check_branch
      %152 = sbr.rel (%p150) target = $region28
    $region27: #{protonet_applier_forward.2} parent=5 // pred_region
      // Predicated region
      $region29: #{protonet_applier_forward.2} parent=27 // pred_check
        %p153 = pneg %p30
      $region30: #{protonet_applier_forward.2} parent=27 // pred_check_branch
        %155 = sbr.rel (%p153) target = $region32
      $region31: #{protonet_applier_forward.2} parent=27 // pred_region
        %s156 = smul.u32 8, %s10
        %p157 = scmp.lt.s32.totalorder %s156, 15
        %s158 = scalar_select %p157, %s156, 15
        %s159 = smul.addr %s158, 4
        %s160 = smul.addr %s159, 4
        %s161 = scalar_lea.vmem %s0, %s160
        %s162 = smul.u32 8, %s10
      $region32: #{protonet_applier_forward.2} parent=27 // pred_fallthru
        _
    $region28: #{protonet_applier_forward.2} parent=5 // pred_fallthru
      _
    %p163 = scmp.le.s32.totalorder 1, %s10
    %p164 = scmp.lt.s32.totalorder %s10, 3
    %p165 = pnand %p163, %p164
    %p166 = pneg %p165
    // Predicated region
    $region33: #{protonet_applier_forward.2} parent=5 // pred_check
      _
    $region34: #{protonet_applier_forward.2} parent=5 // pred_check_branch
      %168 = sbr.rel (%p165) target = $region36
    $region35: #{protonet_applier_forward.2} parent=5 // pred_region
      %s169 = ssub.s32 %s10, 1
      %s170 = smul.u32 8, %s15
      %p171 = scmp.lt.s32.totalorder %s170, 15
      %s172 = scalar_select %p171, %s170, 15
      %s173 = smul.addr %s172, 4
      %s174 = smul.addr %s173, 4
      %s175 = scalar_lea.vmem %s0, %s174
      %p176 = pneg %p36
      %p177 = pneg %p33
      %p178 = pneg %p57
      %p179 = pneg %p54
      %p180 = pneg %p78
      %p181 = pneg %p75
      %p182 = pneg %p99
      %p183 = pneg %p96
      %p184 = pneg %p125
      %p185 = pneg %p122
      %p186 = scmp.lt.s32.totalorder %s15, 1
      %s187 = scalar_select %p186, %s15, 1
      %s188 = smul.addr %s187, 8
      %s189 = scalar_lea.vmem %s4, %s188
      %s190 = smul.u32 8, %s15
      %p191 = scmp.lt.s32.totalorder %s190, 15
      %s192 = scalar_select %p191, %s190, 15
      %s193 = smul.addr %s192, 4
      %s194 = smul.addr %s193, 4
      %s195 = scalar_lea.vmem %s0, %s194
      %s196 = smul.u32 8, %s15
      %p197 = scmp.lt.s32.totalorder %s15, 1
      %s198 = scalar_select %p197, %s15, 1
      %s199 = smul.addr %s198, 8
      %s200 = scalar_lea.vmem %s4, %s199
      %v202 = vld [vmem:[%s195] sm:$0xff]
      %v203 = vld [vmem:[%s195 + $0x8] sm:$0xff]
      %v204 = vld [vmem:[%s195 + $0x10] sm:$0xff]
      %v205 = vld [vmem:[%s195 + $0x18] sm:$0xff]
      %v206 = vld [vmem:[%s195 + $0x20] sm:$0xff]
      %v207 = vld [vmem:[%s195 + $0x28] sm:$0xff]
      %v208 = vld [vmem:[%s195 + $0x30] sm:$0xff]
      %v209 = vld [vmem:[%s195 + $0x38] sm:$0xff]
      %v210 = vld [vmem:[%s195 + $0x40] sm:$0xff]
      %v211 = vld [vmem:[%s195 + $0x48] sm:$0xff]
      %v212 = vld [vmem:[%s195 + $0x50] sm:$0xff]
      %v213 = vld [vmem:[%s195 + $0x58] sm:$0xff]
      %v214 = vld [vmem:[%s195 + $0x60] sm:$0xff]
      %v215 = vld [vmem:[%s195 + $0x68] sm:$0xff]
      %v216 = vld [vmem:[%s195 + $0x70] sm:$0xff]
      %v217 = vld [vmem:[%s195 + $0x78] sm:$0xff]
      %v218 = vld [vmem:[%s1] sm:$0xff]
      %v219 = vld [vmem:[%s1 + $0x8] sm:$0xff]
      %v220 = vld [vmem:[%s1 + $0x10] sm:$0xff]
      %v221 = vld [vmem:[%s1 + $0x18] sm:$0xff]
      %v222 = vld [vmem:[%s1 + $0x20] sm:$0xff]
      %v223 = vld [vmem:[%s1 + $0x28] sm:$0xff]
      %v224 = vld [vmem:[%s1 + $0x30] sm:$0xff]
      %v225 = vld [vmem:[%s1 + $0x38] sm:$0xff]
      %v226 = vld [vmem:[%s1 + $0x40] sm:$0xff]
      %v227 = vld [vmem:[%s1 + $0x48] sm:$0xff]
      %v228 = vld [vmem:[%s1 + $0x50] sm:$0xff]
      %v229 = vld [vmem:[%s1 + $0x58] sm:$0xff]
      %v230 = vld [vmem:[%s1 + $0x60] sm:$0xff]
      %v231 = vld [vmem:[%s1 + $0x68] sm:$0xff]
      %v232 = vld [vmem:[%s1 + $0x70] sm:$0xff]
      %v233 = vld [vmem:[%s1 + $0x78] sm:$0xff]
      %v234 = vld [vmem:[%s1 + $0x80] sm:$0xff]
      %v235 = vld [vmem:[%s1 + $0x88] sm:$0xff]
      %v236 = vld [vmem:[%s1 + $0x90] sm:$0xff]
      %v237 = vld [vmem:[%s1 + $0x98] sm:$0xff]
      %v238 = vld [vmem:[%s1 + $0xa0] sm:$0xff]
      %v239 = vld [vmem:[%s1 + $0xa8] sm:$0xff]
      %v240 = vld [vmem:[%s1 + $0xb0] sm:$0xff]
      %v241 = vld [vmem:[%s1 + $0xb8] sm:$0xff]
      %v242 = vld [vmem:[%s1 + $0xc0] sm:$0xff]
      %v243 = vld [vmem:[%s1 + $0xc8] sm:$0xff]
      %v244 = vld [vmem:[%s1 + $0xd0] sm:$0xff]
      %v245 = vld [vmem:[%s1 + $0xd8] sm:$0xff]
      %v246 = vld [vmem:[%s1 + $0xe0] sm:$0xff]
      %v247 = vld [vmem:[%s1 + $0xe8] sm:$0xff]
      %v248 = vld [vmem:[%s1 + $0xf0] sm:$0xff]
      %v249 = vld [vmem:[%s1 + $0xf8] sm:$0xff]
      %v250 = vld [vmem:[%s1 + $0x100] sm:$0xff]
      %v251 = vld [vmem:[%s1 + $0x108] sm:$0xff]
      %v252 = vld [vmem:[%s1 + $0x110] sm:$0xff]
      %v253 = vld [vmem:[%s1 + $0x118] sm:$0xff]
      %v254 = vld [vmem:[%s1 + $0x120] sm:$0xff]
      %v255 = vld [vmem:[%s1 + $0x128] sm:$0xff]
      %v256 = vld [vmem:[%s1 + $0x130] sm:$0xff]
      %v257 = vld [vmem:[%s1 + $0x138] sm:$0xff]
      %v258 = vld [vmem:[%s1 + $0x140] sm:$0xff]
      %v259 = vld [vmem:[%s1 + $0x148] sm:$0xff]
      %v260 = vld [vmem:[%s1 + $0x150] sm:$0xff]
      %v261 = vld [vmem:[%s1 + $0x158] sm:$0xff]
      %v262 = vld [vmem:[%s1 + $0x160] sm:$0xff]
      %v263 = vld [vmem:[%s1 + $0x168] sm:$0xff]
      %v264 = vld [vmem:[%s1 + $0x170] sm:$0xff]
      %v265 = vld [vmem:[%s1 + $0x178] sm:$0xff]
      %v266 = vld [vmem:[%s1 + $0x180] sm:$0xff]
      %v267 = vld [vmem:[%s1 + $0x188] sm:$0xff]
      %v268 = vld [vmem:[%s1 + $0x190] sm:$0xff]
      %v269 = vld [vmem:[%s1 + $0x198] sm:$0xff]
      %v270 = vld [vmem:[%s1 + $0x1a0] sm:$0xff]
      %v271 = vld [vmem:[%s1 + $0x1a8] sm:$0xff]
      %v272 = vld [vmem:[%s1 + $0x1b0] sm:$0xff]
      %v273 = vld [vmem:[%s1 + $0x1b8] sm:$0xff]
      %v274 = vld [vmem:[%s1 + $0x1c0] sm:$0xff]
      %v275 = vld [vmem:[%s1 + $0x1c8] sm:$0xff]
      %v276 = vld [vmem:[%s1 + $0x1d0] sm:$0xff]
      %v277 = vld [vmem:[%s1 + $0x1d8] sm:$0xff]
      %v278 = vld [vmem:[%s1 + $0x1e0] sm:$0xff]
      %v279 = vld [vmem:[%s1 + $0x1e8] sm:$0xff]
      %v280 = vld [vmem:[%s1 + $0x1f0] sm:$0xff]
      %v281 = vld [vmem:[%s1 + $0x1f8] sm:$0xff]
      %v282 = vld [vmem:[%s1 + $0x200] sm:$0xff]
      %v283 = vld [vmem:[%s1 + $0x208] sm:$0xff]
      %v284 = vld [vmem:[%s1 + $0x210] sm:$0xff]
      %v285 = vld [vmem:[%s1 + $0x218] sm:$0xff]
      %v286 = vld [vmem:[%s1 + $0x220] sm:$0xff]
      %v287 = vld [vmem:[%s1 + $0x228] sm:$0xff]
      %v288 = vld [vmem:[%s1 + $0x230] sm:$0xff]
      %v289 = vld [vmem:[%s1 + $0x238] sm:$0xff]
      %v290 = vld [vmem:[%s1 + $0x240] sm:$0xff]
      %v291 = vld [vmem:[%s1 + $0x248] sm:$0xff]
      %v292 = vld [vmem:[%s1 + $0x250] sm:$0xff]
      %v293 = vld [vmem:[%s1 + $0x258] sm:$0xff]
      %v294 = vld [vmem:[%s1 + $0x260] sm:$0xff]
      %v295 = vld [vmem:[%s1 + $0x268] sm:$0xff]
      %v296 = vld [vmem:[%s1 + $0x270] sm:$0xff]
      %v297 = vld [vmem:[%s1 + $0x278] sm:$0xff]
      %v298 = vld [vmem:[%s1 + $0x280] sm:$0xff]
      %v299 = vld [vmem:[%s1 + $0x288] sm:$0xff]
      %v300 = vld [vmem:[%s1 + $0x290] sm:$0xff]
      %v301 = vld [vmem:[%s1 + $0x298] sm:$0xff]
      %v302 = vld [vmem:[%s1 + $0x2a0] sm:$0xff]
      %v303 = vld [vmem:[%s1 + $0x2a8] sm:$0xff]
      %v304 = vld [vmem:[%s1 + $0x2b0] sm:$0xff]
      %v305 = vld [vmem:[%s1 + $0x2b8] sm:$0xff]
      %v306 = vld [vmem:[%s1 + $0x2c0] sm:$0xff]
      %v307 = vld [vmem:[%s1 + $0x2c8] sm:$0xff]
      %v308 = vld [vmem:[%s1 + $0x2d0] sm:$0xff]
      %v309 = vld [vmem:[%s1 + $0x2d8] sm:$0xff]
      %v310 = vld [vmem:[%s1 + $0x2e0] sm:$0xff]
      %v311 = vld [vmem:[%s1 + $0x2e8] sm:$0xff]
      %v312 = vld [vmem:[%s1 + $0x2f0] sm:$0xff]
      %v313 = vld [vmem:[%s1 + $0x2f8] sm:$0xff]
      %v314 = vld [vmem:[%s1 + $0x300] sm:$0xff]
      %v315 = vld [vmem:[%s1 + $0x308] sm:$0xff]
      %v316 = vld [vmem:[%s1 + $0x310] sm:$0xff]
      %v317 = vld [vmem:[%s1 + $0x318] sm:$0xff]
      %v318 = vld [vmem:[%s1 + $0x320] sm:$0xff]
      %v319 = vld [vmem:[%s1 + $0x328] sm:$0xff]
      %v320 = vld [vmem:[%s1 + $0x330] sm:$0xff]
      %v321 = vld [vmem:[%s1 + $0x338] sm:$0xff]
      %v322 = vld [vmem:[%s1 + $0x340] sm:$0xff]
      %v323 = vld [vmem:[%s1 + $0x348] sm:$0xff]
      %v324 = vld [vmem:[%s1 + $0x350] sm:$0xff]
      %v325 = vld [vmem:[%s1 + $0x358] sm:$0xff]
      %v326 = vld [vmem:[%s1 + $0x360] sm:$0xff]
      %v327 = vld [vmem:[%s1 + $0x368] sm:$0xff]
      %v328 = vld [vmem:[%s1 + $0x370] sm:$0xff]
      %v329 = vld [vmem:[%s1 + $0x378] sm:$0xff]
      %v330 = vld [vmem:[%s1 + $0x380] sm:$0xff]
      %v331 = vld [vmem:[%s1 + $0x388] sm:$0xff]
      %v332 = vld [vmem:[%s1 + $0x390] sm:$0xff]
      %v333 = vld [vmem:[%s1 + $0x398] sm:$0xff]
      %v334 = vld [vmem:[%s1 + $0x3a0] sm:$0xff]
      %v335 = vld [vmem:[%s1 + $0x3a8] sm:$0xff]
      %v336 = vld [vmem:[%s1 + $0x3b0] sm:$0xff]
      %v337 = vld [vmem:[%s1 + $0x3b8] sm:$0xff]
      %v338 = vld [vmem:[%s1 + $0x3c0] sm:$0xff]
      %v339 = vld [vmem:[%s1 + $0x3c8] sm:$0xff]
      %v340 = vld [vmem:[%s1 + $0x3d0] sm:$0xff]
      %v341 = vld [vmem:[%s1 + $0x3d8] sm:$0xff]
      %v342 = vld [vmem:[%s1 + $0x3e0] sm:$0xff]
      %v343 = vld [vmem:[%s1 + $0x3e8] sm:$0xff]
      %v344 = vld [vmem:[%s1 + $0x3f0] sm:$0xff]
      %v345 = vld [vmem:[%s1 + $0x3f8] sm:$0xff]
      %v346 = vld [vmem:[%s1 + $0x400] sm:$0xff]
      %v347 = vld [vmem:[%s1 + $0x408] sm:$0xff]
      %v348 = vld [vmem:[%s1 + $0x410] sm:$0xff]
      %v349 = vld [vmem:[%s1 + $0x418] sm:$0xff]
      %v350 = vld [vmem:[%s1 + $0x420] sm:$0xff]
      %v351 = vld [vmem:[%s1 + $0x428] sm:$0xff]
      %v352 = vld [vmem:[%s1 + $0x430] sm:$0xff]
      %v353 = vld [vmem:[%s1 + $0x438] sm:$0xff]
      %v354 = vld [vmem:[%s1 + $0x440] sm:$0xff]
      %v355 = vld [vmem:[%s1 + $0x448] sm:$0xff]
      %v356 = vld [vmem:[%s1 + $0x450] sm:$0xff]
      %v357 = vld [vmem:[%s1 + $0x458] sm:$0xff]
      %v358 = vld [vmem:[%s1 + $0x460] sm:$0xff]
      %v359 = vld [vmem:[%s1 + $0x468] sm:$0xff]
      %v360 = vld [vmem:[%s1 + $0x470] sm:$0xff]
      %v361 = vld [vmem:[%s1 + $0x478] sm:$0xff]
      %v362 = vld [vmem:[%s1 + $0x480] sm:$0xff]
      %v363 = vld [vmem:[%s1 + $0x488] sm:$0xff]
      %v364 = vld [vmem:[%s1 + $0x490] sm:$0xff]
      %v365 = vld [vmem:[%s1 + $0x498] sm:$0xff]
      %v366 = vld [vmem:[%s1 + $0x4a0] sm:$0xff]
      %v367 = vld [vmem:[%s1 + $0x4a8] sm:$0xff]
      %v368 = vld [vmem:[%s1 + $0x4b0] sm:$0xff]
      %v369 = vld [vmem:[%s1 + $0x4b8] sm:$0xff]
      %v370 = vld [vmem:[%s1 + $0x4c0] sm:$0xff]
      %v371 = vld [vmem:[%s1 + $0x4c8] sm:$0xff]
      %v372 = vld [vmem:[%s1 + $0x4d0] sm:$0xff]
      %v373 = vld [vmem:[%s1 + $0x4d8] sm:$0xff]
      %v374 = vld [vmem:[%s1 + $0x4e0] sm:$0xff]
      %v375 = vld [vmem:[%s1 + $0x4e8] sm:$0xff]
      %v376 = vld [vmem:[%s1 + $0x4f0] sm:$0xff]
      %v377 = vld [vmem:[%s1 + $0x4f8] sm:$0xff]
      %v378 = vld [vmem:[%s1 + $0x500] sm:$0x33]
      %v379 = vld [vmem:[%s1 + $0x508] sm:$0x33]
      %v380 = vld [vmem:[%s1 + $0x510] sm:$0x33]
      %v381 = vld [vmem:[%s1 + $0x518] sm:$0x33]
      %v382 = vld [vmem:[%s1 + $0x520] sm:$0x33]
      %v383 = vld [vmem:[%s1 + $0x528] sm:$0x33]
      %v384 = vld [vmem:[%s1 + $0x530] sm:$0x33]
      %v385 = vld [vmem:[%s1 + $0x538] sm:$0x33]
      %v402 = vunpack.c.l.b16 %v202
      %v403 = vunpack.c.h.b16 %v202
      %v404 = vunpack.c.l.b16 %v203
      %v405 = vunpack.c.h.b16 %v203
      %v406 = vunpack.c.l.b16 %v204
      %v407 = vunpack.c.h.b16 %v204
      %v408 = vunpack.c.l.b16 %v205
      %v409 = vunpack.c.h.b16 %v205
      %v410 = vunpack.c.l.b16 %v206
      %v411 = vunpack.c.h.b16 %v206
      %v412 = vunpack.c.l.b16 %v207
      %v413 = vunpack.c.h.b16 %v207
      %v414 = vunpack.c.l.b16 %v208
      %v415 = vunpack.c.h.b16 %v208
      %v416 = vunpack.c.l.b16 %v209
      %v417 = vunpack.c.h.b16 %v209
      %v418 = vunpack.c.l.b16 %v210
      %v419 = vunpack.c.h.b16 %v210
      %v420 = vunpack.c.l.b16 %v211
      %v421 = vunpack.c.h.b16 %v211
      %v422 = vunpack.c.l.b16 %v212
      %v423 = vunpack.c.h.b16 %v212
      %v424 = vunpack.c.l.b16 %v213
      %v425 = vunpack.c.h.b16 %v213
      %v426 = vunpack.c.l.b16 %v214
      %v427 = vunpack.c.h.b16 %v214
      %v428 = vunpack.c.l.b16 %v215
      %v429 = vunpack.c.h.b16 %v215
      %v430 = vunpack.c.l.b16 %v216
      %v431 = vunpack.c.h.b16 %v216
      %v432 = vunpack.c.l.b16 %v217
      %v433 = vunpack.c.h.b16 %v217
      %v434 = vpack.c.b16 %v404, %v402
      %v435 = vpack.c.b16 %v405, %v403
      %v436 = vpack.c.b16 %v408, %v406
      %v437 = vpack.c.b16 %v409, %v407
      %v438 = vpack.c.b16 %v412, %v410
      %v439 = vpack.c.b16 %v413, %v411
      %v440 = vpack.c.b16 %v416, %v414
      %v441 = vpack.c.b16 %v417, %v415
      %v442 = vpack.c.b16 %v420, %v418
      %v443 = vpack.c.b16 %v421, %v419
      %v444 = vpack.c.b16 %v424, %v422
      %v445 = vpack.c.b16 %v425, %v423
      %v446 = vpack.c.b16 %v428, %v426
      %v447 = vpack.c.b16 %v429, %v427
      %v448 = vpack.c.b16 %v432, %v430
      %v449 = vpack.c.b16 %v433, %v431
      %v626 = vunpack.c.l.b16 %v218
      %v627 = vunpack.c.h.b16 %v218
      %v628 = vunpack.c.l.b16 %v219
      %v629 = vunpack.c.h.b16 %v219
      %v630 = vunpack.c.l.b16 %v220
      %v631 = vunpack.c.h.b16 %v220
      %v632 = vunpack.c.l.b16 %v221
      %v633 = vunpack.c.h.b16 %v221
      %v634 = vunpack.c.l.b16 %v222
      %v635 = vunpack.c.h.b16 %v222
      %v636 = vunpack.c.l.b16 %v223
      %v637 = vunpack.c.h.b16 %v223
      %v638 = vunpack.c.l.b16 %v224
      %v639 = vunpack.c.h.b16 %v224
      %v640 = vunpack.c.l.b16 %v225
      %v641 = vunpack.c.h.b16 %v225
      %v642 = vunpack.c.l.b16 %v226
      %v643 = vunpack.c.h.b16 %v226
      %v644 = vunpack.c.l.b16 %v227
      %v645 = vunpack.c.h.b16 %v227
      %v646 = vunpack.c.l.b16 %v228
      %v647 = vunpack.c.h.b16 %v228
      %v648 = vunpack.c.l.b16 %v229
      %v649 = vunpack.c.h.b16 %v229
      %v650 = vunpack.c.l.b16 %v230
      %v651 = vunpack.c.h.b16 %v230
      %v652 = vunpack.c.l.b16 %v231
      %v653 = vunpack.c.h.b16 %v231
      %v654 = vunpack.c.l.b16 %v232
      %v655 = vunpack.c.h.b16 %v232
      %v656 = vunpack.c.l.b16 %v233
      %v657 = vunpack.c.h.b16 %v233
      %v658 = vunpack.c.l.b16 %v234
      %v659 = vunpack.c.h.b16 %v234
      %v660 = vunpack.c.l.b16 %v235
      %v661 = vunpack.c.h.b16 %v235
      %v662 = vunpack.c.l.b16 %v236
      %v663 = vunpack.c.h.b16 %v236
      %v664 = vunpack.c.l.b16 %v237
      %v665 = vunpack.c.h.b16 %v237
      %v666 = vunpack.c.l.b16 %v238
      %v667 = vunpack.c.h.b16 %v238
      %v668 = vunpack.c.l.b16 %v239
      %v669 = vunpack.c.h.b16 %v239
      %v670 = vunpack.c.l.b16 %v240
      %v671 = vunpack.c.h.b16 %v240
      %v672 = vunpack.c.l.b16 %v241
      %v673 = vunpack.c.h.b16 %v241
      %v674 = vunpack.c.l.b16 %v242
      %v675 = vunpack.c.h.b16 %v242
      %v676 = vunpack.c.l.b16 %v243
      %v677 = vunpack.c.h.b16 %v243
      %v678 = vunpack.c.l.b16 %v244
      %v679 = vunpack.c.h.b16 %v244
      %v680 = vunpack.c.l.b16 %v245
      %v681 = vunpack.c.h.b16 %v245
      %v682 = vunpack.c.l.b16 %v246
      %v683 = vunpack.c.h.b16 %v246
      %v684 = vunpack.c.l.b16 %v247
      %v685 = vunpack.c.h.b16 %v247
      %v686 = vunpack.c.l.b16 %v248
      %v687 = vunpack.c.h.b16 %v248
      %v688 = vunpack.c.l.b16 %v249
      %v689 = vunpack.c.h.b16 %v249
      %v690 = vunpack.c.l.b16 %v250
      %v691 = vunpack.c.h.b16 %v250
      %v692 = vunpack.c.l.b16 %v251
      %v693 = vunpack.c.h.b16 %v251
      %v694 = vunpack.c.l.b16 %v252
      %v695 = vunpack.c.h.b16 %v252
      %v696 = vunpack.c.l.b16 %v253
      %v697 = vunpack.c.h.b16 %v253
      %v698 = vunpack.c.l.b16 %v254
      %v699 = vunpack.c.h.b16 %v254
      %v700 = vunpack.c.l.b16 %v255
      %v701 = vunpack.c.h.b16 %v255
      %v702 = vunpack.c.l.b16 %v256
      %v703 = vunpack.c.h.b16 %v256
      %v704 = vunpack.c.l.b16 %v257
      %v705 = vunpack.c.h.b16 %v257
      %v706 = vunpack.c.l.b16 %v258
      %v707 = vunpack.c.h.b16 %v258
      %v708 = vunpack.c.l.b16 %v259
      %v709 = vunpack.c.h.b16 %v259
      %v710 = vunpack.c.l.b16 %v260
      %v711 = vunpack.c.h.b16 %v260
      %v712 = vunpack.c.l.b16 %v261
      %v713 = vunpack.c.h.b16 %v261
      %v714 = vunpack.c.l.b16 %v262
      %v715 = vunpack.c.h.b16 %v262
      %v716 = vunpack.c.l.b16 %v263
      %v717 = vunpack.c.h.b16 %v263
      %v718 = vunpack.c.l.b16 %v264
      %v719 = vunpack.c.h.b16 %v264
      %v720 = vunpack.c.l.b16 %v265
      %v721 = vunpack.c.h.b16 %v265
      %v722 = vunpack.c.l.b16 %v266
      %v723 = vunpack.c.h.b16 %v266
      %v724 = vunpack.c.l.b16 %v267
      %v725 = vunpack.c.h.b16 %v267
      %v726 = vunpack.c.l.b16 %v268
      %v727 = vunpack.c.h.b16 %v268
      %v728 = vunpack.c.l.b16 %v269
      %v729 = vunpack.c.h.b16 %v269
      %v730 = vunpack.c.l.b16 %v270
      %v731 = vunpack.c.h.b16 %v270
      %v732 = vunpack.c.l.b16 %v271
      %v733 = vunpack.c.h.b16 %v271
      %v734 = vunpack.c.l.b16 %v272
      %v735 = vunpack.c.h.b16 %v272
      %v736 = vunpack.c.l.b16 %v273
      %v737 = vunpack.c.h.b16 %v273
      %v738 = vunpack.c.l.b16 %v274
      %v739 = vunpack.c.h.b16 %v274
      %v740 = vunpack.c.l.b16 %v275
      %v741 = vunpack.c.h.b16 %v275
      %v742 = vunpack.c.l.b16 %v276
      %v743 = vunpack.c.h.b16 %v276
      %v744 = vunpack.c.l.b16 %v277
      %v745 = vunpack.c.h.b16 %v277
      %v746 = vunpack.c.l.b16 %v278
      %v747 = vunpack.c.h.b16 %v278
      %v748 = vunpack.c.l.b16 %v279
      %v749 = vunpack.c.h.b16 %v279
      %v750 = vunpack.c.l.b16 %v280
      %v751 = vunpack.c.h.b16 %v280
      %v752 = vunpack.c.l.b16 %v281
      %v753 = vunpack.c.h.b16 %v281
      %v754 = vunpack.c.l.b16 %v282
      %v755 = vunpack.c.h.b16 %v282
      %v756 = vunpack.c.l.b16 %v283
      %v757 = vunpack.c.h.b16 %v283
      %v758 = vunpack.c.l.b16 %v284
      %v759 = vunpack.c.h.b16 %v284
      %v760 = vunpack.c.l.b16 %v285
      %v761 = vunpack.c.h.b16 %v285
      %v762 = vunpack.c.l.b16 %v286
      %v763 = vunpack.c.h.b16 %v286
      %v764 = vunpack.c.l.b16 %v287
      %v765 = vunpack.c.h.b16 %v287
      %v766 = vunpack.c.l.b16 %v288
      %v767 = vunpack.c.h.b16 %v288
      %v768 = vunpack.c.l.b16 %v289
      %v769 = vunpack.c.h.b16 %v289
      %v770 = vunpack.c.l.b16 %v290
      %v771 = vunpack.c.h.b16 %v290
      %v772 = vunpack.c.l.b16 %v291
      %v773 = vunpack.c.h.b16 %v291
      %v774 = vunpack.c.l.b16 %v292
      %v775 = vunpack.c.h.b16 %v292
      %v776 = vunpack.c.l.b16 %v293
      %v777 = vunpack.c.h.b16 %v293
      %v778 = vunpack.c.l.b16 %v294
      %v779 = vunpack.c.h.b16 %v294
      %v780 = vunpack.c.l.b16 %v295
      %v781 = vunpack.c.h.b16 %v295
      %v782 = vunpack.c.l.b16 %v296
      %v783 = vunpack.c.h.b16 %v296
      %v784 = vunpack.c.l.b16 %v297
      %v785 = vunpack.c.h.b16 %v297
      %v786 = vunpack.c.l.b16 %v298
      %v787 = vunpack.c.h.b16 %v298
      %v788 = vunpack.c.l.b16 %v299
      %v789 = vunpack.c.h.b16 %v299
      %v790 = vunpack.c.l.b16 %v300
      %v791 = vunpack.c.h.b16 %v300
      %v792 = vunpack.c.l.b16 %v301
      %v793 = vunpack.c.h.b16 %v301
      %v794 = vunpack.c.l.b16 %v302
      %v795 = vunpack.c.h.b16 %v302
      %v796 = vunpack.c.l.b16 %v303
      %v797 = vunpack.c.h.b16 %v303
      %v798 = vunpack.c.l.b16 %v304
      %v799 = vunpack.c.h.b16 %v304
      %v800 = vunpack.c.l.b16 %v305
      %v801 = vunpack.c.h.b16 %v305
      %v802 = vunpack.c.l.b16 %v306
      %v803 = vunpack.c.h.b16 %v306
      %v804 = vunpack.c.l.b16 %v307
      %v805 = vunpack.c.h.b16 %v307
      %v806 = vunpack.c.l.b16 %v308
      %v807 = vunpack.c.h.b16 %v308
      %v808 = vunpack.c.l.b16 %v309
      %v809 = vunpack.c.h.b16 %v309
      %v810 = vunpack.c.l.b16 %v310
      %v811 = vunpack.c.h.b16 %v310
      %v812 = vunpack.c.l.b16 %v311
      %v813 = vunpack.c.h.b16 %v311
      %v814 = vunpack.c.l.b16 %v312
      %v815 = vunpack.c.h.b16 %v312
      %v816 = vunpack.c.l.b16 %v313
      %v817 = vunpack.c.h.b16 %v313
      %v818 = vunpack.c.l.b16 %v314
      %v819 = vunpack.c.h.b16 %v314
      %v820 = vunpack.c.l.b16 %v315
      %v821 = vunpack.c.h.b16 %v315
      %v822 = vunpack.c.l.b16 %v316
      %v823 = vunpack.c.h.b16 %v316
      %v824 = vunpack.c.l.b16 %v317
      %v825 = vunpack.c.h.b16 %v317
      %v826 = vunpack.c.l.b16 %v318
      %v827 = vunpack.c.h.b16 %v318
      %v828 = vunpack.c.l.b16 %v319
      %v829 = vunpack.c.h.b16 %v319
      %v830 = vunpack.c.l.b16 %v320
      %v831 = vunpack.c.h.b16 %v320
      %v832 = vunpack.c.l.b16 %v321
      %v833 = vunpack.c.h.b16 %v321
      %v834 = vunpack.c.l.b16 %v322
      %v835 = vunpack.c.h.b16 %v322
      %v836 = vunpack.c.l.b16 %v323
      %v837 = vunpack.c.h.b16 %v323
      %v838 = vunpack.c.l.b16 %v324
      %v839 = vunpack.c.h.b16 %v324
      %v840 = vunpack.c.l.b16 %v325
      %v841 = vunpack.c.h.b16 %v325
      %v842 = vunpack.c.l.b16 %v326
      %v843 = vunpack.c.h.b16 %v326
      %v844 = vunpack.c.l.b16 %v327
      %v845 = vunpack.c.h.b16 %v327
      %v846 = vunpack.c.l.b16 %v328
      %v847 = vunpack.c.h.b16 %v328
      %v848 = vunpack.c.l.b16 %v329
      %v849 = vunpack.c.h.b16 %v329
      %v850 = vunpack.c.l.b16 %v330
      %v851 = vunpack.c.h.b16 %v330
      %v852 = vunpack.c.l.b16 %v331
      %v853 = vunpack.c.h.b16 %v331
      %v854 = vunpack.c.l.b16 %v332
      %v855 = vunpack.c.h.b16 %v332
      %v856 = vunpack.c.l.b16 %v333
      %v857 = vunpack.c.h.b16 %v333
      %v858 = vunpack.c.l.b16 %v334
      %v859 = vunpack.c.h.b16 %v334
      %v860 = vunpack.c.l.b16 %v335
      %v861 = vunpack.c.h.b16 %v335
      %v862 = vunpack.c.l.b16 %v336
      %v863 = vunpack.c.h.b16 %v336
      %v864 = vunpack.c.l.b16 %v337
      %v865 = vunpack.c.h.b16 %v337
      %v866 = vunpack.c.l.b16 %v338
      %v867 = vunpack.c.h.b16 %v338
      %v868 = vunpack.c.l.b16 %v339
      %v869 = vunpack.c.h.b16 %v339
      %v870 = vunpack.c.l.b16 %v340
      %v871 = vunpack.c.h.b16 %v340
      %v872 = vunpack.c.l.b16 %v341
      %v873 = vunpack.c.h.b16 %v341
      %v874 = vunpack.c.l.b16 %v342
      %v875 = vunpack.c.h.b16 %v342
      %v876 = vunpack.c.l.b16 %v343
      %v877 = vunpack.c.h.b16 %v343
      %v878 = vunpack.c.l.b16 %v344
      %v879 = vunpack.c.h.b16 %v344
      %v880 = vunpack.c.l.b16 %v345
      %v881 = vunpack.c.h.b16 %v345
      %v882 = vunpack.c.l.b16 %v346
      %v883 = vunpack.c.h.b16 %v346
      %v884 = vunpack.c.l.b16 %v347
      %v885 = vunpack.c.h.b16 %v347
      %v886 = vunpack.c.l.b16 %v348
      %v887 = vunpack.c.h.b16 %v348
      %v888 = vunpack.c.l.b16 %v349
      %v889 = vunpack.c.h.b16 %v349
      %v890 = vunpack.c.l.b16 %v350
      %v891 = vunpack.c.h.b16 %v350
      %v892 = vunpack.c.l.b16 %v351
      %v893 = vunpack.c.h.b16 %v351
      %v894 = vunpack.c.l.b16 %v352
      %v895 = vunpack.c.h.b16 %v352
      %v896 = vunpack.c.l.b16 %v353
      %v897 = vunpack.c.h.b16 %v353
      %v898 = vunpack.c.l.b16 %v354
      %v899 = vunpack.c.h.b16 %v354
      %v900 = vunpack.c.l.b16 %v355
      %v901 = vunpack.c.h.b16 %v355
      %v902 = vunpack.c.l.b16 %v356
      %v903 = vunpack.c.h.b16 %v356
      %v904 = vunpack.c.l.b16 %v357
      %v905 = vunpack.c.h.b16 %v357
      %v906 = vunpack.c.l.b16 %v358
      %v907 = vunpack.c.h.b16 %v358
      %v908 = vunpack.c.l.b16 %v359
      %v909 = vunpack.c.h.b16 %v359
      %v910 = vunpack.c.l.b16 %v360
      %v911 = vunpack.c.h.b16 %v360
      %v912 = vunpack.c.l.b16 %v361
      %v913 = vunpack.c.h.b16 %v361
      %v914 = vunpack.c.l.b16 %v362
      %v915 = vunpack.c.h.b16 %v362
      %v916 = vunpack.c.l.b16 %v363
      %v917 = vunpack.c.h.b16 %v363
      %v918 = vunpack.c.l.b16 %v364
      %v919 = vunpack.c.h.b16 %v364
      %v920 = vunpack.c.l.b16 %v365
      %v921 = vunpack.c.h.b16 %v365
      %v922 = vunpack.c.l.b16 %v366
      %v923 = vunpack.c.h.b16 %v366
      %v924 = vunpack.c.l.b16 %v367
      %v925 = vunpack.c.h.b16 %v367
      %v926 = vunpack.c.l.b16 %v368
      %v927 = vunpack.c.h.b16 %v368
      %v928 = vunpack.c.l.b16 %v369
      %v929 = vunpack.c.h.b16 %v369
      %v930 = vunpack.c.l.b16 %v370
      %v931 = vunpack.c.h.b16 %v370
      %v932 = vunpack.c.l.b16 %v371
      %v933 = vunpack.c.h.b16 %v371
      %v934 = vunpack.c.l.b16 %v372
      %v935 = vunpack.c.h.b16 %v372
      %v936 = vunpack.c.l.b16 %v373
      %v937 = vunpack.c.h.b16 %v373
      %v938 = vunpack.c.l.b16 %v374
      %v939 = vunpack.c.h.b16 %v374
      %v940 = vunpack.c.l.b16 %v375
      %v941 = vunpack.c.h.b16 %v375
      %v942 = vunpack.c.l.b16 %v376
      %v943 = vunpack.c.h.b16 %v376
      %v944 = vunpack.c.l.b16 %v377
      %v945 = vunpack.c.h.b16 %v377
      %v946 = vunpack.c.l.b16 %v378
      %v947 = vunpack.c.h.b16 %v378
      %v948 = vunpack.c.l.b16 %v379
      %v949 = vunpack.c.h.b16 %v379
      %v950 = vunpack.c.l.b16 %v380
      %v951 = vunpack.c.h.b16 %v380
      %v952 = vunpack.c.l.b16 %v381
      %v953 = vunpack.c.h.b16 %v381
      %v954 = vunpack.c.l.b16 %v382
      %v955 = vunpack.c.h.b16 %v382
      %v956 = vunpack.c.l.b16 %v383
      %v957 = vunpack.c.h.b16 %v383
      %v958 = vunpack.c.l.b16 %v384
      %v959 = vunpack.c.h.b16 %v384
      %v960 = vunpack.c.l.b16 %v385
      %v961 = vunpack.c.h.b16 %v385
      %v962 = vpack.c.b16 %v642, %v626
      %v963 = vpack.c.b16 %v643, %v627
      %v964 = vpack.c.b16 %v644, %v628
      %v965 = vpack.c.b16 %v645, %v629
      %v966 = vpack.c.b16 %v646, %v630
      %v967 = vpack.c.b16 %v647, %v631
      %v968 = vpack.c.b16 %v648, %v632
      %v969 = vpack.c.b16 %v649, %v633
      %v970 = vpack.c.b16 %v650, %v634
      %v971 = vpack.c.b16 %v651, %v635
      %v972 = vpack.c.b16 %v652, %v636
      %v973 = vpack.c.b16 %v653, %v637
      %v974 = vpack.c.b16 %v654, %v638
      %v975 = vpack.c.b16 %v655, %v639
      %v976 = vpack.c.b16 %v656, %v640
      %v977 = vpack.c.b16 %v657, %v641
      %v978 = vpack.c.b16 %v674, %v658
      %v979 = vpack.c.b16 %v675, %v659
      %v980 = vpack.c.b16 %v676, %v660
      %v981 = vpack.c.b16 %v677, %v661
      %v982 = vpack.c.b16 %v678, %v662
      %v983 = vpack.c.b16 %v679, %v663
      %v984 = vpack.c.b16 %v680, %v664
      %v985 = vpack.c.b16 %v681, %v665
      %v986 = vpack.c.b16 %v682, %v666
      %v987 = vpack.c.b16 %v683, %v667
      %v988 = vpack.c.b16 %v684, %v668
      %v989 = vpack.c.b16 %v685, %v669
      %v990 = vpack.c.b16 %v686, %v670
      %v991 = vpack.c.b16 %v687, %v671
      %v992 = vpack.c.b16 %v688, %v672
      %v993 = vpack.c.b16 %v689, %v673
      %v994 = vpack.c.b16 %v706, %v690
      %v995 = vpack.c.b16 %v707, %v691
      %v996 = vpack.c.b16 %v708, %v692
      %v997 = vpack.c.b16 %v709, %v693
      %v998 = vpack.c.b16 %v710, %v694
      %v999 = vpack.c.b16 %v711, %v695
      %v1000 = vpack.c.b16 %v712, %v696
      %v1001 = vpack.c.b16 %v713, %v697
      %v1002 = vpack.c.b16 %v714, %v698
      %v1003 = vpack.c.b16 %v715, %v699
      %v1004 = vpack.c.b16 %v716, %v700
      %v1005 = vpack.c.b16 %v717, %v701
      %v1006 = vpack.c.b16 %v718, %v702
      %v1007 = vpack.c.b16 %v719, %v703
      %v1008 = vpack.c.b16 %v720, %v704
      %v1009 = vpack.c.b16 %v721, %v705
      %v1010 = vpack.c.b16 %v738, %v722
      %v1011 = vpack.c.b16 %v739, %v723
      %v1012 = vpack.c.b16 %v740, %v724
      %v1013 = vpack.c.b16 %v741, %v725
      %v1014 = vpack.c.b16 %v742, %v726
      %v1015 = vpack.c.b16 %v743, %v727
      %v1016 = vpack.c.b16 %v744, %v728
      %v1017 = vpack.c.b16 %v745, %v729
      %v1018 = vpack.c.b16 %v746, %v730
      %v1019 = vpack.c.b16 %v747, %v731
      %v1020 = vpack.c.b16 %v748, %v732
      %v1021 = vpack.c.b16 %v749, %v733
      %v1022 = vpack.c.b16 %v750, %v734
      %v1023 = vpack.c.b16 %v751, %v735
      %v1024 = vpack.c.b16 %v752, %v736
      %v1025 = vpack.c.b16 %v753, %v737
      %v1026 = vpack.c.b16 %v770, %v754
      %v1027 = vpack.c.b16 %v771, %v755
      %v1028 = vpack.c.b16 %v772, %v756
      %v1029 = vpack.c.b16 %v773, %v757
      %v1030 = vpack.c.b16 %v774, %v758
      %v1031 = vpack.c.b16 %v775, %v759
      %v1032 = vpack.c.b16 %v776, %v760
      %v1033 = vpack.c.b16 %v777, %v761
      %v1034 = vpack.c.b16 %v778, %v762
      %v1035 = vpack.c.b16 %v779, %v763
      %v1036 = vpack.c.b16 %v780, %v764
      %v1037 = vpack.c.b16 %v781, %v765
      %v1038 = vpack.c.b16 %v782, %v766
      %v1039 = vpack.c.b16 %v783, %v767
      %v1040 = vpack.c.b16 %v784, %v768
      %v1041 = vpack.c.b16 %v785, %v769
      %v1042 = vpack.c.b16 %v802, %v786
      %v1043 = vpack.c.b16 %v803, %v787
      %v1044 = vpack.c.b16 %v804, %v788
      %v1045 = vpack.c.b16 %v805, %v789
      %v1046 = vpack.c.b16 %v806, %v790
      %v1047 = vpack.c.b16 %v807, %v791
      %v1048 = vpack.c.b16 %v808, %v792
      %v1049 = vpack.c.b16 %v809, %v793
      %v1050 = vpack.c.b16 %v810, %v794
      %v1051 = vpack.c.b16 %v811, %v795
      %v1052 = vpack.c.b16 %v812, %v796
      %v1053 = vpack.c.b16 %v813, %v797
      %v1054 = vpack.c.b16 %v814, %v798
      %v1055 = vpack.c.b16 %v815, %v799
      %v1056 = vpack.c.b16 %v816, %v800
      %v1057 = vpack.c.b16 %v817, %v801
      %v1058 = vpack.c.b16 %v834, %v818
      %v1059 = vpack.c.b16 %v835, %v819
      %v1060 = vpack.c.b16 %v836, %v820
      %v1061 = vpack.c.b16 %v837, %v821
      %v1062 = vpack.c.b16 %v838, %v822
      %v1063 = vpack.c.b16 %v839, %v823
      %v1064 = vpack.c.b16 %v840, %v824
      %v1065 = vpack.c.b16 %v841, %v825
      %v1066 = vpack.c.b16 %v842, %v826
      %v1067 = vpack.c.b16 %v843, %v827
      %v1068 = vpack.c.b16 %v844, %v828
      %v1069 = vpack.c.b16 %v845, %v829
      %v1070 = vpack.c.b16 %v846, %v830
      %v1071 = vpack.c.b16 %v847, %v831
      %v1072 = vpack.c.b16 %v848, %v832
      %v1073 = vpack.c.b16 %v849, %v833
      %v1074 = vpack.c.b16 %v866, %v850
      %v1075 = vpack.c.b16 %v867, %v851
      %v1076 = vpack.c.b16 %v868, %v852
      %v1077 = vpack.c.b16 %v869, %v853
      %v1078 = vpack.c.b16 %v870, %v854
      %v1079 = vpack.c.b16 %v871, %v855
      %v1080 = vpack.c.b16 %v872, %v856
      %v1081 = vpack.c.b16 %v873, %v857
      %v1082 = vpack.c.b16 %v874, %v858
      %v1083 = vpack.c.b16 %v875, %v859
      %v1084 = vpack.c.b16 %v876, %v860
      %v1085 = vpack.c.b16 %v877, %v861
      %v1086 = vpack.c.b16 %v878, %v862
      %v1087 = vpack.c.b16 %v879, %v863
      %v1088 = vpack.c.b16 %v880, %v864
      %v1089 = vpack.c.b16 %v881, %v865
      %v1090 = vpack.c.b16 %v898, %v882
      %v1091 = vpack.c.b16 %v899, %v883
      %v1092 = vpack.c.b16 %v900, %v884
      %v1093 = vpack.c.b16 %v901, %v885
      %v1094 = vpack.c.b16 %v902, %v886
      %v1095 = vpack.c.b16 %v903, %v887
      %v1096 = vpack.c.b16 %v904, %v888
      %v1097 = vpack.c.b16 %v905, %v889
      %v1098 = vpack.c.b16 %v906, %v890
      %v1099 = vpack.c.b16 %v907, %v891
      %v1100 = vpack.c.b16 %v908, %v892
      %v1101 = vpack.c.b16 %v909, %v893
      %v1102 = vpack.c.b16 %v910, %v894
      %v1103 = vpack.c.b16 %v911, %v895
      %v1104 = vpack.c.b16 %v912, %v896
      %v1105 = vpack.c.b16 %v913, %v897
      %v1106 = vpack.c.b16 %v930, %v914
      %v1107 = vpack.c.b16 %v931, %v915
      %v1108 = vpack.c.b16 %v932, %v916
      %v1109 = vpack.c.b16 %v933, %v917
      %v1110 = vpack.c.b16 %v934, %v918
      %v1111 = vpack.c.b16 %v935, %v919
      %v1112 = vpack.c.b16 %v936, %v920
      %v1113 = vpack.c.b16 %v937, %v921
      %v1114 = vpack.c.b16 %v938, %v922
      %v1115 = vpack.c.b16 %v939, %v923
      %v1116 = vpack.c.b16 %v940, %v924
      %v1117 = vpack.c.b16 %v941, %v925
      %v1118 = vpack.c.b16 %v942, %v926
      %v1119 = vpack.c.b16 %v943, %v927
      %v1120 = vpack.c.b16 %v944, %v928
      %v1121 = vpack.c.b16 %v945, %v929
      %v1122 = vpack.c.b16 %v946, %v946
      %v1123 = vpack.c.b16 %v947, %v947
      %v1124 = vpack.c.b16 %v948, %v948
      %v1125 = vpack.c.b16 %v949, %v949
      %v1126 = vpack.c.b16 %v950, %v950
      %v1127 = vpack.c.b16 %v951, %v951
      %v1128 = vpack.c.b16 %v952, %v952
      %v1129 = vpack.c.b16 %v953, %v953
      %v1130 = vpack.c.b16 %v954, %v954
      %v1131 = vpack.c.b16 %v955, %v955
      %v1132 = vpack.c.b16 %v956, %v956
      %v1133 = vpack.c.b16 %v957, %v957
      %v1134 = vpack.c.b16 %v958, %v958
      %v1135 = vpack.c.b16 %v959, %v959
      %v1136 = vpack.c.b16 %v960, %v960
      %v1137 = vpack.c.b16 %v961, %v961
      %vm1298 = vcmask 285696
      %v1300 = vsel %vm1298, %v435, 0
      %v1303 = vsel %vm1298, %v437, 0
      %v1306 = vsel %vm1298, %v439, 0
      %v1309 = vsel %vm1298, %v441, 0
      %v1312 = vsel %vm1298, %v443, 0
      %v1315 = vsel %vm1298, %v445, 0
      %v1318 = vsel %vm1298, %v447, 0
      %v1321 = vsel %vm1298, %v449, 0
      %vm1323 = vcmask 1040384
      %vm1324 = vcmask 1041408
      %v1325 = vsel %vm1323, 4294967295, 65535
      %v1326 = vsel %vm1324, %v1325, 0
      %v1328 = vand.u32 %v1122, %v1326
      %v1331 = vand.u32 %v1123, %v1326
      %v1334 = vand.u32 %v1124, %v1326
      %v1337 = vand.u32 %v1125, %v1326
      %v1340 = vand.u32 %v1126, %v1326
      %v1343 = vand.u32 %v1127, %v1326
      %v1346 = vand.u32 %v1128, %v1326
      %v1349 = vand.u32 %v1129, %v1326
      %v1352 = vand.u32 %v1130, %v1326
      %v1355 = vand.u32 %v1131, %v1326
      %v1358 = vand.u32 %v1132, %v1326
      %v1361 = vand.u32 %v1133, %v1326
      %v1364 = vand.u32 %v1134, %v1326
      %v1367 = vand.u32 %v1135, %v1326
      %v1370 = vand.u32 %v1136, %v1326
      %v1373 = vand.u32 %v1137, %v1326
      %1375 = vmatpush.bf16.msra.mxu0 %v1074
      %1376 = vmatpush.bf16.msra.mxu0 %v1058
      %1377 = vmatpush.bf16.msra.mxu0 %v1042
      %1378 = vmatpush.bf16.msra.mxu0 %v1026
      %1379 = vmatpush.bf16.msra.mxu0 %v1010
      %1380 = vmatpush.bf16.msra.mxu0 %v994
      %1381 = vmatpush.bf16.msra.mxu0 %v978
      %1382 = vmatpush.bf16.msra.mxu0 %v962
      %1383 = vmatmul.bf16.gmra.mxu0 %v434
      %v1384 = vpop.f32.mrf.mxu0
      %v1385 = vadd.f32 0.0, %v1384
      %v1386 = vpop.f32.mrf.mxu0
      %v1387 = vadd.f32 0.0, %v1386
      %1388 = vmatmul.bf16.gmra.mxu0 %v436
      %v1389 = vpop.f32.mrf.mxu0
      %v1390 = vadd.f32 0.0, %v1389
      %v1391 = vpop.f32.mrf.mxu0
      %v1392 = vadd.f32 0.0, %v1391
      %1393 = vmatmul.bf16.gmra.mxu0 %v438
      %v1394 = vpop.f32.mrf.mxu0
      %v1395 = vadd.f32 0.0, %v1394
      %v1396 = vpop.f32.mrf.mxu0
      %v1397 = vadd.f32 0.0, %v1396
      %1398 = vmatmul.bf16.gmra.mxu0 %v440
      %v1399 = vpop.f32.mrf.mxu0
      %v1400 = vadd.f32 0.0, %v1399
      %v1401 = vpop.f32.mrf.mxu0
      %v1402 = vadd.f32 0.0, %v1401
      %1403 = vmatmul.bf16.gmra.mxu0 %v442
      %v1404 = vpop.f32.mrf.mxu0
      %v1405 = vadd.f32 0.0, %v1404
      %v1406 = vpop.f32.mrf.mxu0
      %v1407 = vadd.f32 0.0, %v1406
      %1408 = vmatmul.bf16.gmra.mxu0 %v444
      %v1409 = vpop.f32.mrf.mxu0
      %v1410 = vadd.f32 0.0, %v1409
      %v1411 = vpop.f32.mrf.mxu0
      %v1412 = vadd.f32 0.0, %v1411
      %1413 = vmatmul.bf16.gmra.mxu0 %v446
      %v1414 = vpop.f32.mrf.mxu0
      %v1415 = vadd.f32 0.0, %v1414
      %v1416 = vpop.f32.mrf.mxu0
      %v1417 = vadd.f32 0.0, %v1416
      %1418 = vmatmul.bf16.gmra.mxu0 %v448
      %v1419 = vpop.f32.mrf.mxu0
      %v1420 = vadd.f32 0.0, %v1419
      %v1421 = vpop.f32.mrf.mxu0
      %v1422 = vadd.f32 0.0, %v1421
      %1423 = vdwg.mxu0
      %1424 = vmatpush.bf16.msra.mxu0 0
      %1425 = vmatpush.bf16.msra.mxu0 0
      %1426 = vmatpush.bf16.msra.mxu0 0
      %1427 = vmatpush.bf16.msra.mxu0 0
      %1428 = vmatpush.bf16.msra.mxu0 0
      %1429 = vmatpush.bf16.msra.mxu0 %v1328
      %1430 = vmatpush.bf16.msra.mxu0 %v1106
      %1431 = vmatpush.bf16.msra.mxu0 %v1090
      %1432 = vmatmul.bf16.gmra.mxu0 %v1300
      %v1433 = vpop.f32.mrf.mxu0
      %v1434 = vadd.f32 %v1385, %v1433
      %v1435 = vpop.f32.mrf.mxu0
      %v1436 = vadd.f32 %v1387, %v1435
      %1437 = vmatmul.bf16.gmra.mxu0 %v1303
      %v1438 = vpop.f32.mrf.mxu0
      %v1439 = vadd.f32 %v1390, %v1438
      %v1440 = vpop.f32.mrf.mxu0
      %v1441 = vadd.f32 %v1392, %v1440
      %1442 = vmatmul.bf16.gmra.mxu0 %v1306
      %v1443 = vpop.f32.mrf.mxu0
      %v1444 = vadd.f32 %v1395, %v1443
      %v1445 = vpop.f32.mrf.mxu0
      %v1446 = vadd.f32 %v1397, %v1445
      %1447 = vmatmul.bf16.gmra.mxu0 %v1309
      %v1448 = vpop.f32.mrf.mxu0
      %v1449 = vadd.f32 %v1400, %v1448
      %v1450 = vpop.f32.mrf.mxu0
      %v1451 = vadd.f32 %v1402, %v1450
      %1452 = vmatmul.bf16.gmra.mxu0 %v1312
      %v1453 = vpop.f32.mrf.mxu0
      %v1454 = vadd.f32 %v1405, %v1453
      %v1455 = vpop.f32.mrf.mxu0
      %v1456 = vadd.f32 %v1407, %v1455
      %1457 = vmatmul.bf16.gmra.mxu0 %v1315
      %v1458 = vpop.f32.mrf.mxu0
      %v1459 = vadd.f32 %v1410, %v1458
      %v1460 = vpop.f32.mrf.mxu0
      %v1461 = vadd.f32 %v1412, %v1460
      %1462 = vmatmul.bf16.gmra.mxu0 %v1318
      %v1463 = vpop.f32.mrf.mxu0
      %v1464 = vadd.f32 %v1415, %v1463
      %v1465 = vpop.f32.mrf.mxu0
      %v1466 = vadd.f32 %v1417, %v1465
      %1467 = vmatmul.bf16.gmra.mxu0 %v1321
      %v1468 = vpop.f32.mrf.mxu0
      %v1469 = vadd.f32 %v1420, %v1468
      %v1470 = vpop.f32.mrf.mxu0
      %v1471 = vadd.f32 %v1422, %v1470
      %1472 = vdwg.mxu0
      %1473 = vmatpush.bf16.msra.mxu0 %v1075
      %1474 = vmatpush.bf16.msra.mxu0 %v1059
      %1475 = vmatpush.bf16.msra.mxu0 %v1043
      %1476 = vmatpush.bf16.msra.mxu0 %v1027
      %1477 = vmatpush.bf16.msra.mxu0 %v1011
      %1478 = vmatpush.bf16.msra.mxu0 %v995
      %1479 = vmatpush.bf16.msra.mxu0 %v979
      %1480 = vmatpush.bf16.msra.mxu0 %v963
      %1481 = vmatmul.bf16.gmra.mxu0 %v434
      %v1482 = vpop.f32.mrf.mxu0
      %v1483 = vadd.f32 0.0, %v1482
      %v1484 = vpop.f32.mrf.mxu0
      %v1485 = vadd.f32 0.0, %v1484
      %1486 = vmatmul.bf16.gmra.mxu0 %v436
      %v1487 = vpop.f32.mrf.mxu0
      %v1488 = vadd.f32 0.0, %v1487
      %v1489 = vpop.f32.mrf.mxu0
      %v1490 = vadd.f32 0.0, %v1489
      %1491 = vmatmul.bf16.gmra.mxu0 %v438
      %v1492 = vpop.f32.mrf.mxu0
      %v1493 = vadd.f32 0.0, %v1492
      %v1494 = vpop.f32.mrf.mxu0
      %v1495 = vadd.f32 0.0, %v1494
      %1496 = vmatmul.bf16.gmra.mxu0 %v440
      %v1497 = vpop.f32.mrf.mxu0
      %v1498 = vadd.f32 0.0, %v1497
      %v1499 = vpop.f32.mrf.mxu0
      %v1500 = vadd.f32 0.0, %v1499
      %1501 = vmatmul.bf16.gmra.mxu0 %v442
      %v1502 = vpop.f32.mrf.mxu0
      %v1503 = vadd.f32 0.0, %v1502
      %v1504 = vpop.f32.mrf.mxu0
      %v1505 = vadd.f32 0.0, %v1504
      %1506 = vmatmul.bf16.gmra.mxu0 %v444
      %v1507 = vpop.f32.mrf.mxu0
      %v1508 = vadd.f32 0.0, %v1507
      %v1509 = vpop.f32.mrf.mxu0
      %v1510 = vadd.f32 0.0, %v1509
      %1511 = vmatmul.bf16.gmra.mxu0 %v446
      %v1512 = vpop.f32.mrf.mxu0
      %v1513 = vadd.f32 0.0, %v1512
      %v1514 = vpop.f32.mrf.mxu0
      %v1515 = vadd.f32 0.0, %v1514
      %1516 = vmatmul.bf16.gmra.mxu0 %v448
      %v1517 = vpop.f32.mrf.mxu0
      %v1518 = vadd.f32 0.0, %v1517
      %v1519 = vpop.f32.mrf.mxu0
      %v1520 = vadd.f32 0.0, %v1519
      %1521 = vdwg.mxu0
      %1522 = vmatpush.bf16.msra.mxu0 0
      %1523 = vmatpush.bf16.msra.mxu0 0
      %1524 = vmatpush.bf16.msra.mxu0 0
      %1525 = vmatpush.bf16.msra.mxu0 0
      %1526 = vmatpush.bf16.msra.mxu0 0
      %1527 = vmatpush.bf16.msra.mxu0 %v1331
      %1528 = vmatpush.bf16.msra.mxu0 %v1107
      %1529 = vmatpush.bf16.msra.mxu0 %v1091
      %1530 = vmatmul.bf16.gmra.mxu0 %v1300
      %v1531 = vpop.f32.mrf.mxu0
      %v1532 = vadd.f32 %v1483, %v1531
      %v1533 = vpop.f32.mrf.mxu0
      %v1534 = vadd.f32 %v1485, %v1533
      %1535 = vmatmul.bf16.gmra.mxu0 %v1303
      %v1536 = vpop.f32.mrf.mxu0
      %v1537 = vadd.f32 %v1488, %v1536
      %v1538 = vpop.f32.mrf.mxu0
      %v1539 = vadd.f32 %v1490, %v1538
      %1540 = vmatmul.bf16.gmra.mxu0 %v1306
      %v1541 = vpop.f32.mrf.mxu0
      %v1542 = vadd.f32 %v1493, %v1541
      %v1543 = vpop.f32.mrf.mxu0
      %v1544 = vadd.f32 %v1495, %v1543
      %1545 = vmatmul.bf16.gmra.mxu0 %v1309
      %v1546 = vpop.f32.mrf.mxu0
      %v1547 = vadd.f32 %v1498, %v1546
      %v1548 = vpop.f32.mrf.mxu0
      %v1549 = vadd.f32 %v1500, %v1548
      %1550 = vmatmul.bf16.gmra.mxu0 %v1312
      %v1551 = vpop.f32.mrf.mxu0
      %v1552 = vadd.f32 %v1503, %v1551
      %v1553 = vpop.f32.mrf.mxu0
      %v1554 = vadd.f32 %v1505, %v1553
      %1555 = vmatmul.bf16.gmra.mxu0 %v1315
      %v1556 = vpop.f32.mrf.mxu0
      %v1557 = vadd.f32 %v1508, %v1556
      %v1558 = vpop.f32.mrf.mxu0
      %v1559 = vadd.f32 %v1510, %v1558
      %1560 = vmatmul.bf16.gmra.mxu0 %v1318
      %v1561 = vpop.f32.mrf.mxu0
      %v1562 = vadd.f32 %v1513, %v1561
      %v1563 = vpop.f32.mrf.mxu0
      %v1564 = vadd.f32 %v1515, %v1563
      %1565 = vmatmul.bf16.gmra.mxu0 %v1321
      %v1566 = vpop.f32.mrf.mxu0
      %v1567 = vadd.f32 %v1518, %v1566
      %v1568 = vpop.f32.mrf.mxu0
      %v1569 = vadd.f32 %v1520, %v1568
      %1570 = vdwg.mxu0
      %1571 = vmatpush.bf16.msra.mxu0 %v1076
      %1572 = vmatpush.bf16.msra.mxu0 %v1060
      %1573 = vmatpush.bf16.msra.mxu0 %v1044
      %1574 = vmatpush.bf16.msra.mxu0 %v1028
      %1575 = vmatpush.bf16.msra.mxu0 %v1012
      %1576 = vmatpush.bf16.msra.mxu0 %v996
      %1577 = vmatpush.bf16.msra.mxu0 %v980
      %1578 = vmatpush.bf16.msra.mxu0 %v964
      %1579 = vmatmul.bf16.gmra.mxu0 %v434
      %v1580 = vpop.f32.mrf.mxu0
      %v1581 = vadd.f32 0.0, %v1580
      %v1582 = vpop.f32.mrf.mxu0
      %v1583 = vadd.f32 0.0, %v1582
      %1584 = vmatmul.bf16.gmra.mxu0 %v436
      %v1585 = vpop.f32.mrf.mxu0
      %v1586 = vadd.f32 0.0, %v1585
      %v1587 = vpop.f32.mrf.mxu0
      %v1588 = vadd.f32 0.0, %v1587
      %1589 = vmatmul.bf16.gmra.mxu0 %v438
      %v1590 = vpop.f32.mrf.mxu0
      %v1591 = vadd.f32 0.0, %v1590
      %v1592 = vpop.f32.mrf.mxu0
      %v1593 = vadd.f32 0.0, %v1592
      %1594 = vmatmul.bf16.gmra.mxu0 %v440
      %v1595 = vpop.f32.mrf.mxu0
      %v1596 = vadd.f32 0.0, %v1595
      %v1597 = vpop.f32.mrf.mxu0
      %v1598 = vadd.f32 0.0, %v1597
      %1599 = vmatmul.bf16.gmra.mxu0 %v442
      %v1600 = vpop.f32.mrf.mxu0
      %v1601 = vadd.f32 0.0, %v1600
      %v1602 = vpop.f32.mrf.mxu0
      %v1603 = vadd.f32 0.0, %v1602
      %1604 = vmatmul.bf16.gmra.mxu0 %v444
      %v1605 = vpop.f32.mrf.mxu0
      %v1606 = vadd.f32 0.0, %v1605
      %v1607 = vpop.f32.mrf.mxu0
      %v1608 = vadd.f32 0.0, %v1607
      %1609 = vmatmul.bf16.gmra.mxu0 %v446
      %v1610 = vpop.f32.mrf.mxu0
      %v1611 = vadd.f32 0.0, %v1610
      %v1612 = vpop.f32.mrf.mxu0
      %v1613 = vadd.f32 0.0, %v1612
      %1614 = vmatmul.bf16.gmra.mxu0 %v448
      %v1615 = vpop.f32.mrf.mxu0
      %v1616 = vadd.f32 0.0, %v1615
      %v1617 = vpop.f32.mrf.mxu0
      %v1618 = vadd.f32 0.0, %v1617
      %1619 = vdwg.mxu0
      %1620 = vmatpush.bf16.msra.mxu0 0
      %1621 = vmatpush.bf16.msra.mxu0 0
      %1622 = vmatpush.bf16.msra.mxu0 0
      %1623 = vmatpush.bf16.msra.mxu0 0
      %1624 = vmatpush.bf16.msra.mxu0 0
      %1625 = vmatpush.bf16.msra.mxu0 %v1334
      %1626 = vmatpush.bf16.msra.mxu0 %v1108
      %1627 = vmatpush.bf16.msra.mxu0 %v1092
      %1628 = vmatmul.bf16.gmra.mxu0 %v1300
      %v1629 = vpop.f32.mrf.mxu0
      %v1630 = vadd.f32 %v1581, %v1629
      %v1631 = vpop.f32.mrf.mxu0
      %v1632 = vadd.f32 %v1583, %v1631
      %1633 = vmatmul.bf16.gmra.mxu0 %v1303
      %v1634 = vpop.f32.mrf.mxu0
      %v1635 = vadd.f32 %v1586, %v1634
      %v1636 = vpop.f32.mrf.mxu0
      %v1637 = vadd.f32 %v1588, %v1636
      %1638 = vmatmul.bf16.gmra.mxu0 %v1306
      %v1639 = vpop.f32.mrf.mxu0
      %v1640 = vadd.f32 %v1591, %v1639
      %v1641 = vpop.f32.mrf.mxu0
      %v1642 = vadd.f32 %v1593, %v1641
      %1643 = vmatmul.bf16.gmra.mxu0 %v1309
      %v1644 = vpop.f32.mrf.mxu0
      %v1645 = vadd.f32 %v1596, %v1644
      %v1646 = vpop.f32.mrf.mxu0
      %v1647 = vadd.f32 %v1598, %v1646
      %1648 = vmatmul.bf16.gmra.mxu0 %v1312
      %v1649 = vpop.f32.mrf.mxu0
      %v1650 = vadd.f32 %v1601, %v1649
      %v1651 = vpop.f32.mrf.mxu0
      %v1652 = vadd.f32 %v1603, %v1651
      %1653 = vmatmul.bf16.gmra.mxu0 %v1315
      %v1654 = vpop.f32.mrf.mxu0
      %v1655 = vadd.f32 %v1606, %v1654
      %v1656 = vpop.f32.mrf.mxu0
      %v1657 = vadd.f32 %v1608, %v1656
      %1658 = vmatmul.bf16.gmra.mxu0 %v1318
      %v1659 = vpop.f32.mrf.mxu0
      %v1660 = vadd.f32 %v1611, %v1659
      %v1661 = vpop.f32.mrf.mxu0
      %v1662 = vadd.f32 %v1613, %v1661
      %1663 = vmatmul.bf16.gmra.mxu0 %v1321
      %v1664 = vpop.f32.mrf.mxu0
      %v1665 = vadd.f32 %v1616, %v1664
      %v1666 = vpop.f32.mrf.mxu0
      %v1667 = vadd.f32 %v1618, %v1666
      %1668 = vdwg.mxu0
      %1669 = vmatpush.bf16.msra.mxu0 %v1077
      %1670 = vmatpush.bf16.msra.mxu0 %v1061
      %1671 = vmatpush.bf16.msra.mxu0 %v1045
      %1672 = vmatpush.bf16.msra.mxu0 %v1029
      %1673 = vmatpush.bf16.msra.mxu0 %v1013
      %1674 = vmatpush.bf16.msra.mxu0 %v997
      %1675 = vmatpush.bf16.msra.mxu0 %v981
      %1676 = vmatpush.bf16.msra.mxu0 %v965
      %1677 = vmatmul.bf16.gmra.mxu0 %v434
      %v1678 = vpop.f32.mrf.mxu0
      %v1679 = vadd.f32 0.0, %v1678
      %v1680 = vpop.f32.mrf.mxu0
      %v1681 = vadd.f32 0.0, %v1680
      %1682 = vmatmul.bf16.gmra.mxu0 %v436
      %v1683 = vpop.f32.mrf.mxu0
      %v1684 = vadd.f32 0.0, %v1683
      %v1685 = vpop.f32.mrf.mxu0
      %v1686 = vadd.f32 0.0, %v1685
      %1687 = vmatmul.bf16.gmra.mxu0 %v438
      %v1688 = vpop.f32.mrf.mxu0
      %v1689 = vadd.f32 0.0, %v1688
      %v1690 = vpop.f32.mrf.mxu0
      %v1691 = vadd.f32 0.0, %v1690
      %1692 = vmatmul.bf16.gmra.mxu0 %v440
      %v1693 = vpop.f32.mrf.mxu0
      %v1694 = vadd.f32 0.0, %v1693
      %v1695 = vpop.f32.mrf.mxu0
      %v1696 = vadd.f32 0.0, %v1695
      %1697 = vmatmul.bf16.gmra.mxu0 %v442
      %v1698 = vpop.f32.mrf.mxu0
      %v1699 = vadd.f32 0.0, %v1698
      %v1700 = vpop.f32.mrf.mxu0
      %v1701 = vadd.f32 0.0, %v1700
      %1702 = vmatmul.bf16.gmra.mxu0 %v444
      %v1703 = vpop.f32.mrf.mxu0
      %v1704 = vadd.f32 0.0, %v1703
      %v1705 = vpop.f32.mrf.mxu0
      %v1706 = vadd.f32 0.0, %v1705
      %1707 = vmatmul.bf16.gmra.mxu0 %v446
      %v1708 = vpop.f32.mrf.mxu0
      %v1709 = vadd.f32 0.0, %v1708
      %v1710 = vpop.f32.mrf.mxu0
      %v1711 = vadd.f32 0.0, %v1710
      %1712 = vmatmul.bf16.gmra.mxu0 %v448
      %v1713 = vpop.f32.mrf.mxu0
      %v1714 = vadd.f32 0.0, %v1713
      %v1715 = vpop.f32.mrf.mxu0
      %v1716 = vadd.f32 0.0, %v1715
      %1717 = vdwg.mxu0
      %1718 = vmatpush.bf16.msra.mxu0 0
      %1719 = vmatpush.bf16.msra.mxu0 0
      %1720 = vmatpush.bf16.msra.mxu0 0
      %1721 = vmatpush.bf16.msra.mxu0 0
      %1722 = vmatpush.bf16.msra.mxu0 0
      %1723 = vmatpush.bf16.msra.mxu0 %v1337
      %1724 = vmatpush.bf16.msra.mxu0 %v1109
      %1725 = vmatpush.bf16.msra.mxu0 %v1093
      %1726 = vmatmul.bf16.gmra.mxu0 %v1300
      %v1727 = vpop.f32.mrf.mxu0
      %v1728 = vadd.f32 %v1679, %v1727
      %v1729 = vpop.f32.mrf.mxu0
      %v1730 = vadd.f32 %v1681, %v1729
      %1731 = vmatmul.bf16.gmra.mxu0 %v1303
      %v1732 = vpop.f32.mrf.mxu0
      %v1733 = vadd.f32 %v1684, %v1732
      %v1734 = vpop.f32.mrf.mxu0
      %v1735 = vadd.f32 %v1686, %v1734
      %1736 = vmatmul.bf16.gmra.mxu0 %v1306
      %v1737 = vpop.f32.mrf.mxu0
      %v1738 = vadd.f32 %v1689, %v1737
      %v1739 = vpop.f32.mrf.mxu0
      %v1740 = vadd.f32 %v1691, %v1739
      %1741 = vmatmul.bf16.gmra.mxu0 %v1309
      %v1742 = vpop.f32.mrf.mxu0
      %v1743 = vadd.f32 %v1694, %v1742
      %v1744 = vpop.f32.mrf.mxu0
      %v1745 = vadd.f32 %v1696, %v1744
      %1746 = vmatmul.bf16.gmra.mxu0 %v1312
      %v1747 = vpop.f32.mrf.mxu0
      %v1748 = vadd.f32 %v1699, %v1747
      %v1749 = vpop.f32.mrf.mxu0
      %v1750 = vadd.f32 %v1701, %v1749
      %1751 = vmatmul.bf16.gmra.mxu0 %v1315
      %v1752 = vpop.f32.mrf.mxu0
      %v1753 = vadd.f32 %v1704, %v1752
      %v1754 = vpop.f32.mrf.mxu0
      %v1755 = vadd.f32 %v1706, %v1754
      %1756 = vmatmul.bf16.gmra.mxu0 %v1318
      %v1757 = vpop.f32.mrf.mxu0
      %v1758 = vadd.f32 %v1709, %v1757
      %v1759 = vpop.f32.mrf.mxu0
      %v1760 = vadd.f32 %v1711, %v1759
      %1761 = vmatmul.bf16.gmra.mxu0 %v1321
      %v1762 = vpop.f32.mrf.mxu0
      %v1763 = vadd.f32 %v1714, %v1762
      %v1764 = vpop.f32.mrf.mxu0
      %v1765 = vadd.f32 %v1716, %v1764
      %1766 = vdwg.mxu0
      %1767 = vmatpush.bf16.msra.mxu0 %v1078
      %1768 = vmatpush.bf16.msra.mxu0 %v1062
      %1769 = vmatpush.bf16.msra.mxu0 %v1046
      %1770 = vmatpush.bf16.msra.mxu0 %v1030
      %1771 = vmatpush.bf16.msra.mxu0 %v1014
      %1772 = vmatpush.bf16.msra.mxu0 %v998
      %1773 = vmatpush.bf16.msra.mxu0 %v982
      %1774 = vmatpush.bf16.msra.mxu0 %v966
      %1775 = vmatmul.bf16.gmra.mxu0 %v434
      %v1776 = vpop.f32.mrf.mxu0
      %v1777 = vadd.f32 0.0, %v1776
      %v1778 = vpop.f32.mrf.mxu0
      %v1779 = vadd.f32 0.0, %v1778
      %1780 = vmatmul.bf16.gmra.mxu0 %v436
      %v1781 = vpop.f32.mrf.mxu0
      %v1782 = vadd.f32 0.0, %v1781
      %v1783 = vpop.f32.mrf.mxu0
      %v1784 = vadd.f32 0.0, %v1783
      %1785 = vmatmul.bf16.gmra.mxu0 %v438
      %v1786 = vpop.f32.mrf.mxu0
      %v1787 = vadd.f32 0.0, %v1786
      %v1788 = vpop.f32.mrf.mxu0
      %v1789 = vadd.f32 0.0, %v1788
      %1790 = vmatmul.bf16.gmra.mxu0 %v440
      %v1791 = vpop.f32.mrf.mxu0
      %v1792 = vadd.f32 0.0, %v1791
      %v1793 = vpop.f32.mrf.mxu0
      %v1794 = vadd.f32 0.0, %v1793
      %1795 = vmatmul.bf16.gmra.mxu0 %v442
      %v1796 = vpop.f32.mrf.mxu0
      %v1797 = vadd.f32 0.0, %v1796
      %v1798 = vpop.f32.mrf.mxu0
      %v1799 = vadd.f32 0.0, %v1798
      %1800 = vmatmul.bf16.gmra.mxu0 %v444
      %v1801 = vpop.f32.mrf.mxu0
      %v1802 = vadd.f32 0.0, %v1801
      %v1803 = vpop.f32.mrf.mxu0
      %v1804 = vadd.f32 0.0, %v1803
      %1805 = vmatmul.bf16.gmra.mxu0 %v446
      %v1806 = vpop.f32.mrf.mxu0
      %v1807 = vadd.f32 0.0, %v1806
      %v1808 = vpop.f32.mrf.mxu0
      %v1809 = vadd.f32 0.0, %v1808
      %1810 = vmatmul.bf16.gmra.mxu0 %v448
      %v1811 = vpop.f32.mrf.mxu0
      %v1812 = vadd.f32 0.0, %v1811
      %v1813 = vpop.f32.mrf.mxu0
      %v1814 = vadd.f32 0.0, %v1813
      %1815 = vdwg.mxu0
      %1816 = vmatpush.bf16.msra.mxu0 0
      %1817 = vmatpush.bf16.msra.mxu0 0
      %1818 = vmatpush.bf16.msra.mxu0 0
      %1819 = vmatpush.bf16.msra.mxu0 0
      %1820 = vmatpush.bf16.msra.mxu0 0
      %1821 = vmatpush.bf16.msra.mxu0 %v1340
      %1822 = vmatpush.bf16.msra.mxu0 %v1110
      %1823 = vmatpush.bf16.msra.mxu0 %v1094
      %1824 = vmatmul.bf16.gmra.mxu0 %v1300
      %v1825 = vpop.f32.mrf.mxu0
      %v1826 = vadd.f32 %v1777, %v1825
      %v1827 = vpop.f32.mrf.mxu0
      %v1828 = vadd.f32 %v1779, %v1827
      %1829 = vmatmul.bf16.gmra.mxu0 %v1303
      %v1830 = vpop.f32.mrf.mxu0
      %v1831 = vadd.f32 %v1782, %v1830
      %v1832 = vpop.f32.mrf.mxu0
      %v1833 = vadd.f32 %v1784, %v1832
      %1834 = vmatmul.bf16.gmra.mxu0 %v1306
      %v1835 = vpop.f32.mrf.mxu0
      %v1836 = vadd.f32 %v1787, %v1835
      %v1837 = vpop.f32.mrf.mxu0
      %v1838 = vadd.f32 %v1789, %v1837
      %1839 = vmatmul.bf16.gmra.mxu0 %v1309
      %v1840 = vpop.f32.mrf.mxu0
      %v1841 = vadd.f32 %v1792, %v1840
      %v1842 = vpop.f32.mrf.mxu0
      %v1843 = vadd.f32 %v1794, %v1842
      %1844 = vmatmul.bf16.gmra.mxu0 %v1312
      %v1845 = vpop.f32.mrf.mxu0
      %v1846 = vadd.f32 %v1797, %v1845
      %v1847 = vpop.f32.mrf.mxu0
      %v1848 = vadd.f32 %v1799, %v1847
      %1849 = vmatmul.bf16.gmra.mxu0 %v1315
      %v1850 = vpop.f32.mrf.mxu0
      %v1851 = vadd.f32 %v1802, %v1850
      %v1852 = vpop.f32.mrf.mxu0
      %v1853 = vadd.f32 %v1804, %v1852
      %1854 = vmatmul.bf16.gmra.mxu0 %v1318
      %v1855 = vpop.f32.mrf.mxu0
      %v1856 = vadd.f32 %v1807, %v1855
      %v1857 = vpop.f32.mrf.mxu0
      %v1858 = vadd.f32 %v1809, %v1857
      %1859 = vmatmul.bf16.gmra.mxu0 %v1321
      %v1860 = vpop.f32.mrf.mxu0
      %v1861 = vadd.f32 %v1812, %v1860
      %v1862 = vpop.f32.mrf.mxu0
      %v1863 = vadd.f32 %v1814, %v1862
      %1864 = vdwg.mxu0
      %1865 = vmatpush.bf16.msra.mxu0 %v1079
      %1866 = vmatpush.bf16.msra.mxu0 %v1063
      %1867 = vmatpush.bf16.msra.mxu0 %v1047
      %1868 = vmatpush.bf16.msra.mxu0 %v1031
      %1869 = vmatpush.bf16.msra.mxu0 %v1015
      %1870 = vmatpush.bf16.msra.mxu0 %v999
      %1871 = vmatpush.bf16.msra.mxu0 %v983
      %1872 = vmatpush.bf16.msra.mxu0 %v967
      %1873 = vmatmul.bf16.gmra.mxu0 %v434
      %v1874 = vpop.f32.mrf.mxu0
      %v1875 = vadd.f32 0.0, %v1874
      %v1876 = vpop.f32.mrf.mxu0
      %v1877 = vadd.f32 0.0, %v1876
      %1878 = vmatmul.bf16.gmra.mxu0 %v436
      %v1879 = vpop.f32.mrf.mxu0
      %v1880 = vadd.f32 0.0, %v1879
      %v1881 = vpop.f32.mrf.mxu0
      %v1882 = vadd.f32 0.0, %v1881
      %1883 = vmatmul.bf16.gmra.mxu0 %v438
      %v1884 = vpop.f32.mrf.mxu0
      %v1885 = vadd.f32 0.0, %v1884
      %v1886 = vpop.f32.mrf.mxu0
      %v1887 = vadd.f32 0.0, %v1886
      %1888 = vmatmul.bf16.gmra.mxu0 %v440
      %v1889 = vpop.f32.mrf.mxu0
      %v1890 = vadd.f32 0.0, %v1889
      %v1891 = vpop.f32.mrf.mxu0
      %v1892 = vadd.f32 0.0, %v1891
      %1893 = vmatmul.bf16.gmra.mxu0 %v442
      %v1894 = vpop.f32.mrf.mxu0
      %v1895 = vadd.f32 0.0, %v1894
      %v1896 = vpop.f32.mrf.mxu0
      %v1897 = vadd.f32 0.0, %v1896
      %1898 = vmatmul.bf16.gmra.mxu0 %v444
      %v1899 = vpop.f32.mrf.mxu0
      %v1900 = vadd.f32 0.0, %v1899
      %v1901 = vpop.f32.mrf.mxu0
      %v1902 = vadd.f32 0.0, %v1901
      %1903 = vmatmul.bf16.gmra.mxu0 %v446
      %v1904 = vpop.f32.mrf.mxu0
      %v1905 = vadd.f32 0.0, %v1904
      %v1906 = vpop.f32.mrf.mxu0
      %v1907 = vadd.f32 0.0, %v1906
      %1908 = vmatmul.bf16.gmra.mxu0 %v448
      %v1909 = vpop.f32.mrf.mxu0
      %v1910 = vadd.f32 0.0, %v1909
      %v1911 = vpop.f32.mrf.mxu0
      %v1912 = vadd.f32 0.0, %v1911
      %1913 = vdwg.mxu0
      %1914 = vmatpush.bf16.msra.mxu0 0
      %1915 = vmatpush.bf16.msra.mxu0 0
      %1916 = vmatpush.bf16.msra.mxu0 0
      %1917 = vmatpush.bf16.msra.mxu0 0
      %1918 = vmatpush.bf16.msra.mxu0 0
      %1919 = vmatpush.bf16.msra.mxu0 %v1343
      %1920 = vmatpush.bf16.msra.mxu0 %v1111
      %1921 = vmatpush.bf16.msra.mxu0 %v1095
      %1922 = vmatmul.bf16.gmra.mxu0 %v1300
      %v1923 = vpop.f32.mrf.mxu0
      %v1924 = vadd.f32 %v1875, %v1923
      %v1925 = vpop.f32.mrf.mxu0
      %v1926 = vadd.f32 %v1877, %v1925
      %1927 = vmatmul.bf16.gmra.mxu0 %v1303
      %v1928 = vpop.f32.mrf.mxu0
      %v1929 = vadd.f32 %v1880, %v1928
      %v1930 = vpop.f32.mrf.mxu0
      %v1931 = vadd.f32 %v1882, %v1930
      %1932 = vmatmul.bf16.gmra.mxu0 %v1306
      %v1933 = vpop.f32.mrf.mxu0
      %v1934 = vadd.f32 %v1885, %v1933
      %v1935 = vpop.f32.mrf.mxu0
      %v1936 = vadd.f32 %v1887, %v1935
      %1937 = vmatmul.bf16.gmra.mxu0 %v1309
      %v1938 = vpop.f32.mrf.mxu0
      %v1939 = vadd.f32 %v1890, %v1938
      %v1940 = vpop.f32.mrf.mxu0
      %v1941 = vadd.f32 %v1892, %v1940
      %1942 = vmatmul.bf16.gmra.mxu0 %v1312
      %v1943 = vpop.f32.mrf.mxu0
      %v1944 = vadd.f32 %v1895, %v1943
      %v1945 = vpop.f32.mrf.mxu0
      %v1946 = vadd.f32 %v1897, %v1945
      %1947 = vmatmul.bf16.gmra.mxu0 %v1315
      %v1948 = vpop.f32.mrf.mxu0
      %v1949 = vadd.f32 %v1900, %v1948
      %v1950 = vpop.f32.mrf.mxu0
      %v1951 = vadd.f32 %v1902, %v1950
      %1952 = vmatmul.bf16.gmra.mxu0 %v1318
      %v1953 = vpop.f32.mrf.mxu0
      %v1954 = vadd.f32 %v1905, %v1953
      %v1955 = vpop.f32.mrf.mxu0
      %v1956 = vadd.f32 %v1907, %v1955
      %1957 = vmatmul.bf16.gmra.mxu0 %v1321
      %v1958 = vpop.f32.mrf.mxu0
      %v1959 = vadd.f32 %v1910, %v1958
      %v1960 = vpop.f32.mrf.mxu0
      %v1961 = vadd.f32 %v1912, %v1960
      %1962 = vdwg.mxu0
      %1963 = vmatpush.bf16.msra.mxu0 %v1080
      %1964 = vmatpush.bf16.msra.mxu0 %v1064
      %1965 = vmatpush.bf16.msra.mxu0 %v1048
      %1966 = vmatpush.bf16.msra.mxu0 %v1032
      %1967 = vmatpush.bf16.msra.mxu0 %v1016
      %1968 = vmatpush.bf16.msra.mxu0 %v1000
      %1969 = vmatpush.bf16.msra.mxu0 %v984
      %1970 = vmatpush.bf16.msra.mxu0 %v968
      %1971 = vmatmul.bf16.gmra.mxu0 %v434
      %v1972 = vpop.f32.mrf.mxu0
      %v1973 = vadd.f32 0.0, %v1972
      %v1974 = vpop.f32.mrf.mxu0
      %v1975 = vadd.f32 0.0, %v1974
      %1976 = vmatmul.bf16.gmra.mxu0 %v436
      %v1977 = vpop.f32.mrf.mxu0
      %v1978 = vadd.f32 0.0, %v1977
      %v1979 = vpop.f32.mrf.mxu0
      %v1980 = vadd.f32 0.0, %v1979
      %1981 = vmatmul.bf16.gmra.mxu0 %v438
      %v1982 = vpop.f32.mrf.mxu0
      %v1983 = vadd.f32 0.0, %v1982
      %v1984 = vpop.f32.mrf.mxu0
      %v1985 = vadd.f32 0.0, %v1984
      %1986 = vmatmul.bf16.gmra.mxu0 %v440
      %v1987 = vpop.f32.mrf.mxu0
      %v1988 = vadd.f32 0.0, %v1987
      %v1989 = vpop.f32.mrf.mxu0
      %v1990 = vadd.f32 0.0, %v1989
      %1991 = vmatmul.bf16.gmra.mxu0 %v442
      %v1992 = vpop.f32.mrf.mxu0
      %v1993 = vadd.f32 0.0, %v1992
      %v1994 = vpop.f32.mrf.mxu0
      %v1995 = vadd.f32 0.0, %v1994
      %1996 = vmatmul.bf16.gmra.mxu0 %v444
      %v1997 = vpop.f32.mrf.mxu0
      %v1998 = vadd.f32 0.0, %v1997
      %v1999 = vpop.f32.mrf.mxu0
      %v2000 = vadd.f32 0.0, %v1999
      %2001 = vmatmul.bf16.gmra.mxu0 %v446
      %v2002 = vpop.f32.mrf.mxu0
      %v2003 = vadd.f32 0.0, %v2002
      %v2004 = vpop.f32.mrf.mxu0
      %v2005 = vadd.f32 0.0, %v2004
      %2006 = vmatmul.bf16.gmra.mxu0 %v448
      %v2007 = vpop.f32.mrf.mxu0
      %v2008 = vadd.f32 0.0, %v2007
      %v2009 = vpop.f32.mrf.mxu0
      %v2010 = vadd.f32 0.0, %v2009
      %2011 = vdwg.mxu0
      %2012 = vmatpush.bf16.msra.mxu0 0
      %2013 = vmatpush.bf16.msra.mxu0 0
      %2014 = vmatpush.bf16.msra.mxu0 0
      %2015 = vmatpush.bf16.msra.mxu0 0
      %2016 = vmatpush.bf16.msra.mxu0 0
      %2017 = vmatpush.bf16.msra.mxu0 %v1346
      %2018 = vmatpush.bf16.msra.mxu0 %v1112
      %2019 = vmatpush.bf16.msra.mxu0 %v1096
      %2020 = vmatmul.bf16.gmra.mxu0 %v1300
      %v2021 = vpop.f32.mrf.mxu0
      %v2022 = vadd.f32 %v1973, %v2021
      %v2023 = vpop.f32.mrf.mxu0
      %v2024 = vadd.f32 %v1975, %v2023
      %2025 = vmatmul.bf16.gmra.mxu0 %v1303
      %v2026 = vpop.f32.mrf.mxu0
      %v2027 = vadd.f32 %v1978, %v2026
      %v2028 = vpop.f32.mrf.mxu0
      %v2029 = vadd.f32 %v1980, %v2028
      %2030 = vmatmul.bf16.gmra.mxu0 %v1306
      %v2031 = vpop.f32.mrf.mxu0
      %v2032 = vadd.f32 %v1983, %v2031
      %v2033 = vpop.f32.mrf.mxu0
      %v2034 = vadd.f32 %v1985, %v2033
      %2035 = vmatmul.bf16.gmra.mxu0 %v1309
      %v2036 = vpop.f32.mrf.mxu0
      %v2037 = vadd.f32 %v1988, %v2036
      %v2038 = vpop.f32.mrf.mxu0
      %v2039 = vadd.f32 %v1990, %v2038
      %2040 = vmatmul.bf16.gmra.mxu0 %v1312
      %v2041 = vpop.f32.mrf.mxu0
      %v2042 = vadd.f32 %v1993, %v2041
      %v2043 = vpop.f32.mrf.mxu0
      %v2044 = vadd.f32 %v1995, %v2043
      %2045 = vmatmul.bf16.gmra.mxu0 %v1315
      %v2046 = vpop.f32.mrf.mxu0
      %v2047 = vadd.f32 %v1998, %v2046
      %v2048 = vpop.f32.mrf.mxu0
      %v2049 = vadd.f32 %v2000, %v2048
      %2050 = vmatmul.bf16.gmra.mxu0 %v1318
      %v2051 = vpop.f32.mrf.mxu0
      %v2052 = vadd.f32 %v2003, %v2051
      %v2053 = vpop.f32.mrf.mxu0
      %v2054 = vadd.f32 %v2005, %v2053
      %2055 = vmatmul.bf16.gmra.mxu0 %v1321
      %v2056 = vpop.f32.mrf.mxu0
      %v2057 = vadd.f32 %v2008, %v2056
      %v2058 = vpop.f32.mrf.mxu0
      %v2059 = vadd.f32 %v2010, %v2058
      %2060 = vdwg.mxu0
      %2061 = vmatpush.bf16.msra.mxu0 %v1081
      %2062 = vmatpush.bf16.msra.mxu0 %v1065
      %2063 = vmatpush.bf16.msra.mxu0 %v1049
      %2064 = vmatpush.bf16.msra.mxu0 %v1033
      %2065 = vmatpush.bf16.msra.mxu0 %v1017
      %2066 = vmatpush.bf16.msra.mxu0 %v1001
      %2067 = vmatpush.bf16.msra.mxu0 %v985
      %2068 = vmatpush.bf16.msra.mxu0 %v969
      %2069 = vmatmul.bf16.gmra.mxu0 %v434
      %v2070 = vpop.f32.mrf.mxu0
      %v2071 = vadd.f32 0.0, %v2070
      %v2072 = vpop.f32.mrf.mxu0
      %v2073 = vadd.f32 0.0, %v2072
      %2074 = vmatmul.bf16.gmra.mxu0 %v436
      %v2075 = vpop.f32.mrf.mxu0
      %v2076 = vadd.f32 0.0, %v2075
      %v2077 = vpop.f32.mrf.mxu0
      %v2078 = vadd.f32 0.0, %v2077
      %2079 = vmatmul.bf16.gmra.mxu0 %v438
      %v2080 = vpop.f32.mrf.mxu0
      %v2081 = vadd.f32 0.0, %v2080
      %v2082 = vpop.f32.mrf.mxu0
      %v2083 = vadd.f32 0.0, %v2082
      %2084 = vmatmul.bf16.gmra.mxu0 %v440
      %v2085 = vpop.f32.mrf.mxu0
      %v2086 = vadd.f32 0.0, %v2085
      %v2087 = vpop.f32.mrf.mxu0
      %v2088 = vadd.f32 0.0, %v2087
      %2089 = vmatmul.bf16.gmra.mxu0 %v442
      %v2090 = vpop.f32.mrf.mxu0
      %v2091 = vadd.f32 0.0, %v2090
      %v2092 = vpop.f32.mrf.mxu0
      %v2093 = vadd.f32 0.0, %v2092
      %2094 = vmatmul.bf16.gmra.mxu0 %v444
      %v2095 = vpop.f32.mrf.mxu0
      %v2096 = vadd.f32 0.0, %v2095
      %v2097 = vpop.f32.mrf.mxu0
      %v2098 = vadd.f32 0.0, %v2097
      %2099 = vmatmul.bf16.gmra.mxu0 %v446
      %v2100 = vpop.f32.mrf.mxu0
      %v2101 = vadd.f32 0.0, %v2100
      %v2102 = vpop.f32.mrf.mxu0
      %v2103 = vadd.f32 0.0, %v2102
      %2104 = vmatmul.bf16.gmra.mxu0 %v448
      %v2105 = vpop.f32.mrf.mxu0
      %v2106 = vadd.f32 0.0, %v2105
      %v2107 = vpop.f32.mrf.mxu0
      %v2108 = vadd.f32 0.0, %v2107
      %2109 = vdwg.mxu0
      %2110 = vmatpush.bf16.msra.mxu0 0
      %2111 = vmatpush.bf16.msra.mxu0 0
      %2112 = vmatpush.bf16.msra.mxu0 0
      %2113 = vmatpush.bf16.msra.mxu0 0
      %2114 = vmatpush.bf16.msra.mxu0 0
      %2115 = vmatpush.bf16.msra.mxu0 %v1349
      %2116 = vmatpush.bf16.msra.mxu0 %v1113
      %2117 = vmatpush.bf16.msra.mxu0 %v1097
      %2118 = vmatmul.bf16.gmra.mxu0 %v1300
      %v2119 = vpop.f32.mrf.mxu0
      %v2120 = vadd.f32 %v2071, %v2119
      %v2121 = vpop.f32.mrf.mxu0
      %v2122 = vadd.f32 %v2073, %v2121
      %2123 = vmatmul.bf16.gmra.mxu0 %v1303
      %v2124 = vpop.f32.mrf.mxu0
      %v2125 = vadd.f32 %v2076, %v2124
      %v2126 = vpop.f32.mrf.mxu0
      %v2127 = vadd.f32 %v2078, %v2126
      %2128 = vmatmul.bf16.gmra.mxu0 %v1306
      %v2129 = vpop.f32.mrf.mxu0
      %v2130 = vadd.f32 %v2081, %v2129
      %v2131 = vpop.f32.mrf.mxu0
      %v2132 = vadd.f32 %v2083, %v2131
      %2133 = vmatmul.bf16.gmra.mxu0 %v1309
      %v2134 = vpop.f32.mrf.mxu0
      %v2135 = vadd.f32 %v2086, %v2134
      %v2136 = vpop.f32.mrf.mxu0
      %v2137 = vadd.f32 %v2088, %v2136
      %2138 = vmatmul.bf16.gmra.mxu0 %v1312
      %v2139 = vpop.f32.mrf.mxu0
      %v2140 = vadd.f32 %v2091, %v2139
      %v2141 = vpop.f32.mrf.mxu0
      %v2142 = vadd.f32 %v2093, %v2141
      %2143 = vmatmul.bf16.gmra.mxu0 %v1315
      %v2144 = vpop.f32.mrf.mxu0
      %v2145 = vadd.f32 %v2096, %v2144
      %v2146 = vpop.f32.mrf.mxu0
      %v2147 = vadd.f32 %v2098, %v2146
      %2148 = vmatmul.bf16.gmra.mxu0 %v1318
      %v2149 = vpop.f32.mrf.mxu0
      %v2150 = vadd.f32 %v2101, %v2149
      %v2151 = vpop.f32.mrf.mxu0
      %v2152 = vadd.f32 %v2103, %v2151
      %2153 = vmatmul.bf16.gmra.mxu0 %v1321
      %v2154 = vpop.f32.mrf.mxu0
      %v2155 = vadd.f32 %v2106, %v2154
      %v2156 = vpop.f32.mrf.mxu0
      %v2157 = vadd.f32 %v2108, %v2156
      %2158 = vdwg.mxu0
      %2159 = vmatpush.bf16.msra.mxu0 %v1082
      %2160 = vmatpush.bf16.msra.mxu0 %v1066
      %2161 = vmatpush.bf16.msra.mxu0 %v1050
      %2162 = vmatpush.bf16.msra.mxu0 %v1034
      %2163 = vmatpush.bf16.msra.mxu0 %v1018
      %2164 = vmatpush.bf16.msra.mxu0 %v1002
      %2165 = vmatpush.bf16.msra.mxu0 %v986
      %2166 = vmatpush.bf16.msra.mxu0 %v970
      %2167 = vmatmul.bf16.gmra.mxu0 %v434
      %v2168 = vpop.f32.mrf.mxu0
      %v2169 = vadd.f32 0.0, %v2168
      %v2170 = vpop.f32.mrf.mxu0
      %v2171 = vadd.f32 0.0, %v2170
      %2172 = vmatmul.bf16.gmra.mxu0 %v436
      %v2173 = vpop.f32.mrf.mxu0
      %v2174 = vadd.f32 0.0, %v2173
      %v2175 = vpop.f32.mrf.mxu0
      %v2176 = vadd.f32 0.0, %v2175
      %2177 = vmatmul.bf16.gmra.mxu0 %v438
      %v2178 = vpop.f32.mrf.mxu0
      %v2179 = vadd.f32 0.0, %v2178
      %v2180 = vpop.f32.mrf.mxu0
      %v2181 = vadd.f32 0.0, %v2180
      %2182 = vmatmul.bf16.gmra.mxu0 %v440
      %v2183 = vpop.f32.mrf.mxu0
      %v2184 = vadd.f32 0.0, %v2183
      %v2185 = vpop.f32.mrf.mxu0
      %v2186 = vadd.f32 0.0, %v2185
      %2187 = vmatmul.bf16.gmra.mxu0 %v442
      %v2188 = vpop.f32.mrf.mxu0
      %v2189 = vadd.f32 0.0, %v2188
      %v2190 = vpop.f32.mrf.mxu0
      %v2191 = vadd.f32 0.0, %v2190
      %2192 = vmatmul.bf16.gmra.mxu0 %v444
      %v2193 = vpop.f32.mrf.mxu0
      %v2194 = vadd.f32 0.0, %v2193
      %v2195 = vpop.f32.mrf.mxu0
      %v2196 = vadd.f32 0.0, %v2195
      %2197 = vmatmul.bf16.gmra.mxu0 %v446
      %v2198 = vpop.f32.mrf.mxu0
      %v2199 = vadd.f32 0.0, %v2198
      %v2200 = vpop.f32.mrf.mxu0
      %v2201 = vadd.f32 0.0, %v2200
      %2202 = vmatmul.bf16.gmra.mxu0 %v448
      %v2203 = vpop.f32.mrf.mxu0
      %v2204 = vadd.f32 0.0, %v2203
      %v2205 = vpop.f32.mrf.mxu0
      %v2206 = vadd.f32 0.0, %v2205
      %2207 = vdwg.mxu0
      %2208 = vmatpush.bf16.msra.mxu0 0
      %2209 = vmatpush.bf16.msra.mxu0 0
      %2210 = vmatpush.bf16.msra.mxu0 0
      %2211 = vmatpush.bf16.msra.mxu0 0
      %2212 = vmatpush.bf16.msra.mxu0 0
      %2213 = vmatpush.bf16.msra.mxu0 %v1352
      %2214 = vmatpush.bf16.msra.mxu0 %v1114
      %2215 = vmatpush.bf16.msra.mxu0 %v1098
      %2216 = vmatmul.bf16.gmra.mxu0 %v1300
      %v2217 = vpop.f32.mrf.mxu0
      %v2218 = vadd.f32 %v2169, %v2217
      %v2219 = vpop.f32.mrf.mxu0
      %v2220 = vadd.f32 %v2171, %v2219
      %2221 = vmatmul.bf16.gmra.mxu0 %v1303
      %v2222 = vpop.f32.mrf.mxu0
      %v2223 = vadd.f32 %v2174, %v2222
      %v2224 = vpop.f32.mrf.mxu0
      %v2225 = vadd.f32 %v2176, %v2224
      %2226 = vmatmul.bf16.gmra.mxu0 %v1306
      %v2227 = vpop.f32.mrf.mxu0
      %v2228 = vadd.f32 %v2179, %v2227
      %v2229 = vpop.f32.mrf.mxu0
      %v2230 = vadd.f32 %v2181, %v2229
      %2231 = vmatmul.bf16.gmra.mxu0 %v1309
      %v2232 = vpop.f32.mrf.mxu0
      %v2233 = vadd.f32 %v2184, %v2232
      %v2234 = vpop.f32.mrf.mxu0
      %v2235 = vadd.f32 %v2186, %v2234
      %2236 = vmatmul.bf16.gmra.mxu0 %v1312
      %v2237 = vpop.f32.mrf.mxu0
      %v2238 = vadd.f32 %v2189, %v2237
      %v2239 = vpop.f32.mrf.mxu0
      %v2240 = vadd.f32 %v2191, %v2239
      %2241 = vmatmul.bf16.gmra.mxu0 %v1315
      %v2242 = vpop.f32.mrf.mxu0
      %v2243 = vadd.f32 %v2194, %v2242
      %v2244 = vpop.f32.mrf.mxu0
      %v2245 = vadd.f32 %v2196, %v2244
      %2246 = vmatmul.bf16.gmra.mxu0 %v1318
      %v2247 = vpop.f32.mrf.mxu0
      %v2248 = vadd.f32 %v2199, %v2247
      %v2249 = vpop.f32.mrf.mxu0
      %v2250 = vadd.f32 %v2201, %v2249
      %2251 = vmatmul.bf16.gmra.mxu0 %v1321
      %v2252 = vpop.f32.mrf.mxu0
      %v2253 = vadd.f32 %v2204, %v2252
      %v2254 = vpop.f32.mrf.mxu0
      %v2255 = vadd.f32 %v2206, %v2254
      %2256 = vdwg.mxu0
      %2257 = vmatpush.bf16.msra.mxu0 %v1083
      %2258 = vmatpush.bf16.msra.mxu0 %v1067
      %2259 = vmatpush.bf16.msra.mxu0 %v1051
      %2260 = vmatpush.bf16.msra.mxu0 %v1035
      %2261 = vmatpush.bf16.msra.mxu0 %v1019
      %2262 = vmatpush.bf16.msra.mxu0 %v1003
      %2263 = vmatpush.bf16.msra.mxu0 %v987
      %2264 = vmatpush.bf16.msra.mxu0 %v971
      %2265 = vmatmul.bf16.gmra.mxu0 %v434
      %v2266 = vpop.f32.mrf.mxu0
      %v2267 = vadd.f32 0.0, %v2266
      %v2268 = vpop.f32.mrf.mxu0
      %v2269 = vadd.f32 0.0, %v2268
      %2270 = vmatmul.bf16.gmra.mxu0 %v436
      %v2271 = vpop.f32.mrf.mxu0
      %v2272 = vadd.f32 0.0, %v2271
      %v2273 = vpop.f32.mrf.mxu0
      %v2274 = vadd.f32 0.0, %v2273
      %2275 = vmatmul.bf16.gmra.mxu0 %v438
      %v2276 = vpop.f32.mrf.mxu0
      %v2277 = vadd.f32 0.0, %v2276
      %v2278 = vpop.f32.mrf.mxu0
      %v2279 = vadd.f32 0.0, %v2278
      %2280 = vmatmul.bf16.gmra.mxu0 %v440
      %v2281 = vpop.f32.mrf.mxu0
      %v2282 = vadd.f32 0.0, %v2281
      %v2283 = vpop.f32.mrf.mxu0
      %v2284 = vadd.f32 0.0, %v2283
      %2285 = vmatmul.bf16.gmra.mxu0 %v442
      %v2286 = vpop.f32.mrf.mxu0
      %v2287 = vadd.f32 0.0, %v2286
      %v2288 = vpop.f32.mrf.mxu0
      %v2289 = vadd.f32 0.0, %v2288
      %2290 = vmatmul.bf16.gmra.mxu0 %v444
      %v2291 = vpop.f32.mrf.mxu0
      %v2292 = vadd.f32 0.0, %v2291
      %v2293 = vpop.f32.mrf.mxu0
      %v2294 = vadd.f32 0.0, %v2293
      %2295 = vmatmul.bf16.gmra.mxu0 %v446
      %v2296 = vpop.f32.mrf.mxu0
      %v2297 = vadd.f32 0.0, %v2296
      %v2298 = vpop.f32.mrf.mxu0
      %v2299 = vadd.f32 0.0, %v2298
      %2300 = vmatmul.bf16.gmra.mxu0 %v448
      %v2301 = vpop.f32.mrf.mxu0
      %v2302 = vadd.f32 0.0, %v2301
      %v2303 = vpop.f32.mrf.mxu0
      %v2304 = vadd.f32 0.0, %v2303
      %2305 = vdwg.mxu0
      %2306 = vmatpush.bf16.msra.mxu0 0
      %2307 = vmatpush.bf16.msra.mxu0 0
      %2308 = vmatpush.bf16.msra.mxu0 0
      %2309 = vmatpush.bf16.msra.mxu0 0
      %2310 = vmatpush.bf16.msra.mxu0 0
      %2311 = vmatpush.bf16.msra.mxu0 %v1355
      %2312 = vmatpush.bf16.msra.mxu0 %v1115
      %2313 = vmatpush.bf16.msra.mxu0 %v1099
      %2314 = vmatmul.bf16.gmra.mxu0 %v1300
      %v2315 = vpop.f32.mrf.mxu0
      %v2316 = vadd.f32 %v2267, %v2315
      %v2317 = vpop.f32.mrf.mxu0
      %v2318 = vadd.f32 %v2269, %v2317
      %2319 = vmatmul.bf16.gmra.mxu0 %v1303
      %v2320 = vpop.f32.mrf.mxu0
      %v2321 = vadd.f32 %v2272, %v2320
      %v2322 = vpop.f32.mrf.mxu0
      %v2323 = vadd.f32 %v2274, %v2322
      %2324 = vmatmul.bf16.gmra.mxu0 %v1306
      %v2325 = vpop.f32.mrf.mxu0
      %v2326 = vadd.f32 %v2277, %v2325
      %v2327 = vpop.f32.mrf.mxu0
      %v2328 = vadd.f32 %v2279, %v2327
      %2329 = vmatmul.bf16.gmra.mxu0 %v1309
      %v2330 = vpop.f32.mrf.mxu0
      %v2331 = vadd.f32 %v2282, %v2330
      %v2332 = vpop.f32.mrf.mxu0
      %v2333 = vadd.f32 %v2284, %v2332
      %2334 = vmatmul.bf16.gmra.mxu0 %v1312
      %v2335 = vpop.f32.mrf.mxu0
      %v2336 = vadd.f32 %v2287, %v2335
      %v2337 = vpop.f32.mrf.mxu0
      %v2338 = vadd.f32 %v2289, %v2337
      %2339 = vmatmul.bf16.gmra.mxu0 %v1315
      %v2340 = vpop.f32.mrf.mxu0
      %v2341 = vadd.f32 %v2292, %v2340
      %v2342 = vpop.f32.mrf.mxu0
      %v2343 = vadd.f32 %v2294, %v2342
      %2344 = vmatmul.bf16.gmra.mxu0 %v1318
      %v2345 = vpop.f32.mrf.mxu0
      %v2346 = vadd.f32 %v2297, %v2345
      %v2347 = vpop.f32.mrf.mxu0
      %v2348 = vadd.f32 %v2299, %v2347
      %2349 = vmatmul.bf16.gmra.mxu0 %v1321
      %v2350 = vpop.f32.mrf.mxu0
      %v2351 = vadd.f32 %v2302, %v2350
      %v2352 = vpop.f32.mrf.mxu0
      %v2353 = vadd.f32 %v2304, %v2352
      %2354 = vdwg.mxu0
      %2355 = vmatpush.bf16.msra.mxu0 %v1084
      %2356 = vmatpush.bf16.msra.mxu0 %v1068
      %2357 = vmatpush.bf16.msra.mxu0 %v1052
      %2358 = vmatpush.bf16.msra.mxu0 %v1036
      %2359 = vmatpush.bf16.msra.mxu0 %v1020
      %2360 = vmatpush.bf16.msra.mxu0 %v1004
      %2361 = vmatpush.bf16.msra.mxu0 %v988
      %2362 = vmatpush.bf16.msra.mxu0 %v972
      %2363 = vmatmul.bf16.gmra.mxu0 %v434
      %v2364 = vpop.f32.mrf.mxu0
      %v2365 = vadd.f32 0.0, %v2364
      %v2366 = vpop.f32.mrf.mxu0
      %v2367 = vadd.f32 0.0, %v2366
      %2368 = vmatmul.bf16.gmra.mxu0 %v436
      %v2369 = vpop.f32.mrf.mxu0
      %v2370 = vadd.f32 0.0, %v2369
      %v2371 = vpop.f32.mrf.mxu0
      %v2372 = vadd.f32 0.0, %v2371
      %2373 = vmatmul.bf16.gmra.mxu0 %v438
      %v2374 = vpop.f32.mrf.mxu0
      %v2375 = vadd.f32 0.0, %v2374
      %v2376 = vpop.f32.mrf.mxu0
      %v2377 = vadd.f32 0.0, %v2376
      %2378 = vmatmul.bf16.gmra.mxu0 %v440
      %v2379 = vpop.f32.mrf.mxu0
      %v2380 = vadd.f32 0.0, %v2379
      %v2381 = vpop.f32.mrf.mxu0
      %v2382 = vadd.f32 0.0, %v2381
      %2383 = vmatmul.bf16.gmra.mxu0 %v442
      %v2384 = vpop.f32.mrf.mxu0
      %v2385 = vadd.f32 0.0, %v2384
      %v2386 = vpop.f32.mrf.mxu0
      %v2387 = vadd.f32 0.0, %v2386
      %2388 = vmatmul.bf16.gmra.mxu0 %v444
      %v2389 = vpop.f32.mrf.mxu0
      %v2390 = vadd.f32 0.0, %v2389
      %v2391 = vpop.f32.mrf.mxu0
      %v2392 = vadd.f32 0.0, %v2391
      %2393 = vmatmul.bf16.gmra.mxu0 %v446
      %v2394 = vpop.f32.mrf.mxu0
      %v2395 = vadd.f32 0.0, %v2394
      %v2396 = vpop.f32.mrf.mxu0
      %v2397 = vadd.f32 0.0, %v2396
      %2398 = vmatmul.bf16.gmra.mxu0 %v448
      %v2399 = vpop.f32.mrf.mxu0
      %v2400 = vadd.f32 0.0, %v2399
      %v2401 = vpop.f32.mrf.mxu0
      %v2402 = vadd.f32 0.0, %v2401
      %2403 = vdwg.mxu0
      %2404 = vmatpush.bf16.msra.mxu0 0
      %2405 = vmatpush.bf16.msra.mxu0 0
      %2406 = vmatpush.bf16.msra.mxu0 0
      %2407 = vmatpush.bf16.msra.mxu0 0
      %2408 = vmatpush.bf16.msra.mxu0 0
      %2409 = vmatpush.bf16.msra.mxu0 %v1358
      %2410 = vmatpush.bf16.msra.mxu0 %v1116
      %2411 = vmatpush.bf16.msra.mxu0 %v1100
      %2412 = vmatmul.bf16.gmra.mxu0 %v1300
      %v2413 = vpop.f32.mrf.mxu0
      %v2414 = vadd.f32 %v2365, %v2413
      %v2415 = vpop.f32.mrf.mxu0
      %v2416 = vadd.f32 %v2367, %v2415
      %2417 = vmatmul.bf16.gmra.mxu0 %v1303
      %v2418 = vpop.f32.mrf.mxu0
      %v2419 = vadd.f32 %v2370, %v2418
      %v2420 = vpop.f32.mrf.mxu0
      %v2421 = vadd.f32 %v2372, %v2420
      %2422 = vmatmul.bf16.gmra.mxu0 %v1306
      %v2423 = vpop.f32.mrf.mxu0
      %v2424 = vadd.f32 %v2375, %v2423
      %v2425 = vpop.f32.mrf.mxu0
      %v2426 = vadd.f32 %v2377, %v2425
      %2427 = vmatmul.bf16.gmra.mxu0 %v1309
      %v2428 = vpop.f32.mrf.mxu0
      %v2429 = vadd.f32 %v2380, %v2428
      %v2430 = vpop.f32.mrf.mxu0
      %v2431 = vadd.f32 %v2382, %v2430
      %2432 = vmatmul.bf16.gmra.mxu0 %v1312
      %v2433 = vpop.f32.mrf.mxu0
      %v2434 = vadd.f32 %v2385, %v2433
      %v2435 = vpop.f32.mrf.mxu0
      %v2436 = vadd.f32 %v2387, %v2435
      %2437 = vmatmul.bf16.gmra.mxu0 %v1315
      %v2438 = vpop.f32.mrf.mxu0
      %v2439 = vadd.f32 %v2390, %v2438
      %v2440 = vpop.f32.mrf.mxu0
      %v2441 = vadd.f32 %v2392, %v2440
      %2442 = vmatmul.bf16.gmra.mxu0 %v1318
      %v2443 = vpop.f32.mrf.mxu0
      %v2444 = vadd.f32 %v2395, %v2443
      %v2445 = vpop.f32.mrf.mxu0
      %v2446 = vadd.f32 %v2397, %v2445
      %2447 = vmatmul.bf16.gmra.mxu0 %v1321
      %v2448 = vpop.f32.mrf.mxu0
      %v2449 = vadd.f32 %v2400, %v2448
      %v2450 = vpop.f32.mrf.mxu0
      %v2451 = vadd.f32 %v2402, %v2450
      %2452 = vdwg.mxu0
      %2453 = vmatpush.bf16.msra.mxu0 %v1085
      %2454 = vmatpush.bf16.msra.mxu0 %v1069
      %2455 = vmatpush.bf16.msra.mxu0 %v1053
      %2456 = vmatpush.bf16.msra.mxu0 %v1037
      %2457 = vmatpush.bf16.msra.mxu0 %v1021
      %2458 = vmatpush.bf16.msra.mxu0 %v1005
      %2459 = vmatpush.bf16.msra.mxu0 %v989
      %2460 = vmatpush.bf16.msra.mxu0 %v973
      %2461 = vmatmul.bf16.gmra.mxu0 %v434
      %v2462 = vpop.f32.mrf.mxu0
      %v2463 = vadd.f32 0.0, %v2462
      %v2464 = vpop.f32.mrf.mxu0
      %v2465 = vadd.f32 0.0, %v2464
      %2466 = vmatmul.bf16.gmra.mxu0 %v436
      %v2467 = vpop.f32.mrf.mxu0
      %v2468 = vadd.f32 0.0, %v2467
      %v2469 = vpop.f32.mrf.mxu0
      %v2470 = vadd.f32 0.0, %v2469
      %2471 = vmatmul.bf16.gmra.mxu0 %v438
      %v2472 = vpop.f32.mrf.mxu0
      %v2473 = vadd.f32 0.0, %v2472
      %v2474 = vpop.f32.mrf.mxu0
      %v2475 = vadd.f32 0.0, %v2474
      %2476 = vmatmul.bf16.gmra.mxu0 %v440
      %v2477 = vpop.f32.mrf.mxu0
      %v2478 = vadd.f32 0.0, %v2477
      %v2479 = vpop.f32.mrf.mxu0
      %v2480 = vadd.f32 0.0, %v2479
      %2481 = vmatmul.bf16.gmra.mxu0 %v442
      %v2482 = vpop.f32.mrf.mxu0
      %v2483 = vadd.f32 0.0, %v2482
      %v2484 = vpop.f32.mrf.mxu0
      %v2485 = vadd.f32 0.0, %v2484
      %2486 = vmatmul.bf16.gmra.mxu0 %v444
      %v2487 = vpop.f32.mrf.mxu0
      %v2488 = vadd.f32 0.0, %v2487
      %v2489 = vpop.f32.mrf.mxu0
      %v2490 = vadd.f32 0.0, %v2489
      %2491 = vmatmul.bf16.gmra.mxu0 %v446
      %v2492 = vpop.f32.mrf.mxu0
      %v2493 = vadd.f32 0.0, %v2492
      %v2494 = vpop.f32.mrf.mxu0
      %v2495 = vadd.f32 0.0, %v2494
      %2496 = vmatmul.bf16.gmra.mxu0 %v448
      %v2497 = vpop.f32.mrf.mxu0
      %v2498 = vadd.f32 0.0, %v2497
      %v2499 = vpop.f32.mrf.mxu0
      %v2500 = vadd.f32 0.0, %v2499
      %2501 = vdwg.mxu0
      %2502 = vmatpush.bf16.msra.mxu0 0
      %2503 = vmatpush.bf16.msra.mxu0 0
      %2504 = vmatpush.bf16.msra.mxu0 0
      %2505 = vmatpush.bf16.msra.mxu0 0
      %2506 = vmatpush.bf16.msra.mxu0 0
      %2507 = vmatpush.bf16.msra.mxu0 %v1361
      %2508 = vmatpush.bf16.msra.mxu0 %v1117
      %2509 = vmatpush.bf16.msra.mxu0 %v1101
      %2510 = vmatmul.bf16.gmra.mxu0 %v1300
      %v2511 = vpop.f32.mrf.mxu0
      %v2512 = vadd.f32 %v2463, %v2511
      %v2513 = vpop.f32.mrf.mxu0
      %v2514 = vadd.f32 %v2465, %v2513
      %2515 = vmatmul.bf16.gmra.mxu0 %v1303
      %v2516 = vpop.f32.mrf.mxu0
      %v2517 = vadd.f32 %v2468, %v2516
      %v2518 = vpop.f32.mrf.mxu0
      %v2519 = vadd.f32 %v2470, %v2518
      %2520 = vmatmul.bf16.gmra.mxu0 %v1306
      %v2521 = vpop.f32.mrf.mxu0
      %v2522 = vadd.f32 %v2473, %v2521
      %v2523 = vpop.f32.mrf.mxu0
      %v2524 = vadd.f32 %v2475, %v2523
      %2525 = vmatmul.bf16.gmra.mxu0 %v1309
      %v2526 = vpop.f32.mrf.mxu0
      %v2527 = vadd.f32 %v2478, %v2526
      %v2528 = vpop.f32.mrf.mxu0
      %v2529 = vadd.f32 %v2480, %v2528
      %2530 = vmatmul.bf16.gmra.mxu0 %v1312
      %v2531 = vpop.f32.mrf.mxu0
      %v2532 = vadd.f32 %v2483, %v2531
      %v2533 = vpop.f32.mrf.mxu0
      %v2534 = vadd.f32 %v2485, %v2533
      %2535 = vmatmul.bf16.gmra.mxu0 %v1315
      %v2536 = vpop.f32.mrf.mxu0
      %v2537 = vadd.f32 %v2488, %v2536
      %v2538 = vpop.f32.mrf.mxu0
      %v2539 = vadd.f32 %v2490, %v2538
      %2540 = vmatmul.bf16.gmra.mxu0 %v1318
      %v2541 = vpop.f32.mrf.mxu0
      %v2542 = vadd.f32 %v2493, %v2541
      %v2543 = vpop.f32.mrf.mxu0
      %v2544 = vadd.f32 %v2495, %v2543
      %2545 = vmatmul.bf16.gmra.mxu0 %v1321
      %v2546 = vpop.f32.mrf.mxu0
      %v2547 = vadd.f32 %v2498, %v2546
      %v2548 = vpop.f32.mrf.mxu0
      %v2549 = vadd.f32 %v2500, %v2548
      %2550 = vdwg.mxu0
      %2551 = vmatpush.bf16.msra.mxu0 %v1086
      %2552 = vmatpush.bf16.msra.mxu0 %v1070
      %2553 = vmatpush.bf16.msra.mxu0 %v1054
      %2554 = vmatpush.bf16.msra.mxu0 %v1038
      %2555 = vmatpush.bf16.msra.mxu0 %v1022
      %2556 = vmatpush.bf16.msra.mxu0 %v1006
      %2557 = vmatpush.bf16.msra.mxu0 %v990
      %2558 = vmatpush.bf16.msra.mxu0 %v974
      %2559 = vmatmul.bf16.gmra.mxu0 %v434
      %v2560 = vpop.f32.mrf.mxu0
      %v2561 = vadd.f32 0.0, %v2560
      %v2562 = vpop.f32.mrf.mxu0
      %v2563 = vadd.f32 0.0, %v2562
      %2564 = vmatmul.bf16.gmra.mxu0 %v436
      %v2565 = vpop.f32.mrf.mxu0
      %v2566 = vadd.f32 0.0, %v2565
      %v2567 = vpop.f32.mrf.mxu0
      %v2568 = vadd.f32 0.0, %v2567
      %2569 = vmatmul.bf16.gmra.mxu0 %v438
      %v2570 = vpop.f32.mrf.mxu0
      %v2571 = vadd.f32 0.0, %v2570
      %v2572 = vpop.f32.mrf.mxu0
      %v2573 = vadd.f32 0.0, %v2572
      %2574 = vmatmul.bf16.gmra.mxu0 %v440
      %v2575 = vpop.f32.mrf.mxu0
      %v2576 = vadd.f32 0.0, %v2575
      %v2577 = vpop.f32.mrf.mxu0
      %v2578 = vadd.f32 0.0, %v2577
      %2579 = vmatmul.bf16.gmra.mxu0 %v442
      %v2580 = vpop.f32.mrf.mxu0
      %v2581 = vadd.f32 0.0, %v2580
      %v2582 = vpop.f32.mrf.mxu0
      %v2583 = vadd.f32 0.0, %v2582
      %2584 = vmatmul.bf16.gmra.mxu0 %v444
      %v2585 = vpop.f32.mrf.mxu0
      %v2586 = vadd.f32 0.0, %v2585
      %v2587 = vpop.f32.mrf.mxu0
      %v2588 = vadd.f32 0.0, %v2587
      %2589 = vmatmul.bf16.gmra.mxu0 %v446
      %v2590 = vpop.f32.mrf.mxu0
      %v2591 = vadd.f32 0.0, %v2590
      %v2592 = vpop.f32.mrf.mxu0
      %v2593 = vadd.f32 0.0, %v2592
      %2594 = vmatmul.bf16.gmra.mxu0 %v448
      %v2595 = vpop.f32.mrf.mxu0
      %v2596 = vadd.f32 0.0, %v2595
      %v2597 = vpop.f32.mrf.mxu0
      %v2598 = vadd.f32 0.0, %v2597
      %2599 = vdwg.mxu0
      %2600 = vmatpush.bf16.msra.mxu0 0
      %2601 = vmatpush.bf16.msra.mxu0 0
      %2602 = vmatpush.bf16.msra.mxu0 0
      %2603 = vmatpush.bf16.msra.mxu0 0
      %2604 = vmatpush.bf16.msra.mxu0 0
      %2605 = vmatpush.bf16.msra.mxu0 %v1364
      %2606 = vmatpush.bf16.msra.mxu0 %v1118
      %2607 = vmatpush.bf16.msra.mxu0 %v1102
      %2608 = vmatmul.bf16.gmra.mxu0 %v1300
      %v2609 = vpop.f32.mrf.mxu0
      %v2610 = vadd.f32 %v2561, %v2609
      %v2611 = vpop.f32.mrf.mxu0
      %v2612 = vadd.f32 %v2563, %v2611
      %2613 = vmatmul.bf16.gmra.mxu0 %v1303
      %v2614 = vpop.f32.mrf.mxu0
      %v2615 = vadd.f32 %v2566, %v2614
      %v2616 = vpop.f32.mrf.mxu0
      %v2617 = vadd.f32 %v2568, %v2616
      %2618 = vmatmul.bf16.gmra.mxu0 %v1306
      %v2619 = vpop.f32.mrf.mxu0
      %v2620 = vadd.f32 %v2571, %v2619
      %v2621 = vpop.f32.mrf.mxu0
      %v2622 = vadd.f32 %v2573, %v2621
      %2623 = vmatmul.bf16.gmra.mxu0 %v1309
      %v2624 = vpop.f32.mrf.mxu0
      %v2625 = vadd.f32 %v2576, %v2624
      %v2626 = vpop.f32.mrf.mxu0
      %v2627 = vadd.f32 %v2578, %v2626
      %2628 = vmatmul.bf16.gmra.mxu0 %v1312
      %v2629 = vpop.f32.mrf.mxu0
      %v2630 = vadd.f32 %v2581, %v2629
      %v2631 = vpop.f32.mrf.mxu0
      %v2632 = vadd.f32 %v2583, %v2631
      %2633 = vmatmul.bf16.gmra.mxu0 %v1315
      %v2634 = vpop.f32.mrf.mxu0
      %v2635 = vadd.f32 %v2586, %v2634
      %v2636 = vpop.f32.mrf.mxu0
      %v2637 = vadd.f32 %v2588, %v2636
      %2638 = vmatmul.bf16.gmra.mxu0 %v1318
      %v2639 = vpop.f32.mrf.mxu0
      %v2640 = vadd.f32 %v2591, %v2639
      %v2641 = vpop.f32.mrf.mxu0
      %v2642 = vadd.f32 %v2593, %v2641
      %2643 = vmatmul.bf16.gmra.mxu0 %v1321
      %v2644 = vpop.f32.mrf.mxu0
      %v2645 = vadd.f32 %v2596, %v2644
      %v2646 = vpop.f32.mrf.mxu0
      %v2647 = vadd.f32 %v2598, %v2646
      %2648 = vdwg.mxu0
      %2649 = vmatpush.bf16.msra.mxu0 %v1087
      %2650 = vmatpush.bf16.msra.mxu0 %v1071
      %2651 = vmatpush.bf16.msra.mxu0 %v1055
      %2652 = vmatpush.bf16.msra.mxu0 %v1039
      %2653 = vmatpush.bf16.msra.mxu0 %v1023
      %2654 = vmatpush.bf16.msra.mxu0 %v1007
      %2655 = vmatpush.bf16.msra.mxu0 %v991
      %2656 = vmatpush.bf16.msra.mxu0 %v975
      %2657 = vmatmul.bf16.gmra.mxu0 %v434
      %v2658 = vpop.f32.mrf.mxu0
      %v2659 = vadd.f32 0.0, %v2658
      %v2660 = vpop.f32.mrf.mxu0
      %v2661 = vadd.f32 0.0, %v2660
      %2662 = vmatmul.bf16.gmra.mxu0 %v436
      %v2663 = vpop.f32.mrf.mxu0
      %v2664 = vadd.f32 0.0, %v2663
      %v2665 = vpop.f32.mrf.mxu0
      %v2666 = vadd.f32 0.0, %v2665
      %2667 = vmatmul.bf16.gmra.mxu0 %v438
      %v2668 = vpop.f32.mrf.mxu0
      %v2669 = vadd.f32 0.0, %v2668
      %v2670 = vpop.f32.mrf.mxu0
      %v2671 = vadd.f32 0.0, %v2670
      %2672 = vmatmul.bf16.gmra.mxu0 %v440
      %v2673 = vpop.f32.mrf.mxu0
      %v2674 = vadd.f32 0.0, %v2673
      %v2675 = vpop.f32.mrf.mxu0
      %v2676 = vadd.f32 0.0, %v2675
      %2677 = vmatmul.bf16.gmra.mxu0 %v442
      %v2678 = vpop.f32.mrf.mxu0
      %v2679 = vadd.f32 0.0, %v2678
      %v2680 = vpop.f32.mrf.mxu0
      %v2681 = vadd.f32 0.0, %v2680
      %2682 = vmatmul.bf16.gmra.mxu0 %v444
      %v2683 = vpop.f32.mrf.mxu0
      %v2684 = vadd.f32 0.0, %v2683
      %v2685 = vpop.f32.mrf.mxu0
      %v2686 = vadd.f32 0.0, %v2685
      %2687 = vmatmul.bf16.gmra.mxu0 %v446
      %v2688 = vpop.f32.mrf.mxu0
      %v2689 = vadd.f32 0.0, %v2688
      %v2690 = vpop.f32.mrf.mxu0
      %v2691 = vadd.f32 0.0, %v2690
      %2692 = vmatmul.bf16.gmra.mxu0 %v448
      %v2693 = vpop.f32.mrf.mxu0
      %v2694 = vadd.f32 0.0, %v2693
      %v2695 = vpop.f32.mrf.mxu0
      %v2696 = vadd.f32 0.0, %v2695
      %2697 = vdwg.mxu0
      %2698 = vmatpush.bf16.msra.mxu0 0
      %2699 = vmatpush.bf16.msra.mxu0 0
      %2700 = vmatpush.bf16.msra.mxu0 0
      %2701 = vmatpush.bf16.msra.mxu0 0
      %2702 = vmatpush.bf16.msra.mxu0 0
      %2703 = vmatpush.bf16.msra.mxu0 %v1367
      %2704 = vmatpush.bf16.msra.mxu0 %v1119
      %2705 = vmatpush.bf16.msra.mxu0 %v1103
      %2706 = vmatmul.bf16.gmra.mxu0 %v1300
      %v2707 = vpop.f32.mrf.mxu0
      %v2708 = vadd.f32 %v2659, %v2707
      %v2709 = vpop.f32.mrf.mxu0
      %v2710 = vadd.f32 %v2661, %v2709
      %2711 = vmatmul.bf16.gmra.mxu0 %v1303
      %v2712 = vpop.f32.mrf.mxu0
      %v2713 = vadd.f32 %v2664, %v2712
      %v2714 = vpop.f32.mrf.mxu0
      %v2715 = vadd.f32 %v2666, %v2714
      %2716 = vmatmul.bf16.gmra.mxu0 %v1306
      %v2717 = vpop.f32.mrf.mxu0
      %v2718 = vadd.f32 %v2669, %v2717
      %v2719 = vpop.f32.mrf.mxu0
      %v2720 = vadd.f32 %v2671, %v2719
      %2721 = vmatmul.bf16.gmra.mxu0 %v1309
      %v2722 = vpop.f32.mrf.mxu0
      %v2723 = vadd.f32 %v2674, %v2722
      %v2724 = vpop.f32.mrf.mxu0
      %v2725 = vadd.f32 %v2676, %v2724
      %2726 = vmatmul.bf16.gmra.mxu0 %v1312
      %v2727 = vpop.f32.mrf.mxu0
      %v2728 = vadd.f32 %v2679, %v2727
      %v2729 = vpop.f32.mrf.mxu0
      %v2730 = vadd.f32 %v2681, %v2729
      %2731 = vmatmul.bf16.gmra.mxu0 %v1315
      %v2732 = vpop.f32.mrf.mxu0
      %v2733 = vadd.f32 %v2684, %v2732
      %v2734 = vpop.f32.mrf.mxu0
      %v2735 = vadd.f32 %v2686, %v2734
      %2736 = vmatmul.bf16.gmra.mxu0 %v1318
      %v2737 = vpop.f32.mrf.mxu0
      %v2738 = vadd.f32 %v2689, %v2737
      %v2739 = vpop.f32.mrf.mxu0
      %v2740 = vadd.f32 %v2691, %v2739
      %2741 = vmatmul.bf16.gmra.mxu0 %v1321
      %v2742 = vpop.f32.mrf.mxu0
      %v2743 = vadd.f32 %v2694, %v2742
      %v2744 = vpop.f32.mrf.mxu0
      %v2745 = vadd.f32 %v2696, %v2744
      %2746 = vdwg.mxu0
      %2747 = vmatpush.bf16.msra.mxu0 %v1088
      %2748 = vmatpush.bf16.msra.mxu0 %v1072
      %2749 = vmatpush.bf16.msra.mxu0 %v1056
      %2750 = vmatpush.bf16.msra.mxu0 %v1040
      %2751 = vmatpush.bf16.msra.mxu0 %v1024
      %2752 = vmatpush.bf16.msra.mxu0 %v1008
      %2753 = vmatpush.bf16.msra.mxu0 %v992
      %2754 = vmatpush.bf16.msra.mxu0 %v976
      %2755 = vmatmul.bf16.gmra.mxu0 %v434
      %v2756 = vpop.f32.mrf.mxu0
      %v2757 = vadd.f32 0.0, %v2756
      %v2758 = vpop.f32.mrf.mxu0
      %v2759 = vadd.f32 0.0, %v2758
      %2760 = vmatmul.bf16.gmra.mxu0 %v436
      %v2761 = vpop.f32.mrf.mxu0
      %v2762 = vadd.f32 0.0, %v2761
      %v2763 = vpop.f32.mrf.mxu0
      %v2764 = vadd.f32 0.0, %v2763
      %2765 = vmatmul.bf16.gmra.mxu0 %v438
      %v2766 = vpop.f32.mrf.mxu0
      %v2767 = vadd.f32 0.0, %v2766
      %v2768 = vpop.f32.mrf.mxu0
      %v2769 = vadd.f32 0.0, %v2768
      %2770 = vmatmul.bf16.gmra.mxu0 %v440
      %v2771 = vpop.f32.mrf.mxu0
      %v2772 = vadd.f32 0.0, %v2771
      %v2773 = vpop.f32.mrf.mxu0
      %v2774 = vadd.f32 0.0, %v2773
      %2775 = vmatmul.bf16.gmra.mxu0 %v442
      %v2776 = vpop.f32.mrf.mxu0
      %v2777 = vadd.f32 0.0, %v2776
      %v2778 = vpop.f32.mrf.mxu0
      %v2779 = vadd.f32 0.0, %v2778
      %2780 = vmatmul.bf16.gmra.mxu0 %v444
      %v2781 = vpop.f32.mrf.mxu0
      %v2782 = vadd.f32 0.0, %v2781
      %v2783 = vpop.f32.mrf.mxu0
      %v2784 = vadd.f32 0.0, %v2783
      %2785 = vmatmul.bf16.gmra.mxu0 %v446
      %v2786 = vpop.f32.mrf.mxu0
      %v2787 = vadd.f32 0.0, %v2786
      %v2788 = vpop.f32.mrf.mxu0
      %v2789 = vadd.f32 0.0, %v2788
      %2790 = vmatmul.bf16.gmra.mxu0 %v448
      %v2791 = vpop.f32.mrf.mxu0
      %v2792 = vadd.f32 0.0, %v2791
      %v2793 = vpop.f32.mrf.mxu0
      %v2794 = vadd.f32 0.0, %v2793
      %2795 = vdwg.mxu0
      %2796 = vmatpush.bf16.msra.mxu0 0
      %2797 = vmatpush.bf16.msra.mxu0 0
      %2798 = vmatpush.bf16.msra.mxu0 0
      %2799 = vmatpush.bf16.msra.mxu0 0
      %2800 = vmatpush.bf16.msra.mxu0 0
      %2801 = vmatpush.bf16.msra.mxu0 %v1370
      %2802 = vmatpush.bf16.msra.mxu0 %v1120
      %2803 = vmatpush.bf16.msra.mxu0 %v1104
      %2804 = vmatmul.bf16.gmra.mxu0 %v1300
      %v2805 = vpop.f32.mrf.mxu0
      %v2806 = vadd.f32 %v2757, %v2805
      %v2807 = vpop.f32.mrf.mxu0
      %v2808 = vadd.f32 %v2759, %v2807
      %2809 = vmatmul.bf16.gmra.mxu0 %v1303
      %v2810 = vpop.f32.mrf.mxu0
      %v2811 = vadd.f32 %v2762, %v2810
      %v2812 = vpop.f32.mrf.mxu0
      %v2813 = vadd.f32 %v2764, %v2812
      %2814 = vmatmul.bf16.gmra.mxu0 %v1306
      %v2815 = vpop.f32.mrf.mxu0
      %v2816 = vadd.f32 %v2767, %v2815
      %v2817 = vpop.f32.mrf.mxu0
      %v2818 = vadd.f32 %v2769, %v2817
      %2819 = vmatmul.bf16.gmra.mxu0 %v1309
      %v2820 = vpop.f32.mrf.mxu0
      %v2821 = vadd.f32 %v2772, %v2820
      %v2822 = vpop.f32.mrf.mxu0
      %v2823 = vadd.f32 %v2774, %v2822
      %2824 = vmatmul.bf16.gmra.mxu0 %v1312
      %v2825 = vpop.f32.mrf.mxu0
      %v2826 = vadd.f32 %v2777, %v2825
      %v2827 = vpop.f32.mrf.mxu0
      %v2828 = vadd.f32 %v2779, %v2827
      %2829 = vmatmul.bf16.gmra.mxu0 %v1315
      %v2830 = vpop.f32.mrf.mxu0
      %v2831 = vadd.f32 %v2782, %v2830
      %v2832 = vpop.f32.mrf.mxu0
      %v2833 = vadd.f32 %v2784, %v2832
      %2834 = vmatmul.bf16.gmra.mxu0 %v1318
      %v2835 = vpop.f32.mrf.mxu0
      %v2836 = vadd.f32 %v2787, %v2835
      %v2837 = vpop.f32.mrf.mxu0
      %v2838 = vadd.f32 %v2789, %v2837
      %2839 = vmatmul.bf16.gmra.mxu0 %v1321
      %v2840 = vpop.f32.mrf.mxu0
      %v2841 = vadd.f32 %v2792, %v2840
      %v2842 = vpop.f32.mrf.mxu0
      %v2843 = vadd.f32 %v2794, %v2842
      %2844 = vdwg.mxu0
      %2845 = vmatpush.bf16.msra.mxu0 %v1089
      %2846 = vmatpush.bf16.msra.mxu0 %v1073
      %2847 = vmatpush.bf16.msra.mxu0 %v1057
      %2848 = vmatpush.bf16.msra.mxu0 %v1041
      %2849 = vmatpush.bf16.msra.mxu0 %v1025
      %2850 = vmatpush.bf16.msra.mxu0 %v1009
      %2851 = vmatpush.bf16.msra.mxu0 %v993
      %2852 = vmatpush.bf16.msra.mxu0 %v977
      %2853 = vmatmul.bf16.gmra.mxu0 %v434
      %v2854 = vpop.f32.mrf.mxu0
      %v2855 = vadd.f32 0.0, %v2854
      %v2856 = vpop.f32.mrf.mxu0
      %v2857 = vadd.f32 0.0, %v2856
      %2858 = vmatmul.bf16.gmra.mxu0 %v436
      %v2859 = vpop.f32.mrf.mxu0
      %v2860 = vadd.f32 0.0, %v2859
      %v2861 = vpop.f32.mrf.mxu0
      %v2862 = vadd.f32 0.0, %v2861
      %2863 = vmatmul.bf16.gmra.mxu0 %v438
      %v2864 = vpop.f32.mrf.mxu0
      %v2865 = vadd.f32 0.0, %v2864
      %v2866 = vpop.f32.mrf.mxu0
      %v2867 = vadd.f32 0.0, %v2866
      %2868 = vmatmul.bf16.gmra.mxu0 %v440
      %v2869 = vpop.f32.mrf.mxu0
      %v2870 = vadd.f32 0.0, %v2869
      %v2871 = vpop.f32.mrf.mxu0
      %v2872 = vadd.f32 0.0, %v2871
      %2873 = vmatmul.bf16.gmra.mxu0 %v442
      %v2874 = vpop.f32.mrf.mxu0
      %v2875 = vadd.f32 0.0, %v2874
      %v2876 = vpop.f32.mrf.mxu0
      %v2877 = vadd.f32 0.0, %v2876
      %2878 = vmatmul.bf16.gmra.mxu0 %v444
      %v2879 = vpop.f32.mrf.mxu0
      %v2880 = vadd.f32 0.0, %v2879
      %v2881 = vpop.f32.mrf.mxu0
      %v2882 = vadd.f32 0.0, %v2881
      %2883 = vmatmul.bf16.gmra.mxu0 %v446
      %v2884 = vpop.f32.mrf.mxu0
      %v2885 = vadd.f32 0.0, %v2884
      %v2886 = vpop.f32.mrf.mxu0
      %v2887 = vadd.f32 0.0, %v2886
      %2888 = vmatmul.bf16.gmra.mxu0 %v448
      %v2889 = vpop.f32.mrf.mxu0
      %v2890 = vadd.f32 0.0, %v2889
      %v2891 = vpop.f32.mrf.mxu0
      %v2892 = vadd.f32 0.0, %v2891
      %2893 = vdwg.mxu0
      %2894 = vmatpush.bf16.msra.mxu0 0
      %2895 = vmatpush.bf16.msra.mxu0 0
      %2896 = vmatpush.bf16.msra.mxu0 0
      %2897 = vmatpush.bf16.msra.mxu0 0
      %2898 = vmatpush.bf16.msra.mxu0 0
      %2899 = vmatpush.bf16.msra.mxu0 %v1373
      %2900 = vmatpush.bf16.msra.mxu0 %v1121
      %2901 = vmatpush.bf16.msra.mxu0 %v1105
      %2902 = vmatmul.bf16.gmra.mxu0 %v1300
      %v2903 = vpop.f32.mrf.mxu0
      %v2904 = vadd.f32 %v2855, %v2903
      %v2905 = vpop.f32.mrf.mxu0
      %v2906 = vadd.f32 %v2857, %v2905
      %2907 = vmatmul.bf16.gmra.mxu0 %v1303
      %v2908 = vpop.f32.mrf.mxu0
      %v2909 = vadd.f32 %v2860, %v2908
      %v2910 = vpop.f32.mrf.mxu0
      %v2911 = vadd.f32 %v2862, %v2910
      %2912 = vmatmul.bf16.gmra.mxu0 %v1306
      %v2913 = vpop.f32.mrf.mxu0
      %v2914 = vadd.f32 %v2865, %v2913
      %v2915 = vpop.f32.mrf.mxu0
      %v2916 = vadd.f32 %v2867, %v2915
      %2917 = vmatmul.bf16.gmra.mxu0 %v1309
      %v2918 = vpop.f32.mrf.mxu0
      %v2919 = vadd.f32 %v2870, %v2918
      %v2920 = vpop.f32.mrf.mxu0
      %v2921 = vadd.f32 %v2872, %v2920
      %2922 = vmatmul.bf16.gmra.mxu0 %v1312
      %v2923 = vpop.f32.mrf.mxu0
      %v2924 = vadd.f32 %v2875, %v2923
      %v2925 = vpop.f32.mrf.mxu0
      %v2926 = vadd.f32 %v2877, %v2925
      %2927 = vmatmul.bf16.gmra.mxu0 %v1315
      %v2928 = vpop.f32.mrf.mxu0
      %v2929 = vadd.f32 %v2880, %v2928
      %v2930 = vpop.f32.mrf.mxu0
      %v2931 = vadd.f32 %v2882, %v2930
      %2932 = vmatmul.bf16.gmra.mxu0 %v1318
      %v2933 = vpop.f32.mrf.mxu0
      %v2934 = vadd.f32 %v2885, %v2933
      %v2935 = vpop.f32.mrf.mxu0
      %v2936 = vadd.f32 %v2887, %v2935
      %2937 = vmatmul.bf16.gmra.mxu0 %v1321
      %v2938 = vpop.f32.mrf.mxu0
      %v2939 = vadd.f32 %v2890, %v2938
      %v2940 = vpop.f32.mrf.mxu0
      %v2941 = vadd.f32 %v2892, %v2940
      %2942 = vdwg.mxu0
      %v2943 = vmax.f32 %v1434, 0.0
      %v2944 = vmax.f32 %v1532, 0.0
      %v2945 = vmax.f32 %v1630, 0.0
      %v2946 = vmax.f32 %v1728, 0.0
      %v2947 = vmax.f32 %v1826, 0.0
      %v2948 = vmax.f32 %v1924, 0.0
      %v2949 = vmax.f32 %v2022, 0.0
      %v2950 = vmax.f32 %v2120, 0.0
      %v2951 = vmax.f32 %v2218, 0.0
      %v2952 = vmax.f32 %v2316, 0.0
      %v2953 = vmax.f32 %v2414, 0.0
      %v2954 = vmax.f32 %v2512, 0.0
      %v2955 = vmax.f32 %v2610, 0.0
      %v2956 = vmax.f32 %v2708, 0.0
      %v2957 = vmax.f32 %v2806, 0.0
      %v2958 = vmax.f32 %v2904, 0.0
      %v2959 = vmax.f32 %v1436, 0.0
      %v2960 = vmax.f32 %v1534, 0.0
      %v2961 = vmax.f32 %v1632, 0.0
      %v2962 = vmax.f32 %v1730, 0.0
      %v2963 = vmax.f32 %v1828, 0.0
      %v2964 = vmax.f32 %v1926, 0.0
      %v2965 = vmax.f32 %v2024, 0.0
      %v2966 = vmax.f32 %v2122, 0.0
      %v2967 = vmax.f32 %v2220, 0.0
      %v2968 = vmax.f32 %v2318, 0.0
      %v2969 = vmax.f32 %v2416, 0.0
      %v2970 = vmax.f32 %v2514, 0.0
      %v2971 = vmax.f32 %v2612, 0.0
      %v2972 = vmax.f32 %v2710, 0.0
      %v2973 = vmax.f32 %v2808, 0.0
      %v2974 = vmax.f32 %v2906, 0.0
      %v2975 = vmax.f32 %v1439, 0.0
      %v2976 = vmax.f32 %v1537, 0.0
      %v2977 = vmax.f32 %v1635, 0.0
      %v2978 = vmax.f32 %v1733, 0.0
      %v2979 = vmax.f32 %v1831, 0.0
      %v2980 = vmax.f32 %v1929, 0.0
      %v2981 = vmax.f32 %v2027, 0.0
      %v2982 = vmax.f32 %v2125, 0.0
      %v2983 = vmax.f32 %v2223, 0.0
      %v2984 = vmax.f32 %v2321, 0.0
      %v2985 = vmax.f32 %v2419, 0.0
      %v2986 = vmax.f32 %v2517, 0.0
      %v2987 = vmax.f32 %v2615, 0.0
      %v2988 = vmax.f32 %v2713, 0.0
      %v2989 = vmax.f32 %v2811, 0.0
      %v2990 = vmax.f32 %v2909, 0.0
      %v2991 = vmax.f32 %v1441, 0.0
      %v2992 = vmax.f32 %v1539, 0.0
      %v2993 = vmax.f32 %v1637, 0.0
      %v2994 = vmax.f32 %v1735, 0.0
      %v2995 = vmax.f32 %v1833, 0.0
      %v2996 = vmax.f32 %v1931, 0.0
      %v2997 = vmax.f32 %v2029, 0.0
      %v2998 = vmax.f32 %v2127, 0.0
      %v2999 = vmax.f32 %v2225, 0.0
      %v3000 = vmax.f32 %v2323, 0.0
      %v3001 = vmax.f32 %v2421, 0.0
      %v3002 = vmax.f32 %v2519, 0.0
      %v3003 = vmax.f32 %v2617, 0.0
      %v3004 = vmax.f32 %v2715, 0.0
      %v3005 = vmax.f32 %v2813, 0.0
      %v3006 = vmax.f32 %v2911, 0.0
      %v3007 = vmax.f32 %v1444, 0.0
      %v3008 = vmax.f32 %v1542, 0.0
      %v3009 = vmax.f32 %v1640, 0.0
      %v3010 = vmax.f32 %v1738, 0.0
      %v3011 = vmax.f32 %v1836, 0.0
      %v3012 = vmax.f32 %v1934, 0.0
      %v3013 = vmax.f32 %v2032, 0.0
      %v3014 = vmax.f32 %v2130, 0.0
      %v3015 = vmax.f32 %v2228, 0.0
      %v3016 = vmax.f32 %v2326, 0.0
      %v3017 = vmax.f32 %v2424, 0.0
      %v3018 = vmax.f32 %v2522, 0.0
      %v3019 = vmax.f32 %v2620, 0.0
      %v3020 = vmax.f32 %v2718, 0.0
      %v3021 = vmax.f32 %v2816, 0.0
      %v3022 = vmax.f32 %v2914, 0.0
      %v3023 = vmax.f32 %v1446, 0.0
      %v3024 = vmax.f32 %v1544, 0.0
      %v3025 = vmax.f32 %v1642, 0.0
      %v3026 = vmax.f32 %v1740, 0.0
      %v3027 = vmax.f32 %v1838, 0.0
      %v3028 = vmax.f32 %v1936, 0.0
      %v3029 = vmax.f32 %v2034, 0.0
      %v3030 = vmax.f32 %v2132, 0.0
      %v3031 = vmax.f32 %v2230, 0.0
      %v3032 = vmax.f32 %v2328, 0.0
      %v3033 = vmax.f32 %v2426, 0.0
      %v3034 = vmax.f32 %v2524, 0.0
      %v3035 = vmax.f32 %v2622, 0.0
      %v3036 = vmax.f32 %v2720, 0.0
      %v3037 = vmax.f32 %v2818, 0.0
      %v3038 = vmax.f32 %v2916, 0.0
      %v3039 = vmax.f32 %v1449, 0.0
      %v3040 = vmax.f32 %v1547, 0.0
      %v3041 = vmax.f32 %v1645, 0.0
      %v3042 = vmax.f32 %v1743, 0.0
      %v3043 = vmax.f32 %v1841, 0.0
      %v3044 = vmax.f32 %v1939, 0.0
      %v3045 = vmax.f32 %v2037, 0.0
      %v3046 = vmax.f32 %v2135, 0.0
      %v3047 = vmax.f32 %v2233, 0.0
      %v3048 = vmax.f32 %v2331, 0.0
      %v3049 = vmax.f32 %v2429, 0.0
      %v3050 = vmax.f32 %v2527, 0.0
      %v3051 = vmax.f32 %v2625, 0.0
      %v3052 = vmax.f32 %v2723, 0.0
      %v3053 = vmax.f32 %v2821, 0.0
      %v3054 = vmax.f32 %v2919, 0.0
      %v3055 = vmax.f32 %v1451, 0.0
      %v3056 = vmax.f32 %v1549, 0.0
      %v3057 = vmax.f32 %v1647, 0.0
      %v3058 = vmax.f32 %v1745, 0.0
      %v3059 = vmax.f32 %v1843, 0.0
      %v3060 = vmax.f32 %v1941, 0.0
      %v3061 = vmax.f32 %v2039, 0.0
      %v3062 = vmax.f32 %v2137, 0.0
      %v3063 = vmax.f32 %v2235, 0.0
      %v3064 = vmax.f32 %v2333, 0.0
      %v3065 = vmax.f32 %v2431, 0.0
      %v3066 = vmax.f32 %v2529, 0.0
      %v3067 = vmax.f32 %v2627, 0.0
      %v3068 = vmax.f32 %v2725, 0.0
      %v3069 = vmax.f32 %v2823, 0.0
      %v3070 = vmax.f32 %v2921, 0.0
      %v3071 = vmax.f32 %v1454, 0.0
      %v3072 = vmax.f32 %v1552, 0.0
      %v3073 = vmax.f32 %v1650, 0.0
      %v3074 = vmax.f32 %v1748, 0.0
      %v3075 = vmax.f32 %v1846, 0.0
      %v3076 = vmax.f32 %v1944, 0.0
      %v3077 = vmax.f32 %v2042, 0.0
      %v3078 = vmax.f32 %v2140, 0.0
      %v3079 = vmax.f32 %v2238, 0.0
      %v3080 = vmax.f32 %v2336, 0.0
      %v3081 = vmax.f32 %v2434, 0.0
      %v3082 = vmax.f32 %v2532, 0.0
      %v3083 = vmax.f32 %v2630, 0.0
      %v3084 = vmax.f32 %v2728, 0.0
      %v3085 = vmax.f32 %v2826, 0.0
      %v3086 = vmax.f32 %v2924, 0.0
      %v3087 = vmax.f32 %v1456, 0.0
      %v3088 = vmax.f32 %v1554, 0.0
      %v3089 = vmax.f32 %v1652, 0.0
      %v3090 = vmax.f32 %v1750, 0.0
      %v3091 = vmax.f32 %v1848, 0.0
      %v3092 = vmax.f32 %v1946, 0.0
      %v3093 = vmax.f32 %v2044, 0.0
      %v3094 = vmax.f32 %v2142, 0.0
      %v3095 = vmax.f32 %v2240, 0.0
      %v3096 = vmax.f32 %v2338, 0.0
      %v3097 = vmax.f32 %v2436, 0.0
      %v3098 = vmax.f32 %v2534, 0.0
      %v3099 = vmax.f32 %v2632, 0.0
      %v3100 = vmax.f32 %v2730, 0.0
      %v3101 = vmax.f32 %v2828, 0.0
      %v3102 = vmax.f32 %v2926, 0.0
      %v3103 = vmax.f32 %v1459, 0.0
      %v3104 = vmax.f32 %v1557, 0.0
      %v3105 = vmax.f32 %v1655, 0.0
      %v3106 = vmax.f32 %v1753, 0.0
      %v3107 = vmax.f32 %v1851, 0.0
      %v3108 = vmax.f32 %v1949, 0.0
      %v3109 = vmax.f32 %v2047, 0.0
      %v3110 = vmax.f32 %v2145, 0.0
      %v3111 = vmax.f32 %v2243, 0.0
      %v3112 = vmax.f32 %v2341, 0.0
      %v3113 = vmax.f32 %v2439, 0.0
      %v3114 = vmax.f32 %v2537, 0.0
      %v3115 = vmax.f32 %v2635, 0.0
      %v3116 = vmax.f32 %v2733, 0.0
      %v3117 = vmax.f32 %v2831, 0.0
      %v3118 = vmax.f32 %v2929, 0.0
      %v3119 = vmax.f32 %v1461, 0.0
      %v3120 = vmax.f32 %v1559, 0.0
      %v3121 = vmax.f32 %v1657, 0.0
      %v3122 = vmax.f32 %v1755, 0.0
      %v3123 = vmax.f32 %v1853, 0.0
      %v3124 = vmax.f32 %v1951, 0.0
      %v3125 = vmax.f32 %v2049, 0.0
      %v3126 = vmax.f32 %v2147, 0.0
      %v3127 = vmax.f32 %v2245, 0.0
      %v3128 = vmax.f32 %v2343, 0.0
      %v3129 = vmax.f32 %v2441, 0.0
      %v3130 = vmax.f32 %v2539, 0.0
      %v3131 = vmax.f32 %v2637, 0.0
      %v3132 = vmax.f32 %v2735, 0.0
      %v3133 = vmax.f32 %v2833, 0.0
      %v3134 = vmax.f32 %v2931, 0.0
      %v3135 = vmax.f32 %v1464, 0.0
      %v3136 = vmax.f32 %v1562, 0.0
      %v3137 = vmax.f32 %v1660, 0.0
      %v3138 = vmax.f32 %v1758, 0.0
      %v3139 = vmax.f32 %v1856, 0.0
      %v3140 = vmax.f32 %v1954, 0.0
      %v3141 = vmax.f32 %v2052, 0.0
      %v3142 = vmax.f32 %v2150, 0.0
      %v3143 = vmax.f32 %v2248, 0.0
      %v3144 = vmax.f32 %v2346, 0.0
      %v3145 = vmax.f32 %v2444, 0.0
      %v3146 = vmax.f32 %v2542, 0.0
      %v3147 = vmax.f32 %v2640, 0.0
      %v3148 = vmax.f32 %v2738, 0.0
      %v3149 = vmax.f32 %v2836, 0.0
      %v3150 = vmax.f32 %v2934, 0.0
      %v3151 = vmax.f32 %v1466, 0.0
      %v3152 = vmax.f32 %v1564, 0.0
      %v3153 = vmax.f32 %v1662, 0.0
      %v3154 = vmax.f32 %v1760, 0.0
      %v3155 = vmax.f32 %v1858, 0.0
      %v3156 = vmax.f32 %v1956, 0.0
      %v3157 = vmax.f32 %v2054, 0.0
      %v3158 = vmax.f32 %v2152, 0.0
      %v3159 = vmax.f32 %v2250, 0.0
      %v3160 = vmax.f32 %v2348, 0.0
      %v3161 = vmax.f32 %v2446, 0.0
      %v3162 = vmax.f32 %v2544, 0.0
      %v3163 = vmax.f32 %v2642, 0.0
      %v3164 = vmax.f32 %v2740, 0.0
      %v3165 = vmax.f32 %v2838, 0.0
      %v3166 = vmax.f32 %v2936, 0.0
      %v3167 = vmax.f32 %v1469, 0.0
      %v3168 = vmax.f32 %v1567, 0.0
      %v3169 = vmax.f32 %v1665, 0.0
      %v3170 = vmax.f32 %v1763, 0.0
      %v3171 = vmax.f32 %v1861, 0.0
      %v3172 = vmax.f32 %v1959, 0.0
      %v3173 = vmax.f32 %v2057, 0.0
      %v3174 = vmax.f32 %v2155, 0.0
      %v3175 = vmax.f32 %v2253, 0.0
      %v3176 = vmax.f32 %v2351, 0.0
      %v3177 = vmax.f32 %v2449, 0.0
      %v3178 = vmax.f32 %v2547, 0.0
      %v3179 = vmax.f32 %v2645, 0.0
      %v3180 = vmax.f32 %v2743, 0.0
      %v3181 = vmax.f32 %v2841, 0.0
      %v3182 = vmax.f32 %v2939, 0.0
      %v3183 = vmax.f32 %v1471, 0.0
      %v3184 = vmax.f32 %v1569, 0.0
      %v3185 = vmax.f32 %v1667, 0.0
      %v3186 = vmax.f32 %v1765, 0.0
      %v3187 = vmax.f32 %v1863, 0.0
      %v3188 = vmax.f32 %v1961, 0.0
      %v3189 = vmax.f32 %v2059, 0.0
      %v3190 = vmax.f32 %v2157, 0.0
      %v3191 = vmax.f32 %v2255, 0.0
      %v3192 = vmax.f32 %v2353, 0.0
      %v3193 = vmax.f32 %v2451, 0.0
      %v3194 = vmax.f32 %v2549, 0.0
      %v3195 = vmax.f32 %v2647, 0.0
      %v3196 = vmax.f32 %v2745, 0.0
      %v3197 = vmax.f32 %v2843, 0.0
      %v3198 = vmax.f32 %v2941, 0.0
      %v3199 = vadd.f32 %v2943, %v2959
      %v3200 = vrot.slane %v3199, 4
      %v3201 = vadd.f32 %v3199, %v3200
      %v3202 = vrot.slane %v3201, 2
      %v3203 = vadd.f32 %v3201, %v3202
      %v3204 = vrot.slane %v3203, 1
      %v3205 = vadd.f32 %v3203, %v3204
      %v3206 = vadd.f32 %v2944, %v2960
      %v3207 = vrot.slane %v3206, 4
      %v3208 = vadd.f32 %v3206, %v3207
      %v3209 = vrot.slane %v3208, 2
      %v3210 = vadd.f32 %v3208, %v3209
      %v3211 = vrot.slane %v3210, 1
      %v3212 = vadd.f32 %v3210, %v3211
      %v3213 = vadd.f32 %v2945, %v2961
      %v3214 = vrot.slane %v3213, 4
      %v3215 = vadd.f32 %v3213, %v3214
      %v3216 = vrot.slane %v3215, 2
      %v3217 = vadd.f32 %v3215, %v3216
      %v3218 = vrot.slane %v3217, 1
      %v3219 = vadd.f32 %v3217, %v3218
      %v3220 = vadd.f32 %v2946, %v2962
      %v3221 = vrot.slane %v3220, 4
      %v3222 = vadd.f32 %v3220, %v3221
      %v3223 = vrot.slane %v3222, 2
      %v3224 = vadd.f32 %v3222, %v3223
      %v3225 = vrot.slane %v3224, 1
      %v3226 = vadd.f32 %v3224, %v3225
      %v3227 = vadd.f32 %v2947, %v2963
      %v3228 = vrot.slane %v3227, 4
      %v3229 = vadd.f32 %v3227, %v3228
      %v3230 = vrot.slane %v3229, 2
      %v3231 = vadd.f32 %v3229, %v3230
      %v3232 = vrot.slane %v3231, 1
      %v3233 = vadd.f32 %v3231, %v3232
      %v3234 = vadd.f32 %v2948, %v2964
      %v3235 = vrot.slane %v3234, 4
      %v3236 = vadd.f32 %v3234, %v3235
      %v3237 = vrot.slane %v3236, 2
      %v3238 = vadd.f32 %v3236, %v3237
      %v3239 = vrot.slane %v3238, 1
      %v3240 = vadd.f32 %v3238, %v3239
      %v3241 = vadd.f32 %v2949, %v2965
      %v3242 = vrot.slane %v3241, 4
      %v3243 = vadd.f32 %v3241, %v3242
      %v3244 = vrot.slane %v3243, 2
      %v3245 = vadd.f32 %v3243, %v3244
      %v3246 = vrot.slane %v3245, 1
      %v3247 = vadd.f32 %v3245, %v3246
      %v3248 = vadd.f32 %v2950, %v2966
      %v3249 = vrot.slane %v3248, 4
      %v3250 = vadd.f32 %v3248, %v3249
      %v3251 = vrot.slane %v3250, 2
      %v3252 = vadd.f32 %v3250, %v3251
      %v3253 = vrot.slane %v3252, 1
      %v3254 = vadd.f32 %v3252, %v3253
      %v3255 = vadd.f32 %v2951, %v2967
      %v3256 = vrot.slane %v3255, 4
      %v3257 = vadd.f32 %v3255, %v3256
      %v3258 = vrot.slane %v3257, 2
      %v3259 = vadd.f32 %v3257, %v3258
      %v3260 = vrot.slane %v3259, 1
      %v3261 = vadd.f32 %v3259, %v3260
      %v3262 = vadd.f32 %v2952, %v2968
      %v3263 = vrot.slane %v3262, 4
      %v3264 = vadd.f32 %v3262, %v3263
      %v3265 = vrot.slane %v3264, 2
      %v3266 = vadd.f32 %v3264, %v3265
      %v3267 = vrot.slane %v3266, 1
      %v3268 = vadd.f32 %v3266, %v3267
      %v3269 = vadd.f32 %v2953, %v2969
      %v3270 = vrot.slane %v3269, 4
      %v3271 = vadd.f32 %v3269, %v3270
      %v3272 = vrot.slane %v3271, 2
      %v3273 = vadd.f32 %v3271, %v3272
      %v3274 = vrot.slane %v3273, 1
      %v3275 = vadd.f32 %v3273, %v3274
      %v3276 = vadd.f32 %v2954, %v2970
      %v3277 = vrot.slane %v3276, 4
      %v3278 = vadd.f32 %v3276, %v3277
      %v3279 = vrot.slane %v3278, 2
      %v3280 = vadd.f32 %v3278, %v3279
      %v3281 = vrot.slane %v3280, 1
      %v3282 = vadd.f32 %v3280, %v3281
      %v3283 = vadd.f32 %v2955, %v2971
      %v3284 = vrot.slane %v3283, 4
      %v3285 = vadd.f32 %v3283, %v3284
      %v3286 = vrot.slane %v3285, 2
      %v3287 = vadd.f32 %v3285, %v3286
      %v3288 = vrot.slane %v3287, 1
      %v3289 = vadd.f32 %v3287, %v3288
      %v3290 = vadd.f32 %v2956, %v2972
      %v3291 = vrot.slane %v3290, 4
      %v3292 = vadd.f32 %v3290, %v3291
      %v3293 = vrot.slane %v3292, 2
      %v3294 = vadd.f32 %v3292, %v3293
      %v3295 = vrot.slane %v3294, 1
      %v3296 = vadd.f32 %v3294, %v3295
      %v3297 = vadd.f32 %v2957, %v2973
      %v3298 = vrot.slane %v3297, 4
      %v3299 = vadd.f32 %v3297, %v3298
      %v3300 = vrot.slane %v3299, 2
      %v3301 = vadd.f32 %v3299, %v3300
      %v3302 = vrot.slane %v3301, 1
      %v3303 = vadd.f32 %v3301, %v3302
      %v3304 = vadd.f32 %v2958, %v2974
      %v3305 = vrot.slane %v3304, 4
      %v3306 = vadd.f32 %v3304, %v3305
      %v3307 = vrot.slane %v3306, 2
      %v3308 = vadd.f32 %v3306, %v3307
      %v3309 = vrot.slane %v3308, 1
      %v3310 = vadd.f32 %v3308, %v3309
      %v3311 = vadd.f32 %v2975, %v2991
      %v3312 = vrot.slane %v3311, 4
      %v3313 = vadd.f32 %v3311, %v3312
      %v3314 = vrot.slane %v3313, 2
      %v3315 = vadd.f32 %v3313, %v3314
      %v3316 = vrot.slane %v3315, 1
      %v3317 = vadd.f32 %v3315, %v3316
      %v3318 = vadd.f32 %v2976, %v2992
      %v3319 = vrot.slane %v3318, 4
      %v3320 = vadd.f32 %v3318, %v3319
      %v3321 = vrot.slane %v3320, 2
      %v3322 = vadd.f32 %v3320, %v3321
      %v3323 = vrot.slane %v3322, 1
      %v3324 = vadd.f32 %v3322, %v3323
      %v3325 = vadd.f32 %v2977, %v2993
      %v3326 = vrot.slane %v3325, 4
      %v3327 = vadd.f32 %v3325, %v3326
      %v3328 = vrot.slane %v3327, 2
      %v3329 = vadd.f32 %v3327, %v3328
      %v3330 = vrot.slane %v3329, 1
      %v3331 = vadd.f32 %v3329, %v3330
      %v3332 = vadd.f32 %v2978, %v2994
      %v3333 = vrot.slane %v3332, 4
      %v3334 = vadd.f32 %v3332, %v3333
      %v3335 = vrot.slane %v3334, 2
      %v3336 = vadd.f32 %v3334, %v3335
      %v3337 = vrot.slane %v3336, 1
      %v3338 = vadd.f32 %v3336, %v3337
      %v3339 = vadd.f32 %v2979, %v2995
      %v3340 = vrot.slane %v3339, 4
      %v3341 = vadd.f32 %v3339, %v3340
      %v3342 = vrot.slane %v3341, 2
      %v3343 = vadd.f32 %v3341, %v3342
      %v3344 = vrot.slane %v3343, 1
      %v3345 = vadd.f32 %v3343, %v3344
      %v3346 = vadd.f32 %v2980, %v2996
      %v3347 = vrot.slane %v3346, 4
      %v3348 = vadd.f32 %v3346, %v3347
      %v3349 = vrot.slane %v3348, 2
      %v3350 = vadd.f32 %v3348, %v3349
      %v3351 = vrot.slane %v3350, 1
      %v3352 = vadd.f32 %v3350, %v3351
      %v3353 = vadd.f32 %v2981, %v2997
      %v3354 = vrot.slane %v3353, 4
      %v3355 = vadd.f32 %v3353, %v3354
      %v3356 = vrot.slane %v3355, 2
      %v3357 = vadd.f32 %v3355, %v3356
      %v3358 = vrot.slane %v3357, 1
      %v3359 = vadd.f32 %v3357, %v3358
      %v3360 = vadd.f32 %v2982, %v2998
      %v3361 = vrot.slane %v3360, 4
      %v3362 = vadd.f32 %v3360, %v3361
      %v3363 = vrot.slane %v3362, 2
      %v3364 = vadd.f32 %v3362, %v3363
      %v3365 = vrot.slane %v3364, 1
      %v3366 = vadd.f32 %v3364, %v3365
      %v3367 = vadd.f32 %v2983, %v2999
      %v3368 = vrot.slane %v3367, 4
      %v3369 = vadd.f32 %v3367, %v3368
      %v3370 = vrot.slane %v3369, 2
      %v3371 = vadd.f32 %v3369, %v3370
      %v3372 = vrot.slane %v3371, 1
      %v3373 = vadd.f32 %v3371, %v3372
      %v3374 = vadd.f32 %v2984, %v3000
      %v3375 = vrot.slane %v3374, 4
      %v3376 = vadd.f32 %v3374, %v3375
      %v3377 = vrot.slane %v3376, 2
      %v3378 = vadd.f32 %v3376, %v3377
      %v3379 = vrot.slane %v3378, 1
      %v3380 = vadd.f32 %v3378, %v3379
      %v3381 = vadd.f32 %v2985, %v3001
      %v3382 = vrot.slane %v3381, 4
      %v3383 = vadd.f32 %v3381, %v3382
      %v3384 = vrot.slane %v3383, 2
      %v3385 = vadd.f32 %v3383, %v3384
      %v3386 = vrot.slane %v3385, 1
      %v3387 = vadd.f32 %v3385, %v3386
      %v3388 = vadd.f32 %v2986, %v3002
      %v3389 = vrot.slane %v3388, 4
      %v3390 = vadd.f32 %v3388, %v3389
      %v3391 = vrot.slane %v3390, 2
      %v3392 = vadd.f32 %v3390, %v3391
      %v3393 = vrot.slane %v3392, 1
      %v3394 = vadd.f32 %v3392, %v3393
      %v3395 = vadd.f32 %v2987, %v3003
      %v3396 = vrot.slane %v3395, 4
      %v3397 = vadd.f32 %v3395, %v3396
      %v3398 = vrot.slane %v3397, 2
      %v3399 = vadd.f32 %v3397, %v3398
      %v3400 = vrot.slane %v3399, 1
      %v3401 = vadd.f32 %v3399, %v3400
      %v3402 = vadd.f32 %v2988, %v3004
      %v3403 = vrot.slane %v3402, 4
      %v3404 = vadd.f32 %v3402, %v3403
      %v3405 = vrot.slane %v3404, 2
      %v3406 = vadd.f32 %v3404, %v3405
      %v3407 = vrot.slane %v3406, 1
      %v3408 = vadd.f32 %v3406, %v3407
      %v3409 = vadd.f32 %v2989, %v3005
      %v3410 = vrot.slane %v3409, 4
      %v3411 = vadd.f32 %v3409, %v3410
      %v3412 = vrot.slane %v3411, 2
      %v3413 = vadd.f32 %v3411, %v3412
      %v3414 = vrot.slane %v3413, 1
      %v3415 = vadd.f32 %v3413, %v3414
      %v3416 = vadd.f32 %v2990, %v3006
      %v3417 = vrot.slane %v3416, 4
      %v3418 = vadd.f32 %v3416, %v3417
      %v3419 = vrot.slane %v3418, 2
      %v3420 = vadd.f32 %v3418, %v3419
      %v3421 = vrot.slane %v3420, 1
      %v3422 = vadd.f32 %v3420, %v3421
      %v3423 = vadd.f32 %v3007, %v3023
      %v3424 = vrot.slane %v3423, 4
      %v3425 = vadd.f32 %v3423, %v3424
      %v3426 = vrot.slane %v3425, 2
      %v3427 = vadd.f32 %v3425, %v3426
      %v3428 = vrot.slane %v3427, 1
      %v3429 = vadd.f32 %v3427, %v3428
      %v3430 = vadd.f32 %v3008, %v3024
      %v3431 = vrot.slane %v3430, 4
      %v3432 = vadd.f32 %v3430, %v3431
      %v3433 = vrot.slane %v3432, 2
      %v3434 = vadd.f32 %v3432, %v3433
      %v3435 = vrot.slane %v3434, 1
      %v3436 = vadd.f32 %v3434, %v3435
      %v3437 = vadd.f32 %v3009, %v3025
      %v3438 = vrot.slane %v3437, 4
      %v3439 = vadd.f32 %v3437, %v3438
      %v3440 = vrot.slane %v3439, 2
      %v3441 = vadd.f32 %v3439, %v3440
      %v3442 = vrot.slane %v3441, 1
      %v3443 = vadd.f32 %v3441, %v3442
      %v3444 = vadd.f32 %v3010, %v3026
      %v3445 = vrot.slane %v3444, 4
      %v3446 = vadd.f32 %v3444, %v3445
      %v3447 = vrot.slane %v3446, 2
      %v3448 = vadd.f32 %v3446, %v3447
      %v3449 = vrot.slane %v3448, 1
      %v3450 = vadd.f32 %v3448, %v3449
      %v3451 = vadd.f32 %v3011, %v3027
      %v3452 = vrot.slane %v3451, 4
      %v3453 = vadd.f32 %v3451, %v3452
      %v3454 = vrot.slane %v3453, 2
      %v3455 = vadd.f32 %v3453, %v3454
      %v3456 = vrot.slane %v3455, 1
      %v3457 = vadd.f32 %v3455, %v3456
      %v3458 = vadd.f32 %v3012, %v3028
      %v3459 = vrot.slane %v3458, 4
      %v3460 = vadd.f32 %v3458, %v3459
      %v3461 = vrot.slane %v3460, 2
      %v3462 = vadd.f32 %v3460, %v3461
      %v3463 = vrot.slane %v3462, 1
      %v3464 = vadd.f32 %v3462, %v3463
      %v3465 = vadd.f32 %v3013, %v3029
      %v3466 = vrot.slane %v3465, 4
      %v3467 = vadd.f32 %v3465, %v3466
      %v3468 = vrot.slane %v3467, 2
      %v3469 = vadd.f32 %v3467, %v3468
      %v3470 = vrot.slane %v3469, 1
      %v3471 = vadd.f32 %v3469, %v3470
      %v3472 = vadd.f32 %v3014, %v3030
      %v3473 = vrot.slane %v3472, 4
      %v3474 = vadd.f32 %v3472, %v3473
      %v3475 = vrot.slane %v3474, 2
      %v3476 = vadd.f32 %v3474, %v3475
      %v3477 = vrot.slane %v3476, 1
      %v3478 = vadd.f32 %v3476, %v3477
      %v3479 = vadd.f32 %v3015, %v3031
      %v3480 = vrot.slane %v3479, 4
      %v3481 = vadd.f32 %v3479, %v3480
      %v3482 = vrot.slane %v3481, 2
      %v3483 = vadd.f32 %v3481, %v3482
      %v3484 = vrot.slane %v3483, 1
      %v3485 = vadd.f32 %v3483, %v3484
      %v3486 = vadd.f32 %v3016, %v3032
      %v3487 = vrot.slane %v3486, 4
      %v3488 = vadd.f32 %v3486, %v3487
      %v3489 = vrot.slane %v3488, 2
      %v3490 = vadd.f32 %v3488, %v3489
      %v3491 = vrot.slane %v3490, 1
      %v3492 = vadd.f32 %v3490, %v3491
      %v3493 = vadd.f32 %v3017, %v3033
      %v3494 = vrot.slane %v3493, 4
      %v3495 = vadd.f32 %v3493, %v3494
      %v3496 = vrot.slane %v3495, 2
      %v3497 = vadd.f32 %v3495, %v3496
      %v3498 = vrot.slane %v3497, 1
      %v3499 = vadd.f32 %v3497, %v3498
      %v3500 = vadd.f32 %v3018, %v3034
      %v3501 = vrot.slane %v3500, 4
      %v3502 = vadd.f32 %v3500, %v3501
      %v3503 = vrot.slane %v3502, 2
      %v3504 = vadd.f32 %v3502, %v3503
      %v3505 = vrot.slane %v3504, 1
      %v3506 = vadd.f32 %v3504, %v3505
      %v3507 = vadd.f32 %v3019, %v3035
      %v3508 = vrot.slane %v3507, 4
      %v3509 = vadd.f32 %v3507, %v3508
      %v3510 = vrot.slane %v3509, 2
      %v3511 = vadd.f32 %v3509, %v3510
      %v3512 = vrot.slane %v3511, 1
      %v3513 = vadd.f32 %v3511, %v3512
      %v3514 = vadd.f32 %v3020, %v3036
      %v3515 = vrot.slane %v3514, 4
      %v3516 = vadd.f32 %v3514, %v3515
      %v3517 = vrot.slane %v3516, 2
      %v3518 = vadd.f32 %v3516, %v3517
      %v3519 = vrot.slane %v3518, 1
      %v3520 = vadd.f32 %v3518, %v3519
      %v3521 = vadd.f32 %v3021, %v3037
      %v3522 = vrot.slane %v3521, 4
      %v3523 = vadd.f32 %v3521, %v3522
      %v3524 = vrot.slane %v3523, 2
      %v3525 = vadd.f32 %v3523, %v3524
      %v3526 = vrot.slane %v3525, 1
      %v3527 = vadd.f32 %v3525, %v3526
      %v3528 = vadd.f32 %v3022, %v3038
      %v3529 = vrot.slane %v3528, 4
      %v3530 = vadd.f32 %v3528, %v3529
      %v3531 = vrot.slane %v3530, 2
      %v3532 = vadd.f32 %v3530, %v3531
      %v3533 = vrot.slane %v3532, 1
      %v3534 = vadd.f32 %v3532, %v3533
      %v3535 = vadd.f32 %v3039, %v3055
      %v3536 = vrot.slane %v3535, 4
      %v3537 = vadd.f32 %v3535, %v3536
      %v3538 = vrot.slane %v3537, 2
      %v3539 = vadd.f32 %v3537, %v3538
      %v3540 = vrot.slane %v3539, 1
      %v3541 = vadd.f32 %v3539, %v3540
      %v3542 = vadd.f32 %v3040, %v3056
      %v3543 = vrot.slane %v3542, 4
      %v3544 = vadd.f32 %v3542, %v3543
      %v3545 = vrot.slane %v3544, 2
      %v3546 = vadd.f32 %v3544, %v3545
      %v3547 = vrot.slane %v3546, 1
      %v3548 = vadd.f32 %v3546, %v3547
      %v3549 = vadd.f32 %v3041, %v3057
      %v3550 = vrot.slane %v3549, 4
      %v3551 = vadd.f32 %v3549, %v3550
      %v3552 = vrot.slane %v3551, 2
      %v3553 = vadd.f32 %v3551, %v3552
      %v3554 = vrot.slane %v3553, 1
      %v3555 = vadd.f32 %v3553, %v3554
      %v3556 = vadd.f32 %v3042, %v3058
      %v3557 = vrot.slane %v3556, 4
      %v3558 = vadd.f32 %v3556, %v3557
      %v3559 = vrot.slane %v3558, 2
      %v3560 = vadd.f32 %v3558, %v3559
      %v3561 = vrot.slane %v3560, 1
      %v3562 = vadd.f32 %v3560, %v3561
      %v3563 = vadd.f32 %v3043, %v3059
      %v3564 = vrot.slane %v3563, 4
      %v3565 = vadd.f32 %v3563, %v3564
      %v3566 = vrot.slane %v3565, 2
      %v3567 = vadd.f32 %v3565, %v3566
      %v3568 = vrot.slane %v3567, 1
      %v3569 = vadd.f32 %v3567, %v3568
      %v3570 = vadd.f32 %v3044, %v3060
      %v3571 = vrot.slane %v3570, 4
      %v3572 = vadd.f32 %v3570, %v3571
      %v3573 = vrot.slane %v3572, 2
      %v3574 = vadd.f32 %v3572, %v3573
      %v3575 = vrot.slane %v3574, 1
      %v3576 = vadd.f32 %v3574, %v3575
      %v3577 = vadd.f32 %v3045, %v3061
      %v3578 = vrot.slane %v3577, 4
      %v3579 = vadd.f32 %v3577, %v3578
      %v3580 = vrot.slane %v3579, 2
      %v3581 = vadd.f32 %v3579, %v3580
      %v3582 = vrot.slane %v3581, 1
      %v3583 = vadd.f32 %v3581, %v3582
      %v3584 = vadd.f32 %v3046, %v3062
      %v3585 = vrot.slane %v3584, 4
      %v3586 = vadd.f32 %v3584, %v3585
      %v3587 = vrot.slane %v3586, 2
      %v3588 = vadd.f32 %v3586, %v3587
      %v3589 = vrot.slane %v3588, 1
      %v3590 = vadd.f32 %v3588, %v3589
      %v3591 = vadd.f32 %v3047, %v3063
      %v3592 = vrot.slane %v3591, 4
      %v3593 = vadd.f32 %v3591, %v3592
      %v3594 = vrot.slane %v3593, 2
      %v3595 = vadd.f32 %v3593, %v3594
      %v3596 = vrot.slane %v3595, 1
      %v3597 = vadd.f32 %v3595, %v3596
      %v3598 = vadd.f32 %v3048, %v3064
      %v3599 = vrot.slane %v3598, 4
      %v3600 = vadd.f32 %v3598, %v3599
      %v3601 = vrot.slane %v3600, 2
      %v3602 = vadd.f32 %v3600, %v3601
      %v3603 = vrot.slane %v3602, 1
      %v3604 = vadd.f32 %v3602, %v3603
      %v3605 = vadd.f32 %v3049, %v3065
      %v3606 = vrot.slane %v3605, 4
      %v3607 = vadd.f32 %v3605, %v3606
      %v3608 = vrot.slane %v3607, 2
      %v3609 = vadd.f32 %v3607, %v3608
      %v3610 = vrot.slane %v3609, 1
      %v3611 = vadd.f32 %v3609, %v3610
      %v3612 = vadd.f32 %v3050, %v3066
      %v3613 = vrot.slane %v3612, 4
      %v3614 = vadd.f32 %v3612, %v3613
      %v3615 = vrot.slane %v3614, 2
      %v3616 = vadd.f32 %v3614, %v3615
      %v3617 = vrot.slane %v3616, 1
      %v3618 = vadd.f32 %v3616, %v3617
      %v3619 = vadd.f32 %v3051, %v3067
      %v3620 = vrot.slane %v3619, 4
      %v3621 = vadd.f32 %v3619, %v3620
      %v3622 = vrot.slane %v3621, 2
      %v3623 = vadd.f32 %v3621, %v3622
      %v3624 = vrot.slane %v3623, 1
      %v3625 = vadd.f32 %v3623, %v3624
      %v3626 = vadd.f32 %v3052, %v3068
      %v3627 = vrot.slane %v3626, 4
      %v3628 = vadd.f32 %v3626, %v3627
      %v3629 = vrot.slane %v3628, 2
      %v3630 = vadd.f32 %v3628, %v3629
      %v3631 = vrot.slane %v3630, 1
      %v3632 = vadd.f32 %v3630, %v3631
      %v3633 = vadd.f32 %v3053, %v3069
      %v3634 = vrot.slane %v3633, 4
      %v3635 = vadd.f32 %v3633, %v3634
      %v3636 = vrot.slane %v3635, 2
      %v3637 = vadd.f32 %v3635, %v3636
      %v3638 = vrot.slane %v3637, 1
      %v3639 = vadd.f32 %v3637, %v3638
      %v3640 = vadd.f32 %v3054, %v3070
      %v3641 = vrot.slane %v3640, 4
      %v3642 = vadd.f32 %v3640, %v3641
      %v3643 = vrot.slane %v3642, 2
      %v3644 = vadd.f32 %v3642, %v3643
      %v3645 = vrot.slane %v3644, 1
      %v3646 = vadd.f32 %v3644, %v3645
      %v3647 = vadd.f32 %v3071, %v3087
      %v3648 = vrot.slane %v3647, 4
      %v3649 = vadd.f32 %v3647, %v3648
      %v3650 = vrot.slane %v3649, 2
      %v3651 = vadd.f32 %v3649, %v3650
      %v3652 = vrot.slane %v3651, 1
      %v3653 = vadd.f32 %v3651, %v3652
      %v3654 = vadd.f32 %v3072, %v3088
      %v3655 = vrot.slane %v3654, 4
      %v3656 = vadd.f32 %v3654, %v3655
      %v3657 = vrot.slane %v3656, 2
      %v3658 = vadd.f32 %v3656, %v3657
      %v3659 = vrot.slane %v3658, 1
      %v3660 = vadd.f32 %v3658, %v3659
      %v3661 = vadd.f32 %v3073, %v3089
      %v3662 = vrot.slane %v3661, 4
      %v3663 = vadd.f32 %v3661, %v3662
      %v3664 = vrot.slane %v3663, 2
      %v3665 = vadd.f32 %v3663, %v3664
      %v3666 = vrot.slane %v3665, 1
      %v3667 = vadd.f32 %v3665, %v3666
      %v3668 = vadd.f32 %v3074, %v3090
      %v3669 = vrot.slane %v3668, 4
      %v3670 = vadd.f32 %v3668, %v3669
      %v3671 = vrot.slane %v3670, 2
      %v3672 = vadd.f32 %v3670, %v3671
      %v3673 = vrot.slane %v3672, 1
      %v3674 = vadd.f32 %v3672, %v3673
      %v3675 = vadd.f32 %v3075, %v3091
      %v3676 = vrot.slane %v3675, 4
      %v3677 = vadd.f32 %v3675, %v3676
      %v3678 = vrot.slane %v3677, 2
      %v3679 = vadd.f32 %v3677, %v3678
      %v3680 = vrot.slane %v3679, 1
      %v3681 = vadd.f32 %v3679, %v3680
      %v3682 = vadd.f32 %v3076, %v3092
      %v3683 = vrot.slane %v3682, 4
      %v3684 = vadd.f32 %v3682, %v3683
      %v3685 = vrot.slane %v3684, 2
      %v3686 = vadd.f32 %v3684, %v3685
      %v3687 = vrot.slane %v3686, 1
      %v3688 = vadd.f32 %v3686, %v3687
      %v3689 = vadd.f32 %v3077, %v3093
      %v3690 = vrot.slane %v3689, 4
      %v3691 = vadd.f32 %v3689, %v3690
      %v3692 = vrot.slane %v3691, 2
      %v3693 = vadd.f32 %v3691, %v3692
      %v3694 = vrot.slane %v3693, 1
      %v3695 = vadd.f32 %v3693, %v3694
      %v3696 = vadd.f32 %v3078, %v3094
      %v3697 = vrot.slane %v3696, 4
      %v3698 = vadd.f32 %v3696, %v3697
      %v3699 = vrot.slane %v3698, 2
      %v3700 = vadd.f32 %v3698, %v3699
      %v3701 = vrot.slane %v3700, 1
      %v3702 = vadd.f32 %v3700, %v3701
      %v3703 = vadd.f32 %v3079, %v3095
      %v3704 = vrot.slane %v3703, 4
      %v3705 = vadd.f32 %v3703, %v3704
      %v3706 = vrot.slane %v3705, 2
      %v3707 = vadd.f32 %v3705, %v3706
      %v3708 = vrot.slane %v3707, 1
      %v3709 = vadd.f32 %v3707, %v3708
      %v3710 = vadd.f32 %v3080, %v3096
      %v3711 = vrot.slane %v3710, 4
      %v3712 = vadd.f32 %v3710, %v3711
      %v3713 = vrot.slane %v3712, 2
      %v3714 = vadd.f32 %v3712, %v3713
      %v3715 = vrot.slane %v3714, 1
      %v3716 = vadd.f32 %v3714, %v3715
      %v3717 = vadd.f32 %v3081, %v3097
      %v3718 = vrot.slane %v3717, 4
      %v3719 = vadd.f32 %v3717, %v3718
      %v3720 = vrot.slane %v3719, 2
      %v3721 = vadd.f32 %v3719, %v3720
      %v3722 = vrot.slane %v3721, 1
      %v3723 = vadd.f32 %v3721, %v3722
      %v3724 = vadd.f32 %v3082, %v3098
      %v3725 = vrot.slane %v3724, 4
      %v3726 = vadd.f32 %v3724, %v3725
      %v3727 = vrot.slane %v3726, 2
      %v3728 = vadd.f32 %v3726, %v3727
      %v3729 = vrot.slane %v3728, 1
      %v3730 = vadd.f32 %v3728, %v3729
      %v3731 = vadd.f32 %v3083, %v3099
      %v3732 = vrot.slane %v3731, 4
      %v3733 = vadd.f32 %v3731, %v3732
      %v3734 = vrot.slane %v3733, 2
      %v3735 = vadd.f32 %v3733, %v3734
      %v3736 = vrot.slane %v3735, 1
      %v3737 = vadd.f32 %v3735, %v3736
      %v3738 = vadd.f32 %v3084, %v3100
      %v3739 = vrot.slane %v3738, 4
      %v3740 = vadd.f32 %v3738, %v3739
      %v3741 = vrot.slane %v3740, 2
      %v3742 = vadd.f32 %v3740, %v3741
      %v3743 = vrot.slane %v3742, 1
      %v3744 = vadd.f32 %v3742, %v3743
      %v3745 = vadd.f32 %v3085, %v3101
      %v3746 = vrot.slane %v3745, 4
      %v3747 = vadd.f32 %v3745, %v3746
      %v3748 = vrot.slane %v3747, 2
      %v3749 = vadd.f32 %v3747, %v3748
      %v3750 = vrot.slane %v3749, 1
      %v3751 = vadd.f32 %v3749, %v3750
      %v3752 = vadd.f32 %v3086, %v3102
      %v3753 = vrot.slane %v3752, 4
      %v3754 = vadd.f32 %v3752, %v3753
      %v3755 = vrot.slane %v3754, 2
      %v3756 = vadd.f32 %v3754, %v3755
      %v3757 = vrot.slane %v3756, 1
      %v3758 = vadd.f32 %v3756, %v3757
      %v3759 = vadd.f32 %v3103, %v3119
      %v3760 = vrot.slane %v3759, 4
      %v3761 = vadd.f32 %v3759, %v3760
      %v3762 = vrot.slane %v3761, 2
      %v3763 = vadd.f32 %v3761, %v3762
      %v3764 = vrot.slane %v3763, 1
      %v3765 = vadd.f32 %v3763, %v3764
      %v3766 = vadd.f32 %v3104, %v3120
      %v3767 = vrot.slane %v3766, 4
      %v3768 = vadd.f32 %v3766, %v3767
      %v3769 = vrot.slane %v3768, 2
      %v3770 = vadd.f32 %v3768, %v3769
      %v3771 = vrot.slane %v3770, 1
      %v3772 = vadd.f32 %v3770, %v3771
      %v3773 = vadd.f32 %v3105, %v3121
      %v3774 = vrot.slane %v3773, 4
      %v3775 = vadd.f32 %v3773, %v3774
      %v3776 = vrot.slane %v3775, 2
      %v3777 = vadd.f32 %v3775, %v3776
      %v3778 = vrot.slane %v3777, 1
      %v3779 = vadd.f32 %v3777, %v3778
      %v3780 = vadd.f32 %v3106, %v3122
      %v3781 = vrot.slane %v3780, 4
      %v3782 = vadd.f32 %v3780, %v3781
      %v3783 = vrot.slane %v3782, 2
      %v3784 = vadd.f32 %v3782, %v3783
      %v3785 = vrot.slane %v3784, 1
      %v3786 = vadd.f32 %v3784, %v3785
      %v3787 = vadd.f32 %v3107, %v3123
      %v3788 = vrot.slane %v3787, 4
      %v3789 = vadd.f32 %v3787, %v3788
      %v3790 = vrot.slane %v3789, 2
      %v3791 = vadd.f32 %v3789, %v3790
      %v3792 = vrot.slane %v3791, 1
      %v3793 = vadd.f32 %v3791, %v3792
      %v3794 = vadd.f32 %v3108, %v3124
      %v3795 = vrot.slane %v3794, 4
      %v3796 = vadd.f32 %v3794, %v3795
      %v3797 = vrot.slane %v3796, 2
      %v3798 = vadd.f32 %v3796, %v3797
      %v3799 = vrot.slane %v3798, 1
      %v3800 = vadd.f32 %v3798, %v3799
      %v3801 = vadd.f32 %v3109, %v3125
      %v3802 = vrot.slane %v3801, 4
      %v3803 = vadd.f32 %v3801, %v3802
      %v3804 = vrot.slane %v3803, 2
      %v3805 = vadd.f32 %v3803, %v3804
      %v3806 = vrot.slane %v3805, 1
      %v3807 = vadd.f32 %v3805, %v3806
      %v3808 = vadd.f32 %v3110, %v3126
      %v3809 = vrot.slane %v3808, 4
      %v3810 = vadd.f32 %v3808, %v3809
      %v3811 = vrot.slane %v3810, 2
      %v3812 = vadd.f32 %v3810, %v3811
      %v3813 = vrot.slane %v3812, 1
      %v3814 = vadd.f32 %v3812, %v3813
      %v3815 = vadd.f32 %v3111, %v3127
      %v3816 = vrot.slane %v3815, 4
      %v3817 = vadd.f32 %v3815, %v3816
      %v3818 = vrot.slane %v3817, 2
      %v3819 = vadd.f32 %v3817, %v3818
      %v3820 = vrot.slane %v3819, 1
      %v3821 = vadd.f32 %v3819, %v3820
      %v3822 = vadd.f32 %v3112, %v3128
      %v3823 = vrot.slane %v3822, 4
      %v3824 = vadd.f32 %v3822, %v3823
      %v3825 = vrot.slane %v3824, 2
      %v3826 = vadd.f32 %v3824, %v3825
      %v3827 = vrot.slane %v3826, 1
      %v3828 = vadd.f32 %v3826, %v3827
      %v3829 = vadd.f32 %v3113, %v3129
      %v3830 = vrot.slane %v3829, 4
      %v3831 = vadd.f32 %v3829, %v3830
      %v3832 = vrot.slane %v3831, 2
      %v3833 = vadd.f32 %v3831, %v3832
      %v3834 = vrot.slane %v3833, 1
      %v3835 = vadd.f32 %v3833, %v3834
      %v3836 = vadd.f32 %v3114, %v3130
      %v3837 = vrot.slane %v3836, 4
      %v3838 = vadd.f32 %v3836, %v3837
      %v3839 = vrot.slane %v3838, 2
      %v3840 = vadd.f32 %v3838, %v3839
      %v3841 = vrot.slane %v3840, 1
      %v3842 = vadd.f32 %v3840, %v3841
      %v3843 = vadd.f32 %v3115, %v3131
      %v3844 = vrot.slane %v3843, 4
      %v3845 = vadd.f32 %v3843, %v3844
      %v3846 = vrot.slane %v3845, 2
      %v3847 = vadd.f32 %v3845, %v3846
      %v3848 = vrot.slane %v3847, 1
      %v3849 = vadd.f32 %v3847, %v3848
      %v3850 = vadd.f32 %v3116, %v3132
      %v3851 = vrot.slane %v3850, 4
      %v3852 = vadd.f32 %v3850, %v3851
      %v3853 = vrot.slane %v3852, 2
      %v3854 = vadd.f32 %v3852, %v3853
      %v3855 = vrot.slane %v3854, 1
      %v3856 = vadd.f32 %v3854, %v3855
      %v3857 = vadd.f32 %v3117, %v3133
      %v3858 = vrot.slane %v3857, 4
      %v3859 = vadd.f32 %v3857, %v3858
      %v3860 = vrot.slane %v3859, 2
      %v3861 = vadd.f32 %v3859, %v3860
      %v3862 = vrot.slane %v3861, 1
      %v3863 = vadd.f32 %v3861, %v3862
      %v3864 = vadd.f32 %v3118, %v3134
      %v3865 = vrot.slane %v3864, 4
      %v3866 = vadd.f32 %v3864, %v3865
      %v3867 = vrot.slane %v3866, 2
      %v3868 = vadd.f32 %v3866, %v3867
      %v3869 = vrot.slane %v3868, 1
      %v3870 = vadd.f32 %v3868, %v3869
      %v3871 = vadd.f32 %v3135, %v3151
      %v3872 = vrot.slane %v3871, 4
      %v3873 = vadd.f32 %v3871, %v3872
      %v3874 = vrot.slane %v3873, 2
      %v3875 = vadd.f32 %v3873, %v3874
      %v3876 = vrot.slane %v3875, 1
      %v3877 = vadd.f32 %v3875, %v3876
      %v3878 = vadd.f32 %v3136, %v3152
      %v3879 = vrot.slane %v3878, 4
      %v3880 = vadd.f32 %v3878, %v3879
      %v3881 = vrot.slane %v3880, 2
      %v3882 = vadd.f32 %v3880, %v3881
      %v3883 = vrot.slane %v3882, 1
      %v3884 = vadd.f32 %v3882, %v3883
      %v3885 = vadd.f32 %v3137, %v3153
      %v3886 = vrot.slane %v3885, 4
      %v3887 = vadd.f32 %v3885, %v3886
      %v3888 = vrot.slane %v3887, 2
      %v3889 = vadd.f32 %v3887, %v3888
      %v3890 = vrot.slane %v3889, 1
      %v3891 = vadd.f32 %v3889, %v3890
      %v3892 = vadd.f32 %v3138, %v3154
      %v3893 = vrot.slane %v3892, 4
      %v3894 = vadd.f32 %v3892, %v3893
      %v3895 = vrot.slane %v3894, 2
      %v3896 = vadd.f32 %v3894, %v3895
      %v3897 = vrot.slane %v3896, 1
      %v3898 = vadd.f32 %v3896, %v3897
      %v3899 = vadd.f32 %v3139, %v3155
      %v3900 = vrot.slane %v3899, 4
      %v3901 = vadd.f32 %v3899, %v3900
      %v3902 = vrot.slane %v3901, 2
      %v3903 = vadd.f32 %v3901, %v3902
      %v3904 = vrot.slane %v3903, 1
      %v3905 = vadd.f32 %v3903, %v3904
      %v3906 = vadd.f32 %v3140, %v3156
      %v3907 = vrot.slane %v3906, 4
      %v3908 = vadd.f32 %v3906, %v3907
      %v3909 = vrot.slane %v3908, 2
      %v3910 = vadd.f32 %v3908, %v3909
      %v3911 = vrot.slane %v3910, 1
      %v3912 = vadd.f32 %v3910, %v3911
      %v3913 = vadd.f32 %v3141, %v3157
      %v3914 = vrot.slane %v3913, 4
      %v3915 = vadd.f32 %v3913, %v3914
      %v3916 = vrot.slane %v3915, 2
      %v3917 = vadd.f32 %v3915, %v3916
      %v3918 = vrot.slane %v3917, 1
      %v3919 = vadd.f32 %v3917, %v3918
      %v3920 = vadd.f32 %v3142, %v3158
      %v3921 = vrot.slane %v3920, 4
      %v3922 = vadd.f32 %v3920, %v3921
      %v3923 = vrot.slane %v3922, 2
      %v3924 = vadd.f32 %v3922, %v3923
      %v3925 = vrot.slane %v3924, 1
      %v3926 = vadd.f32 %v3924, %v3925
      %v3927 = vadd.f32 %v3143, %v3159
      %v3928 = vrot.slane %v3927, 4
      %v3929 = vadd.f32 %v3927, %v3928
      %v3930 = vrot.slane %v3929, 2
      %v3931 = vadd.f32 %v3929, %v3930
      %v3932 = vrot.slane %v3931, 1
      %v3933 = vadd.f32 %v3931, %v3932
      %v3934 = vadd.f32 %v3144, %v3160
      %v3935 = vrot.slane %v3934, 4
      %v3936 = vadd.f32 %v3934, %v3935
      %v3937 = vrot.slane %v3936, 2
      %v3938 = vadd.f32 %v3936, %v3937
      %v3939 = vrot.slane %v3938, 1
      %v3940 = vadd.f32 %v3938, %v3939
      %v3941 = vadd.f32 %v3145, %v3161
      %v3942 = vrot.slane %v3941, 4
      %v3943 = vadd.f32 %v3941, %v3942
      %v3944 = vrot.slane %v3943, 2
      %v3945 = vadd.f32 %v3943, %v3944
      %v3946 = vrot.slane %v3945, 1
      %v3947 = vadd.f32 %v3945, %v3946
      %v3948 = vadd.f32 %v3146, %v3162
      %v3949 = vrot.slane %v3948, 4
      %v3950 = vadd.f32 %v3948, %v3949
      %v3951 = vrot.slane %v3950, 2
      %v3952 = vadd.f32 %v3950, %v3951
      %v3953 = vrot.slane %v3952, 1
      %v3954 = vadd.f32 %v3952, %v3953
      %v3955 = vadd.f32 %v3147, %v3163
      %v3956 = vrot.slane %v3955, 4
      %v3957 = vadd.f32 %v3955, %v3956
      %v3958 = vrot.slane %v3957, 2
      %v3959 = vadd.f32 %v3957, %v3958
      %v3960 = vrot.slane %v3959, 1
      %v3961 = vadd.f32 %v3959, %v3960
      %v3962 = vadd.f32 %v3148, %v3164
      %v3963 = vrot.slane %v3962, 4
      %v3964 = vadd.f32 %v3962, %v3963
      %v3965 = vrot.slane %v3964, 2
      %v3966 = vadd.f32 %v3964, %v3965
      %v3967 = vrot.slane %v3966, 1
      %v3968 = vadd.f32 %v3966, %v3967
      %v3969 = vadd.f32 %v3149, %v3165
      %v3970 = vrot.slane %v3969, 4
      %v3971 = vadd.f32 %v3969, %v3970
      %v3972 = vrot.slane %v3971, 2
      %v3973 = vadd.f32 %v3971, %v3972
      %v3974 = vrot.slane %v3973, 1
      %v3975 = vadd.f32 %v3973, %v3974
      %v3976 = vadd.f32 %v3150, %v3166
      %v3977 = vrot.slane %v3976, 4
      %v3978 = vadd.f32 %v3976, %v3977
      %v3979 = vrot.slane %v3978, 2
      %v3980 = vadd.f32 %v3978, %v3979
      %v3981 = vrot.slane %v3980, 1
      %v3982 = vadd.f32 %v3980, %v3981
      %v3983 = vadd.f32 %v3167, %v3183
      %v3984 = vrot.slane %v3983, 4
      %v3985 = vadd.f32 %v3983, %v3984
      %v3986 = vrot.slane %v3985, 2
      %v3987 = vadd.f32 %v3985, %v3986
      %v3988 = vrot.slane %v3987, 1
      %v3989 = vadd.f32 %v3987, %v3988
      %v3990 = vadd.f32 %v3168, %v3184
      %v3991 = vrot.slane %v3990, 4
      %v3992 = vadd.f32 %v3990, %v3991
      %v3993 = vrot.slane %v3992, 2
      %v3994 = vadd.f32 %v3992, %v3993
      %v3995 = vrot.slane %v3994, 1
      %v3996 = vadd.f32 %v3994, %v3995
      %v3997 = vadd.f32 %v3169, %v3185
      %v3998 = vrot.slane %v3997, 4
      %v3999 = vadd.f32 %v3997, %v3998
      %v4000 = vrot.slane %v3999, 2
      %v4001 = vadd.f32 %v3999, %v4000
      %v4002 = vrot.slane %v4001, 1
      %v4003 = vadd.f32 %v4001, %v4002
      %v4004 = vadd.f32 %v3170, %v3186
      %v4005 = vrot.slane %v4004, 4
      %v4006 = vadd.f32 %v4004, %v4005
      %v4007 = vrot.slane %v4006, 2
      %v4008 = vadd.f32 %v4006, %v4007
      %v4009 = vrot.slane %v4008, 1
      %v4010 = vadd.f32 %v4008, %v4009
      %v4011 = vadd.f32 %v3171, %v3187
      %v4012 = vrot.slane %v4011, 4
      %v4013 = vadd.f32 %v4011, %v4012
      %v4014 = vrot.slane %v4013, 2
      %v4015 = vadd.f32 %v4013, %v4014
      %v4016 = vrot.slane %v4015, 1
      %v4017 = vadd.f32 %v4015, %v4016
      %v4018 = vadd.f32 %v3172, %v3188
      %v4019 = vrot.slane %v4018, 4
      %v4020 = vadd.f32 %v4018, %v4019
      %v4021 = vrot.slane %v4020, 2
      %v4022 = vadd.f32 %v4020, %v4021
      %v4023 = vrot.slane %v4022, 1
      %v4024 = vadd.f32 %v4022, %v4023
      %v4025 = vadd.f32 %v3173, %v3189
      %v4026 = vrot.slane %v4025, 4
      %v4027 = vadd.f32 %v4025, %v4026
      %v4028 = vrot.slane %v4027, 2
      %v4029 = vadd.f32 %v4027, %v4028
      %v4030 = vrot.slane %v4029, 1
      %v4031 = vadd.f32 %v4029, %v4030
      %v4032 = vadd.f32 %v3174, %v3190
      %v4033 = vrot.slane %v4032, 4
      %v4034 = vadd.f32 %v4032, %v4033
      %v4035 = vrot.slane %v4034, 2
      %v4036 = vadd.f32 %v4034, %v4035
      %v4037 = vrot.slane %v4036, 1
      %v4038 = vadd.f32 %v4036, %v4037
      %v4039 = vadd.f32 %v3175, %v3191
      %v4040 = vrot.slane %v4039, 4
      %v4041 = vadd.f32 %v4039, %v4040
      %v4042 = vrot.slane %v4041, 2
      %v4043 = vadd.f32 %v4041, %v4042
      %v4044 = vrot.slane %v4043, 1
      %v4045 = vadd.f32 %v4043, %v4044
      %v4046 = vadd.f32 %v3176, %v3192
      %v4047 = vrot.slane %v4046, 4
      %v4048 = vadd.f32 %v4046, %v4047
      %v4049 = vrot.slane %v4048, 2
      %v4050 = vadd.f32 %v4048, %v4049
      %v4051 = vrot.slane %v4050, 1
      %v4052 = vadd.f32 %v4050, %v4051
      %v4053 = vadd.f32 %v3177, %v3193
      %v4054 = vrot.slane %v4053, 4
      %v4055 = vadd.f32 %v4053, %v4054
      %v4056 = vrot.slane %v4055, 2
      %v4057 = vadd.f32 %v4055, %v4056
      %v4058 = vrot.slane %v4057, 1
      %v4059 = vadd.f32 %v4057, %v4058
      %v4060 = vadd.f32 %v3178, %v3194
      %v4061 = vrot.slane %v4060, 4
      %v4062 = vadd.f32 %v4060, %v4061
      %v4063 = vrot.slane %v4062, 2
      %v4064 = vadd.f32 %v4062, %v4063
      %v4065 = vrot.slane %v4064, 1
      %v4066 = vadd.f32 %v4064, %v4065
      %v4067 = vadd.f32 %v3179, %v3195
      %v4068 = vrot.slane %v4067, 4
      %v4069 = vadd.f32 %v4067, %v4068
      %v4070 = vrot.slane %v4069, 2
      %v4071 = vadd.f32 %v4069, %v4070
      %v4072 = vrot.slane %v4071, 1
      %v4073 = vadd.f32 %v4071, %v4072
      %v4074 = vadd.f32 %v3180, %v3196
      %v4075 = vrot.slane %v4074, 4
      %v4076 = vadd.f32 %v4074, %v4075
      %v4077 = vrot.slane %v4076, 2
      %v4078 = vadd.f32 %v4076, %v4077
      %v4079 = vrot.slane %v4078, 1
      %v4080 = vadd.f32 %v4078, %v4079
      %v4081 = vadd.f32 %v3181, %v3197
      %v4082 = vrot.slane %v4081, 4
      %v4083 = vadd.f32 %v4081, %v4082
      %v4084 = vrot.slane %v4083, 2
      %v4085 = vadd.f32 %v4083, %v4084
      %v4086 = vrot.slane %v4085, 1
      %v4087 = vadd.f32 %v4085, %v4086
      %v4088 = vadd.f32 %v3182, %v3198
      %v4089 = vrot.slane %v4088, 4
      %v4090 = vadd.f32 %v4088, %v4089
      %v4091 = vrot.slane %v4090, 2
      %v4092 = vadd.f32 %v4090, %v4091
      %v4093 = vrot.slane %v4092, 1
      %v4094 = vadd.f32 %v4092, %v4093
      %v4095 = vadd.f32 %v3205, 0.0
      %v4096 = vadd.f32 %v3317, 0.0
      %v4097 = vadd.f32 %v3429, 0.0
      %v4098 = vadd.f32 %v3541, 0.0
      %v4099 = vadd.f32 %v3653, 0.0
      %v4100 = vadd.f32 %v3765, 0.0
      %v4101 = vadd.f32 %v3877, 0.0
      %v4102 = vadd.f32 %v3989, 0.0
      %v4103 = vadd.f32 %v4095, %v3212
      %v4104 = vadd.f32 %v4096, %v3324
      %v4105 = vadd.f32 %v4097, %v3436
      %v4106 = vadd.f32 %v4098, %v3548
      %v4107 = vadd.f32 %v4099, %v3660
      %v4108 = vadd.f32 %v4100, %v3772
      %v4109 = vadd.f32 %v4101, %v3884
      %v4110 = vadd.f32 %v4102, %v3996
      %v4111 = vadd.f32 %v4103, %v3219
      %v4112 = vadd.f32 %v4104, %v3331
      %v4113 = vadd.f32 %v4105, %v3443
      %v4114 = vadd.f32 %v4106, %v3555
      %v4115 = vadd.f32 %v4107, %v3667
      %v4116 = vadd.f32 %v4108, %v3779
      %v4117 = vadd.f32 %v4109, %v3891
      %v4118 = vadd.f32 %v4110, %v4003
      %v4119 = vadd.f32 %v4111, %v3226
      %v4120 = vadd.f32 %v4112, %v3338
      %v4121 = vadd.f32 %v4113, %v3450
      %v4122 = vadd.f32 %v4114, %v3562
      %v4123 = vadd.f32 %v4115, %v3674
      %v4124 = vadd.f32 %v4116, %v3786
      %v4125 = vadd.f32 %v4117, %v3898
      %v4126 = vadd.f32 %v4118, %v4010
      %v4127 = vadd.f32 %v4119, %v3233
      %v4128 = vadd.f32 %v4120, %v3345
      %v4129 = vadd.f32 %v4121, %v3457
      %v4130 = vadd.f32 %v4122, %v3569
      %v4131 = vadd.f32 %v4123, %v3681
      %v4132 = vadd.f32 %v4124, %v3793
      %v4133 = vadd.f32 %v4125, %v3905
      %v4134 = vadd.f32 %v4126, %v4017
      %v4135 = vadd.f32 %v4127, %v3240
      %v4136 = vadd.f32 %v4128, %v3352
      %v4137 = vadd.f32 %v4129, %v3464
      %v4138 = vadd.f32 %v4130, %v3576
      %v4139 = vadd.f32 %v4131, %v3688
      %v4140 = vadd.f32 %v4132, %v3800
      %v4141 = vadd.f32 %v4133, %v3912
      %v4142 = vadd.f32 %v4134, %v4024
      %v4143 = vadd.f32 %v4135, %v3247
      %v4144 = vadd.f32 %v4136, %v3359
      %v4145 = vadd.f32 %v4137, %v3471
      %v4146 = vadd.f32 %v4138, %v3583
      %v4147 = vadd.f32 %v4139, %v3695
      %v4148 = vadd.f32 %v4140, %v3807
      %v4149 = vadd.f32 %v4141, %v3919
      %v4150 = vadd.f32 %v4142, %v4031
      %v4151 = vadd.f32 %v4143, %v3254
      %v4152 = vadd.f32 %v4144, %v3366
      %v4153 = vadd.f32 %v4145, %v3478
      %v4154 = vadd.f32 %v4146, %v3590
      %v4155 = vadd.f32 %v4147, %v3702
      %v4156 = vadd.f32 %v4148, %v3814
      %v4157 = vadd.f32 %v4149, %v3926
      %v4158 = vadd.f32 %v4150, %v4038
      %v4159 = vadd.f32 %v4151, %v3261
      %v4160 = vadd.f32 %v4152, %v3373
      %v4161 = vadd.f32 %v4153, %v3485
      %v4162 = vadd.f32 %v4154, %v3597
      %v4163 = vadd.f32 %v4155, %v3709
      %v4164 = vadd.f32 %v4156, %v3821
      %v4165 = vadd.f32 %v4157, %v3933
      %v4166 = vadd.f32 %v4158, %v4045
      %v4167 = vadd.f32 %v4159, %v3268
      %v4168 = vadd.f32 %v4160, %v3380
      %v4169 = vadd.f32 %v4161, %v3492
      %v4170 = vadd.f32 %v4162, %v3604
      %v4171 = vadd.f32 %v4163, %v3716
      %v4172 = vadd.f32 %v4164, %v3828
      %v4173 = vadd.f32 %v4165, %v3940
      %v4174 = vadd.f32 %v4166, %v4052
      %v4175 = vadd.f32 %v4167, %v3275
      %v4176 = vadd.f32 %v4168, %v3387
      %v4177 = vadd.f32 %v4169, %v3499
      %v4178 = vadd.f32 %v4170, %v3611
      %v4179 = vadd.f32 %v4171, %v3723
      %v4180 = vadd.f32 %v4172, %v3835
      %v4181 = vadd.f32 %v4173, %v3947
      %v4182 = vadd.f32 %v4174, %v4059
      %v4183 = vadd.f32 %v4175, %v3282
      %v4184 = vadd.f32 %v4176, %v3394
      %v4185 = vadd.f32 %v4177, %v3506
      %v4186 = vadd.f32 %v4178, %v3618
      %v4187 = vadd.f32 %v4179, %v3730
      %v4188 = vadd.f32 %v4180, %v3842
      %v4189 = vadd.f32 %v4181, %v3954
      %v4190 = vadd.f32 %v4182, %v4066
      %v4191 = vadd.f32 %v4183, %v3289
      %v4192 = vadd.f32 %v4184, %v3401
      %v4193 = vadd.f32 %v4185, %v3513
      %v4194 = vadd.f32 %v4186, %v3625
      %v4195 = vadd.f32 %v4187, %v3737
      %v4196 = vadd.f32 %v4188, %v3849
      %v4197 = vadd.f32 %v4189, %v3961
      %v4198 = vadd.f32 %v4190, %v4073
      %v4199 = vadd.f32 %v4191, %v3296
      %v4200 = vadd.f32 %v4192, %v3408
      %v4201 = vadd.f32 %v4193, %v3520
      %v4202 = vadd.f32 %v4194, %v3632
      %v4203 = vadd.f32 %v4195, %v3744
      %v4204 = vadd.f32 %v4196, %v3856
      %v4205 = vadd.f32 %v4197, %v3968
      %v4206 = vadd.f32 %v4198, %v4080
      %v4207 = vadd.f32 %v4199, %v3303
      %v4208 = vadd.f32 %v4200, %v3415
      %v4209 = vadd.f32 %v4201, %v3527
      %v4210 = vadd.f32 %v4202, %v3639
      %v4211 = vadd.f32 %v4203, %v3751
      %v4212 = vadd.f32 %v4204, %v3863
      %v4213 = vadd.f32 %v4205, %v3975
      %v4214 = vadd.f32 %v4206, %v4087
      %v4215 = vadd.f32 %v4207, %v3310
      %v4216 = vadd.f32 %v4208, %v3422
      %v4217 = vadd.f32 %v4209, %v3534
      %v4218 = vadd.f32 %v4210, %v3646
      %v4219 = vadd.f32 %v4211, %v3758
      %v4220 = vadd.f32 %v4212, %v3870
      %v4221 = vadd.f32 %v4213, %v3982
      %v4222 = vadd.f32 %v4214, %v4094
      %v4223 = vmul.f32 %v4215, 0.00390625
      %v4224 = vmul.f32 %v4216, 0.00390625
      %v4225 = vmul.f32 %v4217, 0.00390625
      %v4226 = vmul.f32 %v4218, 0.00390625
      %v4227 = vmul.f32 %v4219, 0.00390625
      %v4228 = vmul.f32 %v4220, 0.00390625
      %v4229 = vmul.f32 %v4221, 0.00390625
      %v4230 = vmul.f32 %v4222, 0.00390625
      %v4231 = vpack.c.bf16 %v4223, %v4223
      %v4232 = vpack.c.bf16 %v4224, %v4224
      %v4233 = vpack.c.bf16 %v4225, %v4225
      %v4234 = vpack.c.bf16 %v4226, %v4226
      %v4235 = vpack.c.bf16 %v4227, %v4227
      %v4236 = vpack.c.bf16 %v4228, %v4228
      %v4237 = vpack.c.bf16 %v4229, %v4229
      %v4238 = vpack.c.bf16 %v4230, %v4230
      %v4239 = vld [vmem:[%s2] sm:$0xf]
      %v4240 = vld [vmem:[%s2 + $0x4] sm:$0xf]
      %v4241 = vld [vmem:[%s2 + $0x8] sm:$0xf]
      %v4242 = vld [vmem:[%s2 + $0xc] sm:$0xf]
      %v4243 = vld [vmem:[%s2 + $0x10] sm:$0xf]
      %v4244 = vld [vmem:[%s2 + $0x14] sm:$0xf]
      %v4245 = vld [vmem:[%s2 + $0x18] sm:$0xf]
      %v4246 = vld [vmem:[%s2 + $0x1c] sm:$0xf]
      %v4247 = vld [vmem:[%s2 + $0x20] sm:$0xf]
      %v4248 = vld [vmem:[%s2 + $0x24] sm:$0xf]
      %v4249 = vld [vmem:[%s2 + $0x28] sm:$0xf]
      %v4250 = vld [vmem:[%s2 + $0x2c] sm:$0xf]
      %v4251 = vld [vmem:[%s2 + $0x30] sm:$0xf]
      %v4252 = vld [vmem:[%s2 + $0x34] sm:$0xf]
      %v4253 = vld [vmem:[%s2 + $0x38] sm:$0xf]
      %v4254 = vld [vmem:[%s2 + $0x3c] sm:$0xf]
      %v4255 = vld [vmem:[%s3] sm:$0x1]
      %v4257 = vperm.slane %v4255, 0
      %v4267 = vunpack.c.l.b16 %v4231
      %v4268 = vunpack.c.l.b16 %v4232
      %v4269 = vunpack.c.l.b16 %v4233
      %v4270 = vunpack.c.l.b16 %v4234
      %v4271 = vunpack.c.l.b16 %v4235
      %v4272 = vunpack.c.l.b16 %v4236
      %v4273 = vunpack.c.l.b16 %v4237
      %v4274 = vunpack.c.l.b16 %v4238
      %vm4275 = vcmask 1041409
      %v4276 = vsel %vm4275, %v4268, %v4267
      %vm4277 = vcmask 1042434
      %v4278 = vsel %vm4277, %v4269, %v4276
      %vm4279 = vcmask 1043459
      %v4280 = vsel %vm4279, %v4270, %v4278
      %vm4281 = vcmask 1044484
      %v4282 = vsel %vm4281, %v4271, %v4280
      %vm4283 = vcmask 1045509
      %v4284 = vsel %vm4283, %v4272, %v4282
      %vm4285 = vcmask 1046534
      %v4286 = vsel %vm4285, %v4273, %v4284
      %vm4287 = vcmask 1047559
      %v4288 = vsel %vm4287, %v4274, %v4286
      %v4289 = vpack.c.b16 %v4288, %v4288
      %v4307 = vunpack.c.l.b16 %v4239
      %v4308 = vunpack.c.l.b16 %v4240
      %v4309 = vunpack.c.l.b16 %v4241
      %v4310 = vunpack.c.l.b16 %v4242
      %v4311 = vunpack.c.l.b16 %v4243
      %v4312 = vunpack.c.l.b16 %v4244
      %v4313 = vunpack.c.l.b16 %v4245
      %v4314 = vunpack.c.l.b16 %v4246
      %v4315 = vunpack.c.l.b16 %v4247
      %v4316 = vunpack.c.l.b16 %v4248
      %v4317 = vunpack.c.l.b16 %v4249
      %v4318 = vunpack.c.l.b16 %v4250
      %v4319 = vunpack.c.l.b16 %v4251
      %v4320 = vunpack.c.l.b16 %v4252
      %v4321 = vunpack.c.l.b16 %v4253
      %v4322 = vunpack.c.l.b16 %v4254
      %v4323 = vpack.c.b16 %v4308, %v4307
      %v4324 = vpack.c.b16 %v4310, %v4309
      %v4325 = vpack.c.b16 %v4312, %v4311
      %v4326 = vpack.c.b16 %v4314, %v4313
      %v4327 = vpack.c.b16 %v4316, %v4315
      %v4328 = vpack.c.b16 %v4318, %v4317
      %v4329 = vpack.c.b16 %v4320, %v4319
      %v4330 = vpack.c.b16 %v4322, %v4321
      %4339 = vmatpush.bf16.msra.mxu0 %v4330
      %4340 = vmatpush.bf16.msra.mxu0 %v4329
      %4341 = vmatpush.bf16.msra.mxu0 %v4328
      %4342 = vmatpush.bf16.msra.mxu0 %v4327
      %4343 = vmatpush.bf16.msra.mxu0 %v4326
      %4344 = vmatpush.bf16.msra.mxu0 %v4325
      %4345 = vmatpush.bf16.msra.mxu0 %v4324
      %4346 = vmatpush.bf16.msra.mxu0 %v4323
      %4347 = vmatmul.bf16.gmra.mxu0 %v4289
      %v4348 = vpop.f32.mrf.mxu0
      %v4349 = vadd.f32 %v4257, %v4348
      %v4350 = vpop.f32.mrf.mxu0
      %4351 = vdwg.mxu0
      %4352 = vst [vmem:[%s200] sm:$0xff] %v4349
      %p4353 = scmp.lt.s32.totalorder %s15, 1
      %s4354 = scalar_select %p4353, %s15, 1
      %s4355 = smul.addr %s4354, 8
      %s4356 = scalar_lea.vmem %s4, %s4355
      // Predicated region
      $region37: #{protonet_applier_forward.2} parent=35 // pred_check
        %p4357 = pneg %p122
      $region38: #{protonet_applier_forward.2} parent=35 // pred_check_branch
        %4359 = sbr.rel (%p4357) target = $region40
      $region39: #{protonet_applier_forward.2} parent=35 // pred_region
        _
      $region40: #{protonet_applier_forward.2} parent=35 // pred_fallthru
        _
    $region36: #{protonet_applier_forward.2} parent=5 // pred_fallthru
      _
    %p4360 = scmp.le.s32.totalorder 2, %s10
    // Predicated region
    $region41: #{protonet_applier_forward.2} parent=5 // pred_check
      %p4361 = pneg %p4360
    $region42: #{protonet_applier_forward.2} parent=5 // pred_check_branch
      %4363 = sbr.rel (%p4361) target = $region44
    $region43: #{protonet_applier_forward.2} parent=5 // pred_region
      %s4364 = ssub.s32 %s10, 2
      // Predicated region
      $region45: #{protonet_applier_forward.2} parent=43 // pred_check
        %p4365 = pneg %p128
      $region46: #{protonet_applier_forward.2} parent=43 // pred_check_branch
        %4367 = sbr.rel (%p4365) target = $region48
      $region47: #{protonet_applier_forward.2} parent=43 // pred_region
        %p4368 = scmp.lt.s32.totalorder %s16, 1
        %s4369 = scalar_select %p4368, %s16, 1
        %s4370 = smul.addr %s4369, 8
        %s4371 = scalar_lea.vmem %s4, %s4370
      $region48: #{protonet_applier_forward.2} parent=43 // pred_fallthru
        _
    $region44: #{protonet_applier_forward.2} parent=5 // pred_fallthru
      _
  $region6: #{protonet_applier_forward.2} parent=0 // loop_footer
    %s14 = sadd.s32 1, %s10
  $region7: #{protonet_applier_forward.2} parent=0 // loop_footer_branch
    %9 = sbr.rel target = $region3
  $region8: #{protonet_applier_forward.2} parent=0 // loop_exit
    _

</llo_original>
